<compile_context>
chip_gen: v7x
topology: tpu7x:2x2x1
jax: 0.10.0
libtpu: 0.0.40
codegen_flags: <defaults>
</compile_context>

<pallas_src>
import jax
import jax.numpy as jnp
from jax import lax
from jax.experimental import pallas as pl
from jax.experimental.pallas import tpu as pltpu


def _round_up(x, m):
    return (x + m - 1) // m * m


# ----------------------------- Pallas kernels ------------------------------


def _make_conv_stats_kernel(KD, KH, KW, dilation, Wp, Lc):
    """Pass 1: in-VMEM shifted-window conv for one (sample, output-depth) slice.

    Flat-shift trick: output lanes mu = ho*Wp + wo, so the input needed for
    tap (kh, kw) is the contiguous lane slice at offset kh*dil*Wp + kw*dil of
    the flattened padded plane.  Lanes with (mu % Wp) >= Wo or mu >= Ho*Wp are
    garbage: they are excluded from the BN statistics via `mask` and sliced
    away after pass 2.
    """

    def kernel(*refs):
        x_refs = refs[:KD]                     # KD x (1, 1, Cin, Lx)   bf16
        w_ref = refs[KD]                       # (KD, KH, KW, Cout_p, Cin) bf16
        mask_ref = refs[KD + 1]                # (1, Lc)                f32
        conv_ref = refs[KD + 2]                # (1, Cout_p, Lc)        bf16
        s1_ref = refs[KD + 3]                  # (1, 1, Cout_p, 1)      f32
        s2_ref = refs[KD + 4]                  # (1, 1, Cout_p, 1)      f32

        acc = None
        for kd in range(KD):
            for kh in range(KH):
                for kw in range(KW):
                    off = kh * dilation * Wp + kw * dilation
                    rhs = x_refs[kd][0, 0, :, off:off + Lc]      # (Cin, Lc)
                    part = jnp.dot(w_ref[kd, kh, kw], rhs,        # (Cout_p, Lc)
                                   preferred_element_type=jnp.float32)
                    acc = part if acc is None else acc + part

        conv_ref[0] = acc.astype(conv_ref.dtype)                  # bf16 staging
        masked = acc * mask_ref[...]                              # drop garbage lanes
        # Tiny per-step stat writes (2 small DMAs/step) -- negligible vs. the
        # conv-tile traffic at these grid sizes.
        s1_ref[0, 0] = jnp.sum(masked, axis=1, keepdims=True)
        s2_ref[0, 0] = jnp.sum(masked * acc, axis=1, keepdims=True)

    return kernel


def _bn_relu_kernel(conv_ref, scale_ref, shift_ref, o_ref):
    """Pass 2: folded BN affine + ReLU over a big lane-dense slab.

    conv_ref:  (1, Cout_p, tile2) bf16
    scale_ref: (1, Cout_p, 1)     f32   gamma * rsqrt(var + eps)
    shift_ref: (1, Cout_p, 1)     f32   beta - mean * scale
    o_ref:     (1, Cout_p, tile2) f32
    """
    x = conv_ref[...].astype(jnp.float32)
    o_ref[...] = jnp.maximum(x * scale_ref[...] + shift_ref[...], 0.0)


# ------------------------------- wrapper ------------------------------------


def _conv3d_bn_relu_impl(x, weight, bias, gamma, beta, *, stride=1, padding=1,
                         dilation=1, eps=1e-5):
    """Forward pass of conv3DBatchNormRelu (is_batchnorm=True).

    `bias` is accepted for interface parity but unused: a per-channel constant
    added before training-mode BatchNorm cancels exactly in the mean
    subtraction (only valid for the BN path, which is what this implements).
    """
    del bias
    N, Cin, D, H, W = x.shape
    Cout, Cin_w, KD, KH, KW = weight.shape
    assert Cin == Cin_w
    # TODO(synk): the in-kernel shifted-window path assumes stride == 1 (the
    #             flat-shift trick needs unit stride).
    assert stride == 1, "Pallas path implemented for stride == 1"

    Do = (D + 2 * padding - dilation * (KD - 1) - 1) // stride + 1
    Ho = (H + 2 * padding - dilation * (KH - 1) - 1) // stride + 1
    Wo = (W + 2 * padding - dilation * (KW - 1) - 1) // stride + 1
    Dp, Hp, Wp = D + 2 * padding, H + 2 * padding, W + 2 * padding
    Cout_p = _round_up(Cout, 8)       # sublane multiple only; no 128-padding

    Lval = Ho * Wp                                  # per-depth flat output extent
    Lc = _round_up(Lval, 128)                       # lane-dense tile width
    off_max = (KH - 1) * dilation * Wp + (KW - 1) * dilation
    Lx = _round_up(Lc + off_max, 128)               # per-depth flat input extent

    # ---- host prep: pad + flatten planes (O(input) bytes, no im2col) ---------
    xp = jnp.pad(x, ((0, 0), (0, 0), (padding, padding), (padding, padding),
                     (padding, padding)))
    xp = jnp.transpose(xp, (0, 2, 1, 3, 4)).reshape(N, Dp, Cin, Hp * Wp)
    xp = jnp.pad(xp, ((0, 0), (0, 0), (0, 0), (0, Lx - Hp * Wp)))
    xp = xp.astype(jnp.bfloat16)                                    # (N, Dp, Cin, Lx)

    w_k = jnp.transpose(weight, (2, 3, 4, 0, 1))                    # (KD,KH,KW,Cout,Cin)
    w_k = jnp.pad(w_k, ((0, 0), (0, 0), (0, 0), (0, Cout_p - Cout), (0, 0)))
    w_k = w_k.astype(jnp.bfloat16)

    mu = jnp.arange(Lc, dtype=jnp.int32)
    mask = ((mu < Lval) & ((mu % Wp) < Wo)).astype(jnp.float32).reshape(1, Lc)

    # ---- generation-aware VMEM limit ------------------------------------------
    try:
        vmem_cap = int(pltpu.get_tpu_info().vmem_capacity_bytes)
    except Exception:
        vmem_cap = 64 << 20
    vmem_limit = int(min(max(vmem_cap * 3 // 4, 32 << 20), 100 << 20))

    # ---- pass 1: conv + per-step channel sums (from the f32 accumulator) ------
    x_specs = [
        pl.BlockSpec((1, 1, Cin, Lx),
                     lambda n, d, kd=kd: (n, d * stride + kd * dilation, 0, 0))
        for kd in range(KD)
    ]
    w_spec = pl.BlockSpec((KD, KH, KW, Cout_p, Cin), lambda n, d: (0, 0, 0, 0, 0))
    m_spec = pl.BlockSpec((1, Lc), lambda n, d: (0, 0))
    s_spec = pl.BlockSpec((1, 1, Cout_p, 1), lambda n, d: (n, d, 0, 0))

    conv_i, s1_p, s2_p = pl.pallas_call(
        _make_conv_stats_kernel(KD, KH, KW, dilation, Wp, Lc),
        grid=(N, Do),
        in_specs=x_specs + [w_spec, m_spec],
        out_specs=(
            pl.BlockSpec((1, Cout_p, Lc), lambda n, d: (n, 0, d)),
            s_spec,
            s_spec,
        ),
        out_shape=(
            jax.ShapeDtypeStruct((N, Cout_p, Do * Lc), jnp.bfloat16),
            jax.ShapeDtypeStruct((N, Do, Cout_p, 1), jnp.float32),
            jax.ShapeDtypeStruct((N, Do, Cout_p, 1), jnp.float32),
        ),
        compiler_params=pltpu.CompilerParams(
            dimension_semantics=("parallel", "parallel"),
            vmem_limit_bytes=vmem_limit),
    )(*([xp] * KD), w_k, mask)

    # ---- tiny per-channel math: fold BN into scale/shift ----------------------
    cnt = float(N * Do * Ho * Wo)
    s1 = jnp.sum(s1_p, axis=(0, 1))[:, 0]                # (Cout_p,)
    s2 = jnp.sum(s2_p, axis=(0, 1))[:, 0]
    mean = s1 / cnt
    # TODO(synk): E[x^2]-E[x]^2 in f32 can cancel when |mean| >> std for very
    #             large M; a Welford-style combine of the per-step partials
    #             would be more robust.
    var = jnp.maximum(s2 / cnt - mean * mean, 0.0)       # biased variance
    gamma_p = jnp.pad(gamma.astype(jnp.float32), (0, Cout_p - Cout))
    beta_p = jnp.pad(beta.astype(jnp.float32), (0, Cout_p - Cout))
    scale_v = gamma_p * lax.rsqrt(var + eps)
    shift_v = beta_p - mean * scale_v
    scale = scale_v.reshape(1, Cout_p, 1)
    shift = shift_v.reshape(1, Cout_p, 1)

    # ---- pass 2: BN affine + ReLU, large lane-dense blocks (decoupled tile) ---
    budget = max(Lc * Cout_p * 12, min(vmem_limit // 4, 16 << 20))
    k2 = 1
    for d in range(1, Do + 1):
        if Do % d == 0 and d * Lc * Cout_p * 12 <= budget:
            k2 = d
    tile2 = k2 * Lc

    out3 = pl.pallas_call(
        _bn_relu_kernel,
        grid=(N, Do // k2),
        in_specs=[
            pl.BlockSpec((1, Cout_p, tile2), lambda n, j: (n, 0, j)),
            pl.BlockSpec((1, Cout_p, 1), lambda n, j: (0, 0, 0)),
            pl.BlockSpec((1, Cout_p, 1), lambda n, j: (0, 0, 0)),
        ],
        out_specs=pl.BlockSpec((1, Cout_p, tile2), lambda n, j: (n, 0, j)),
        out_shape=jax.ShapeDtypeStruct((N, Cout_p, Do * Lc), jnp.float32),
        compiler_params=pltpu.CompilerParams(
            dimension_semantics=("parallel", "parallel"),
            vmem_limit_bytes=vmem_limit),
    )(conv_i, scale, shift)

    # ---- final extraction: channel axis already NCDHW -> pure slicing, no
    #      transpose; XLA fuses this with pass-2's output under jit. -----------
    out = out3.reshape(N, Cout_p, Do, Lc)[:, :Cout, :, :Lval]
    out = out.reshape(N, Cout, Do, Ho, Wp)[:, :, :, :, :Wo]
    return out.astype(x.dtype)


conv3d_bn_relu = jax.jit(
    _conv3d_bn_relu_impl,
    static_argnames=("stride", "padding", "dilation", "eps"))


# ------------------------------ reference -----------------------------------


def _reference(x, weight, bias, gamma, beta, *, stride, padding, dilation, eps):
    """Pure-JAX f32 reference matching the PyTorch training-mode forward."""
    dn = lax.conv_dimension_numbers(x.shape, weight.shape,
                                    ("NCDHW", "OIDHW", "NCDHW"))
    conv = lax.conv_general_dilated(
        x, weight, window_strides=(stride,) * 3,
        padding=[(padding, padding)] * 3,
        rhs_dilation=(dilation,) * 3, dimension_numbers=dn)
    conv = conv + bias.reshape(1, -1, 1, 1, 1)
    mean = conv.mean(axis=(0, 2, 3, 4), keepdims=True)
    var = ((conv - mean) ** 2).mean(axis=(0, 2, 3, 4), keepdims=True)
    y = (conv - mean) / jnp.sqrt(var + eps)
    y = y * gamma.reshape(1, -1, 1, 1, 1) + beta.reshape(1, -1, 1, 1, 1)
    return jnp.maximum(y, 0.0)


if __name__ == "__main__":
    # Module config: conv3DBatchNormRelu(in_channels=4, n_filters=8, k_size=3,
    #                                    stride=1, padding=1, bias=True,
    #                                    dilation=1, is_batchnorm=True)
    in_channels, n_filters, k_size = 4, 8, 3
    stride, padding, dilation = 1, 1, 1
    eps = 1e-5  # nn.BatchNorm3d default

    key = jax.random.PRNGKey(0)
    kx, kw, kb, kg, kbe = jax.random.split(key, 5)

    N, D, H, W = 2, 8, 8, 8
    x = jax.random.normal(kx, (N, in_channels, D, H, W), dtype=jnp.float32)

    fan_in = in_channels * k_size ** 3
    bound = 1.0 / (fan_in ** 0.5)
    weight = jax.random.uniform(kw, (n_filters, in_channels, k_size, k_size, k_size),
                                minval=-bound, maxval=bound, dtype=jnp.float32)
    bias = jax.random.uniform(kb, (n_filters,), minval=-bound, maxval=bound,
                              dtype=jnp.float32)
    gamma = 1.0 + 0.1 * jax.random.normal(kg, (n_filters,), dtype=jnp.float32)
    beta = 0.1 * jax.random.normal(kbe, (n_filters,), dtype=jnp.float32)

    out = conv3d_bn_relu(x, weight, bias, gamma, beta,
                         stride=stride, padding=padding, dilation=dilation,
                         eps=eps)
    out = jax.block_until_ready(out)

    ref = _reference(x, weight, bias, gamma, beta,
                     stride=stride, padding=padding, dilation=dilation, eps=eps)
    ref = jax.block_until_ready(ref)

    assert out.shape == ref.shape, (out.shape, ref.shape)
    err = float(jnp.max(jnp.abs(out - ref)))
    # bf16 matmul operands + bf16 conv staging (f32 accumulation/stats).
    assert err < 3e-2, err

    print("KERNEL_OK")
</pallas_src>

<mosaic_0001>
module attributes {stable_mosaic.version = 11 : i64} {
  func.func @kernel(%arg0: i32, %arg1: i32, %arg2: memref<1x1x4x256xbf16, #tpu.memory_space<vmem>>, %arg3: memref<1x1x4x256xbf16, #tpu.memory_space<vmem>>, %arg4: memref<1x1x4x256xbf16, #tpu.memory_space<vmem>>, %arg5: memref<3x3x3x8x4xbf16, #tpu.memory_space<vmem>>, %arg6: memref<1x128xf32, #tpu.memory_space<vmem>>, %arg7: memref<1x8x128xbf16, #tpu.memory_space<vmem>>, %arg8: memref<1x1x8x1xf32, #tpu.memory_space<vmem>>, %arg9: memref<1x1x8x1xf32, #tpu.memory_space<vmem>>) attributes {dimension_semantics = [#tpu.dimension_semantics<parallel>, #tpu.dimension_semantics<parallel>], iteration_bounds = array<i64: 2, 8>, scalar_prefetch = 0 : i64, scratch_operands = 0 : i64, tpu.core_type = #tpu.core_type<tc>, window_params = [{transform_indices = @transform_0, window_bounds = array<i64: 1, 1, 4, 256>}, {transform_indices = @transform_1, window_bounds = array<i64: 1, 1, 4, 256>}, {transform_indices = @transform_2, window_bounds = array<i64: 1, 1, 4, 256>}, {pipeline_mode = #tpu.pipeline_mode<synchronous>, transform_indices = @transform_3, window_bounds = array<i64: 3, 3, 3, 8, 4>}, {pipeline_mode = #tpu.pipeline_mode<synchronous>, transform_indices = @transform_4, window_bounds = array<i64: 1, 128>}, {transform_indices = @transform_5, window_bounds = array<i64: 1, 8, 128>}, {transform_indices = @transform_6, window_bounds = array<i64: 1, 1, 8, 1>}, {transform_indices = @transform_7, window_bounds = array<i64: 1, 1, 8, 1>}]} {
    %c0 = arith.constant 0 : index
    %c0_0 = arith.constant 0 : index
    %c0_1 = arith.constant 0 : index
    %c0_2 = arith.constant 0 : index
    %0 = vector.load %arg2[%c0, %c0_0, %c0_1, %c0_2] : memref<1x1x4x256xbf16, #tpu.memory_space<vmem>>, vector<1x1x4x128xbf16>
    %1 = vector.shape_cast %0 : vector<1x1x4x128xbf16> to vector<4x128xbf16>
    %c0_3 = arith.constant 0 : index
    %c0_4 = arith.constant 0 : index
    %c0_5 = arith.constant 0 : index
    %c0_6 = arith.constant 0 : index
    %c0_7 = arith.constant 0 : index
    %2 = vector.load %arg5[%c0_3, %c0_4, %c0_5, %c0_6, %c0_7] : memref<3x3x3x8x4xbf16, #tpu.memory_space<vmem>>, vector<1x1x1x8x4xbf16>
    %3 = vector.shape_cast %2 : vector<1x1x1x8x4xbf16> to vector<8x4xbf16>
    %cst = arith.constant dense<0.000000e+00> : vector<8x128xf32>
    %4 = tpu.matmul %3, %1, %cst {dimension_numbers = #tpu.dot_dimension_numbers<[1], [0], [0], [1], [0, 0, 1, 1], [], []>} : vector<8x4xbf16>, vector<4x128xbf16>, vector<8x128xf32> -> vector<8x128xf32>
    %c0_8 = arith.constant 0 : index
    %c0_9 = arith.constant 0 : index
    %c0_10 = arith.constant 0 : index
    %c1 = arith.constant 1 : index
    %5 = vector.load %arg2[%c0_8, %c0_9, %c0_10, %c1] : memref<1x1x4x256xbf16, #tpu.memory_space<vmem>>, vector<1x1x4x128xbf16>
    %6 = vector.shape_cast %5 : vector<1x1x4x128xbf16> to vector<4x128xbf16>
    %c0_11 = arith.constant 0 : index
    %c0_12 = arith.constant 0 : index
    %c1_13 = arith.constant 1 : index
    %c0_14 = arith.constant 0 : index
    %c0_15 = arith.constant 0 : index
    %7 = vector.load %arg5[%c0_11, %c0_12, %c1_13, %c0_14, %c0_15] : memref<3x3x3x8x4xbf16, #tpu.memory_space<vmem>>, vector<1x1x1x8x4xbf16>
    %8 = vector.shape_cast %7 : vector<1x1x1x8x4xbf16> to vector<8x4xbf16>
    %cst_16 = arith.constant dense<0.000000e+00> : vector<8x128xf32>
    %9 = tpu.matmul %8, %6, %cst_16 {dimension_numbers = #tpu.dot_dimension_numbers<[1], [0], [0], [1], [0, 0, 1, 1], [], []>} : vector<8x4xbf16>, vector<4x128xbf16>, vector<8x128xf32> -> vector<8x128xf32>
    %10 = arith.addf %4, %9 : vector<8x128xf32>
    %c0_17 = arith.constant 0 : index
    %c0_18 = arith.constant 0 : index
    %c0_19 = arith.constant 0 : index
    %c2 = arith.constant 2 : index
    %11 = vector.load %arg2[%c0_17, %c0_18, %c0_19, %c2] : memref<1x1x4x256xbf16, #tpu.memory_space<vmem>>, vector<1x1x4x128xbf16>
    %12 = vector.shape_cast %11 : vector<1x1x4x128xbf16> to vector<4x128xbf16>
    %c0_20 = arith.constant 0 : index
    %c0_21 = arith.constant 0 : index
    %c2_22 = arith.constant 2 : index
    %c0_23 = arith.constant 0 : index
    %c0_24 = arith.constant 0 : index
    %13 = vector.load %arg5[%c0_20, %c0_21, %c2_22, %c0_23, %c0_24] : memref<3x3x3x8x4xbf16, #tpu.memory_space<vmem>>, vector<1x1x1x8x4xbf16>
    %14 = vector.shape_cast %13 : vector<1x1x1x8x4xbf16> to vector<8x4xbf16>
    %cst_25 = arith.constant dense<0.000000e+00> : vector<8x128xf32>
    %15 = tpu.matmul %14, %12, %cst_25 {dimension_numbers = #tpu.dot_dimension_numbers<[1], [0], [0], [1], [0, 0, 1, 1], [], []>} : vector<8x4xbf16>, vector<4x128xbf16>, vector<8x128xf32> -> vector<8x128xf32>
    %16 = arith.addf %10, %15 : vector<8x128xf32>
    %c0_26 = arith.constant 0 : index
    %c0_27 = arith.constant 0 : index
    %c0_28 = arith.constant 0 : index
    %c10 = arith.constant 10 : index
    %17 = vector.load %arg2[%c0_26, %c0_27, %c0_28, %c10] : memref<1x1x4x256xbf16, #tpu.memory_space<vmem>>, vector<1x1x4x128xbf16>
    %18 = vector.shape_cast %17 : vector<1x1x4x128xbf16> to vector<4x128xbf16>
    %c0_29 = arith.constant 0 : index
    %c1_30 = arith.constant 1 : index
    %c0_31 = arith.constant 0 : index
    %c0_32 = arith.constant 0 : index
    %c0_33 = arith.constant 0 : index
    %19 = vector.load %arg5[%c0_29, %c1_30, %c0_31, %c0_32, %c0_33] : memref<3x3x3x8x4xbf16, #tpu.memory_space<vmem>>, vector<1x1x1x8x4xbf16>
    %20 = vector.shape_cast %19 : vector<1x1x1x8x4xbf16> to vector<8x4xbf16>
    %cst_34 = arith.constant dense<0.000000e+00> : vector<8x128xf32>
    %21 = tpu.matmul %20, %18, %cst_34 {dimension_numbers = #tpu.dot_dimension_numbers<[1], [0], [0], [1], [0, 0, 1, 1], [], []>} : vector<8x4xbf16>, vector<4x128xbf16>, vector<8x128xf32> -> vector<8x128xf32>
    %22 = arith.addf %16, %21 : vector<8x128xf32>
    %c0_35 = arith.constant 0 : index
    %c0_36 = arith.constant 0 : index
    %c0_37 = arith.constant 0 : index
    %c11 = arith.constant 11 : index
    %23 = vector.load %arg2[%c0_35, %c0_36, %c0_37, %c11] : memref<1x1x4x256xbf16, #tpu.memory_space<vmem>>, vector<1x1x4x128xbf16>
    %24 = vector.shape_cast %23 : vector<1x1x4x128xbf16> to vector<4x128xbf16>
    %c0_38 = arith.constant 0 : index
    %c1_39 = arith.constant 1 : index
    %c1_40 = arith.constant 1 : index
    %c0_41 = arith.constant 0 : index
    %c0_42 = arith.constant 0 : index
    %25 = vector.load %arg5[%c0_38, %c1_39, %c1_40, %c0_41, %c0_42] : memref<3x3x3x8x4xbf16, #tpu.memory_space<vmem>>, vector<1x1x1x8x4xbf16>
    %26 = vector.shape_cast %25 : vector<1x1x1x8x4xbf16> to vector<8x4xbf16>
    %cst_43 = arith.constant dense<0.000000e+00> : vector<8x128xf32>
    %27 = tpu.matmul %26, %24, %cst_43 {dimension_numbers = #tpu.dot_dimension_numbers<[1], [0], [0], [1], [0, 0, 1, 1], [], []>} : vector<8x4xbf16>, vector<4x128xbf16>, vector<8x128xf32> -> vector<8x128xf32>
    %28 = arith.addf %22, %27 : vector<8x128xf32>
    %c0_44 = arith.constant 0 : index
    %c0_45 = arith.constant 0 : index
    %c0_46 = arith.constant 0 : index
    %c12 = arith.constant 12 : index
    %29 = vector.load %arg2[%c0_44, %c0_45, %c0_46, %c12] : memref<1x1x4x256xbf16, #tpu.memory_space<vmem>>, vector<1x1x4x128xbf16>
    %30 = vector.shape_cast %29 : vector<1x1x4x128xbf16> to vector<4x128xbf16>
    %c0_47 = arith.constant 0 : index
    %c1_48 = arith.constant 1 : index
    %c2_49 = arith.constant 2 : index
    %c0_50 = arith.constant 0 : index
    %c0_51 = arith.constant 0 : index
    %31 = vector.load %arg5[%c0_47, %c1_48, %c2_49, %c0_50, %c0_51] : memref<3x3x3x8x4xbf16, #tpu.memory_space<vmem>>, vector<1x1x1x8x4xbf16>
    %32 = vector.shape_cast %31 : vector<1x1x1x8x4xbf16> to vector<8x4xbf16>
    %cst_52 = arith.constant dense<0.000000e+00> : vector<8x128xf32>
    %33 = tpu.matmul %32, %30, %cst_52 {dimension_numbers = #tpu.dot_dimension_numbers<[1], [0], [0], [1], [0, 0, 1, 1], [], []>} : vector<8x4xbf16>, vector<4x128xbf16>, vector<8x128xf32> -> vector<8x128xf32>
    %34 = arith.addf %28, %33 : vector<8x128xf32>
    %c0_53 = arith.constant 0 : index
    %c0_54 = arith.constant 0 : index
    %c0_55 = arith.constant 0 : index
    %c20 = arith.constant 20 : index
    %35 = vector.load %arg2[%c0_53, %c0_54, %c0_55, %c20] : memref<1x1x4x256xbf16, #tpu.memory_space<vmem>>, vector<1x1x4x128xbf16>
    %36 = vector.shape_cast %35 : vector<1x1x4x128xbf16> to vector<4x128xbf16>
    %c0_56 = arith.constant 0 : index
    %c2_57 = arith.constant 2 : index
    %c0_58 = arith.constant 0 : index
    %c0_59 = arith.constant 0 : index
    %c0_60 = arith.constant 0 : index
    %37 = vector.load %arg5[%c0_56, %c2_57, %c0_58, %c0_59, %c0_60] : memref<3x3x3x8x4xbf16, #tpu.memory_space<vmem>>, vector<1x1x1x8x4xbf16>
    %38 = vector.shape_cast %37 : vector<1x1x1x8x4xbf16> to vector<8x4xbf16>
    %cst_61 = arith.constant dense<0.000000e+00> : vector<8x128xf32>
    %39 = tpu.matmul %38, %36, %cst_61 {dimension_numbers = #tpu.dot_dimension_numbers<[1], [0], [0], [1], [0, 0, 1, 1], [], []>} : vector<8x4xbf16>, vector<4x128xbf16>, vector<8x128xf32> -> vector<8x128xf32>
    %40 = arith.addf %34, %39 : vector<8x128xf32>
    %c0_62 = arith.constant 0 : index
    %c0_63 = arith.constant 0 : index
    %c0_64 = arith.constant 0 : index
    %c21 = arith.constant 21 : index
    %41 = vector.load %arg2[%c0_62, %c0_63, %c0_64, %c21] : memref<1x1x4x256xbf16, #tpu.memory_space<vmem>>, vector<1x1x4x128xbf16>
    %42 = vector.shape_cast %41 : vector<1x1x4x128xbf16> to vector<4x128xbf16>
    %c0_65 = arith.constant 0 : index
    %c2_66 = arith.constant 2 : index
    %c1_67 = arith.constant 1 : index
    %c0_68 = arith.constant 0 : index
    %c0_69 = arith.constant 0 : index
    %43 = vector.load %arg5[%c0_65, %c2_66, %c1_67, %c0_68, %c0_69] : memref<3x3x3x8x4xbf16, #tpu.memory_space<vmem>>, vector<1x1x1x8x4xbf16>
    %44 = vector.shape_cast %43 : vector<1x1x1x8x4xbf16> to vector<8x4xbf16>
    %cst_70 = arith.constant dense<0.000000e+00> : vector<8x128xf32>
    %45 = tpu.matmul %44, %42, %cst_70 {dimension_numbers = #tpu.dot_dimension_numbers<[1], [0], [0], [1], [0, 0, 1, 1], [], []>} : vector<8x4xbf16>, vector<4x128xbf16>, vector<8x128xf32> -> vector<8x128xf32>
    %46 = arith.addf %40, %45 : vector<8x128xf32>
    %c0_71 = arith.constant 0 : index
    %c0_72 = arith.constant 0 : index
    %c0_73 = arith.constant 0 : index
    %c22 = arith.constant 22 : index
    %47 = vector.load %arg2[%c0_71, %c0_72, %c0_73, %c22] : memref<1x1x4x256xbf16, #tpu.memory_space<vmem>>, vector<1x1x4x128xbf16>
    %48 = vector.shape_cast %47 : vector<1x1x4x128xbf16> to vector<4x128xbf16>
    %c0_74 = arith.constant 0 : index
    %c2_75 = arith.constant 2 : index
    %c2_76 = arith.constant 2 : index
    %c0_77 = arith.constant 0 : index
    %c0_78 = arith.constant 0 : index
    %49 = vector.load %arg5[%c0_74, %c2_75, %c2_76, %c0_77, %c0_78] : memref<3x3x3x8x4xbf16, #tpu.memory_space<vmem>>, vector<1x1x1x8x4xbf16>
    %50 = vector.shape_cast %49 : vector<1x1x1x8x4xbf16> to vector<8x4xbf16>
    %cst_79 = arith.constant dense<0.000000e+00> : vector<8x128xf32>
    %51 = tpu.matmul %50, %48, %cst_79 {dimension_numbers = #tpu.dot_dimension_numbers<[1], [0], [0], [1], [0, 0, 1, 1], [], []>} : vector<8x4xbf16>, vector<4x128xbf16>, vector<8x128xf32> -> vector<8x128xf32>
    %52 = arith.addf %46, %51 : vector<8x128xf32>
    %c0_80 = arith.constant 0 : index
    %c0_81 = arith.constant 0 : index
    %c0_82 = arith.constant 0 : index
    %c0_83 = arith.constant 0 : index
    %53 = vector.load %arg3[%c0_80, %c0_81, %c0_82, %c0_83] : memref<1x1x4x256xbf16, #tpu.memory_space<vmem>>, vector<1x1x4x128xbf16>
    %54 = vector.shape_cast %53 : vector<1x1x4x128xbf16> to vector<4x128xbf16>
    %c1_84 = arith.constant 1 : index
    %c0_85 = arith.constant 0 : index
    %c0_86 = arith.constant 0 : index
    %c0_87 = arith.constant 0 : index
    %c0_88 = arith.constant 0 : index
    %55 = vector.load %arg5[%c1_84, %c0_85, %c0_86, %c0_87, %c0_88] : memref<3x3x3x8x4xbf16, #tpu.memory_space<vmem>>, vector<1x1x1x8x4xbf16>
    %56 = vector.shape_cast %55 : vector<1x1x1x8x4xbf16> to vector<8x4xbf16>
    %cst_89 = arith.constant dense<0.000000e+00> : vector<8x128xf32>
    %57 = tpu.matmul %56, %54, %cst_89 {dimension_numbers = #tpu.dot_dimension_numbers<[1], [0], [0], [1], [0, 0, 1, 1], [], []>} : vector<8x4xbf16>, vector<4x128xbf16>, vector<8x128xf32> -> vector<8x128xf32>
    %58 = arith.addf %52, %57 : vector<8x128xf32>
    %c0_90 = arith.constant 0 : index
    %c0_91 = arith.constant 0 : index
    %c0_92 = arith.constant 0 : index
    %c1_93 = arith.constant 1 : index
    %59 = vector.load %arg3[%c0_90, %c0_91, %c0_92, %c1_93] : memref<1x1x4x256xbf16, #tpu.memory_space<vmem>>, vector<1x1x4x128xbf16>
    %60 = vector.shape_cast %59 : vector<1x1x4x128xbf16> to vector<4x128xbf16>
    %c1_94 = arith.constant 1 : index
    %c0_95 = arith.constant 0 : index
    %c1_96 = arith.constant 1 : index
    %c0_97 = arith.constant 0 : index
    %c0_98 = arith.constant 0 : index
    %61 = vector.load %arg5[%c1_94, %c0_95, %c1_96, %c0_97, %c0_98] : memref<3x3x3x8x4xbf16, #tpu.memory_space<vmem>>, vector<1x1x1x8x4xbf16>
    %62 = vector.shape_cast %61 : vector<1x1x1x8x4xbf16> to vector<8x4xbf16>
    %cst_99 = arith.constant dense<0.000000e+00> : vector<8x128xf32>
    %63 = tpu.matmul %62, %60, %cst_99 {dimension_numbers = #tpu.dot_dimension_numbers<[1], [0], [0], [1], [0, 0, 1, 1], [], []>} : vector<8x4xbf16>, vector<4x128xbf16>, vector<8x128xf32> -> vector<8x128xf32>
    %64 = arith.addf %58, %63 : vector<8x128xf32>
    %c0_100 = arith.constant 0 : index
    %c0_101 = arith.constant 0 : index
    %c0_102 = arith.constant 0 : index
    %c2_103 = arith.constant 2 : index
    %65 = vector.load %arg3[%c0_100, %c0_101, %c0_102, %c2_103] : memref<1x1x4x256xbf16, #tpu.memory_space<vmem>>, vector<1x1x4x128xbf16>
    %66 = vector.shape_cast %65 : vector<1x1x4x128xbf16> to vector<4x128xbf16>
    %c1_104 = arith.constant 1 : index
    %c0_105 = arith.constant 0 : index
    %c2_106 = arith.constant 2 : index
    %c0_107 = arith.constant 0 : index
    %c0_108 = arith.constant 0 : index
    %67 = vector.load %arg5[%c1_104, %c0_105, %c2_106, %c0_107, %c0_108] : memref<3x3x3x8x4xbf16, #tpu.memory_space<vmem>>, vector<1x1x1x8x4xbf16>
    %68 = vector.shape_cast %67 : vector<1x1x1x8x4xbf16> to vector<8x4xbf16>
    %cst_109 = arith.constant dense<0.000000e+00> : vector<8x128xf32>
    %69 = tpu.matmul %68, %66, %cst_109 {dimension_numbers = #tpu.dot_dimension_numbers<[1], [0], [0], [1], [0, 0, 1, 1], [], []>} : vector<8x4xbf16>, vector<4x128xbf16>, vector<8x128xf32> -> vector<8x128xf32>
    %70 = arith.addf %64, %69 : vector<8x128xf32>
    %c0_110 = arith.constant 0 : index
    %c0_111 = arith.constant 0 : index
    %c0_112 = arith.constant 0 : index
    %c10_113 = arith.constant 10 : index
    %71 = vector.load %arg3[%c0_110, %c0_111, %c0_112, %c10_113] : memref<1x1x4x256xbf16, #tpu.memory_space<vmem>>, vector<1x1x4x128xbf16>
    %72 = vector.shape_cast %71 : vector<1x1x4x128xbf16> to vector<4x128xbf16>
    %c1_114 = arith.constant 1 : index
    %c1_115 = arith.constant 1 : index
    %c0_116 = arith.constant 0 : index
    %c0_117 = arith.constant 0 : index
    %c0_118 = arith.constant 0 : index
    %73 = vector.load %arg5[%c1_114, %c1_115, %c0_116, %c0_117, %c0_118] : memref<3x3x3x8x4xbf16, #tpu.memory_space<vmem>>, vector<1x1x1x8x4xbf16>
    %74 = vector.shape_cast %73 : vector<1x1x1x8x4xbf16> to vector<8x4xbf16>
    %cst_119 = arith.constant dense<0.000000e+00> : vector<8x128xf32>
    %75 = tpu.matmul %74, %72, %cst_119 {dimension_numbers = #tpu.dot_dimension_numbers<[1], [0], [0], [1], [0, 0, 1, 1], [], []>} : vector<8x4xbf16>, vector<4x128xbf16>, vector<8x128xf32> -> vector<8x128xf32>
    %76 = arith.addf %70, %75 : vector<8x128xf32>
    %c0_120 = arith.constant 0 : index
    %c0_121 = arith.constant 0 : index
    %c0_122 = arith.constant 0 : index
    %c11_123 = arith.constant 11 : index
    %77 = vector.load %arg3[%c0_120, %c0_121, %c0_122, %c11_123] : memref<1x1x4x256xbf16, #tpu.memory_space<vmem>>, vector<1x1x4x128xbf16>
    %78 = vector.shape_cast %77 : vector<1x1x4x128xbf16> to vector<4x128xbf16>
    %c1_124 = arith.constant 1 : index
    %c1_125 = arith.constant 1 : index
    %c1_126 = arith.constant 1 : index
    %c0_127 = arith.constant 0 : index
    %c0_128 = arith.constant 0 : index
    %79 = vector.load %arg5[%c1_124, %c1_125, %c1_126, %c0_127, %c0_128] : memref<3x3x3x8x4xbf16, #tpu.memory_space<vmem>>, vector<1x1x1x8x4xbf16>
    %80 = vector.shape_cast %79 : vector<1x1x1x8x4xbf16> to vector<8x4xbf16>
    %cst_129 = arith.constant dense<0.000000e+00> : vector<8x128xf32>
    %81 = tpu.matmul %80, %78, %cst_129 {dimension_numbers = #tpu.dot_dimension_numbers<[1], [0], [0], [1], [0, 0, 1, 1], [], []>} : vector<8x4xbf16>, vector<4x128xbf16>, vector<8x128xf32> -> vector<8x128xf32>
    %82 = arith.addf %76, %81 : vector<8x128xf32>
    %c0_130 = arith.constant 0 : index
    %c0_131 = arith.constant 0 : index
    %c0_132 = arith.constant 0 : index
    %c12_133 = arith.constant 12 : index
    %83 = vector.load %arg3[%c0_130, %c0_131, %c0_132, %c12_133] : memref<1x1x4x256xbf16, #tpu.memory_space<vmem>>, vector<1x1x4x128xbf16>
    %84 = vector.shape_cast %83 : vector<1x1x4x128xbf16> to vector<4x128xbf16>
    %c1_134 = arith.constant 1 : index
    %c1_135 = arith.constant 1 : index
    %c2_136 = arith.constant 2 : index
    %c0_137 = arith.constant 0 : index
    %c0_138 = arith.constant 0 : index
    %85 = vector.load %arg5[%c1_134, %c1_135, %c2_136, %c0_137, %c0_138] : memref<3x3x3x8x4xbf16, #tpu.memory_space<vmem>>, vector<1x1x1x8x4xbf16>
    %86 = vector.shape_cast %85 : vector<1x1x1x8x4xbf16> to vector<8x4xbf16>
    %cst_139 = arith.constant dense<0.000000e+00> : vector<8x128xf32>
    %87 = tpu.matmul %86, %84, %cst_139 {dimension_numbers = #tpu.dot_dimension_numbers<[1], [0], [0], [1], [0, 0, 1, 1], [], []>} : vector<8x4xbf16>, vector<4x128xbf16>, vector<8x128xf32> -> vector<8x128xf32>
    %88 = arith.addf %82, %87 : vector<8x128xf32>
    %c0_140 = arith.constant 0 : index
    %c0_141 = arith.constant 0 : index
    %c0_142 = arith.constant 0 : index
    %c20_143 = arith.constant 20 : index
    %89 = vector.load %arg3[%c0_140, %c0_141, %c0_142, %c20_143] : memref<1x1x4x256xbf16, #tpu.memory_space<vmem>>, vector<1x1x4x128xbf16>
    %90 = vector.shape_cast %89 : vector<1x1x4x128xbf16> to vector<4x128xbf16>
    %c1_144 = arith.constant 1 : index
    %c2_145 = arith.constant 2 : index
    %c0_146 = arith.constant 0 : index
    %c0_147 = arith.constant 0 : index
    %c0_148 = arith.constant 0 : index
    %91 = vector.load %arg5[%c1_144, %c2_145, %c0_146, %c0_147, %c0_148] : memref<3x3x3x8x4xbf16, #tpu.memory_space<vmem>>, vector<1x1x1x8x4xbf16>
    %92 = vector.shape_cast %91 : vector<1x1x1x8x4xbf16> to vector<8x4xbf16>
    %cst_149 = arith.constant dense<0.000000e+00> : vector<8x128xf32>
    %93 = tpu.matmul %92, %90, %cst_149 {dimension_numbers = #tpu.dot_dimension_numbers<[1], [0], [0], [1], [0, 0, 1, 1], [], []>} : vector<8x4xbf16>, vector<4x128xbf16>, vector<8x128xf32> -> vector<8x128xf32>
    %94 = arith.addf %88, %93 : vector<8x128xf32>
    %c0_150 = arith.constant 0 : index
    %c0_151 = arith.constant 0 : index
    %c0_152 = arith.constant 0 : index
    %c21_153 = arith.constant 21 : index
    %95 = vector.load %arg3[%c0_150, %c0_151, %c0_152, %c21_153] : memref<1x1x4x256xbf16, #tpu.memory_space<vmem>>, vector<1x1x4x128xbf16>
    %96 = vector.shape_cast %95 : vector<1x1x4x128xbf16> to vector<4x128xbf16>
    %c1_154 = arith.constant 1 : index
    %c2_155 = arith.constant 2 : index
    %c1_156 = arith.constant 1 : index
    %c0_157 = arith.constant 0 : index
    %c0_158 = arith.constant 0 : index
    %97 = vector.load %arg5[%c1_154, %c2_155, %c1_156, %c0_157, %c0_158] : memref<3x3x3x8x4xbf16, #tpu.memory_space<vmem>>, vector<1x1x1x8x4xbf16>
    %98 = vector.shape_cast %97 : vector<1x1x1x8x4xbf16> to vector<8x4xbf16>
    %cst_159 = arith.constant dense<0.000000e+00> : vector<8x128xf32>
    %99 = tpu.matmul %98, %96, %cst_159 {dimension_numbers = #tpu.dot_dimension_numbers<[1], [0], [0], [1], [0, 0, 1, 1], [], []>} : vector<8x4xbf16>, vector<4x128xbf16>, vector<8x128xf32> -> vector<8x128xf32>
    %100 = arith.addf %94, %99 : vector<8x128xf32>
    %c0_160 = arith.constant 0 : index
    %c0_161 = arith.constant 0 : index
    %c0_162 = arith.constant 0 : index
    %c22_163 = arith.constant 22 : index
    %101 = vector.load %arg3[%c0_160, %c0_161, %c0_162, %c22_163] : memref<1x1x4x256xbf16, #tpu.memory_space<vmem>>, vector<1x1x4x128xbf16>
    %102 = vector.shape_cast %101 : vector<1x1x4x128xbf16> to vector<4x128xbf16>
    %c1_164 = arith.constant 1 : index
    %c2_165 = arith.constant 2 : index
    %c2_166 = arith.constant 2 : index
    %c0_167 = arith.constant 0 : index
    %c0_168 = arith.constant 0 : index
    %103 = vector.load %arg5[%c1_164, %c2_165, %c2_166, %c0_167, %c0_168] : memref<3x3x3x8x4xbf16, #tpu.memory_space<vmem>>, vector<1x1x1x8x4xbf16>
    %104 = vector.shape_cast %103 : vector<1x1x1x8x4xbf16> to vector<8x4xbf16>
    %cst_169 = arith.constant dense<0.000000e+00> : vector<8x128xf32>
    %105 = tpu.matmul %104, %102, %cst_169 {dimension_numbers = #tpu.dot_dimension_numbers<[1], [0], [0], [1], [0, 0, 1, 1], [], []>} : vector<8x4xbf16>, vector<4x128xbf16>, vector<8x128xf32> -> vector<8x128xf32>
    %106 = arith.addf %100, %105 : vector<8x128xf32>
    %c0_170 = arith.constant 0 : index
    %c0_171 = arith.constant 0 : index
    %c0_172 = arith.constant 0 : index
    %c0_173 = arith.constant 0 : index
    %107 = vector.load %arg4[%c0_170, %c0_171, %c0_172, %c0_173] : memref<1x1x4x256xbf16, #tpu.memory_space<vmem>>, vector<1x1x4x128xbf16>
    %108 = vector.shape_cast %107 : vector<1x1x4x128xbf16> to vector<4x128xbf16>
    %c2_174 = arith.constant 2 : index
    %c0_175 = arith.constant 0 : index
    %c0_176 = arith.constant 0 : index
    %c0_177 = arith.constant 0 : index
    %c0_178 = arith.constant 0 : index
    %109 = vector.load %arg5[%c2_174, %c0_175, %c0_176, %c0_177, %c0_178] : memref<3x3x3x8x4xbf16, #tpu.memory_space<vmem>>, vector<1x1x1x8x4xbf16>
    %110 = vector.shape_cast %109 : vector<1x1x1x8x4xbf16> to vector<8x4xbf16>
    %cst_179 = arith.constant dense<0.000000e+00> : vector<8x128xf32>
    %111 = tpu.matmul %110, %108, %cst_179 {dimension_numbers = #tpu.dot_dimension_numbers<[1], [0], [0], [1], [0, 0, 1, 1], [], []>} : vector<8x4xbf16>, vector<4x128xbf16>, vector<8x128xf32> -> vector<8x128xf32>
    %112 = arith.addf %106, %111 : vector<8x128xf32>
    %c0_180 = arith.constant 0 : index
    %c0_181 = arith.constant 0 : index
    %c0_182 = arith.constant 0 : index
    %c1_183 = arith.constant 1 : index
    %113 = vector.load %arg4[%c0_180, %c0_181, %c0_182, %c1_183] : memref<1x1x4x256xbf16, #tpu.memory_space<vmem>>, vector<1x1x4x128xbf16>
    %114 = vector.shape_cast %113 : vector<1x1x4x128xbf16> to vector<4x128xbf16>
    %c2_184 = arith.constant 2 : index
    %c0_185 = arith.constant 0 : index
    %c1_186 = arith.constant 1 : index
    %c0_187 = arith.constant 0 : index
    %c0_188 = arith.constant 0 : index
    %115 = vector.load %arg5[%c2_184, %c0_185, %c1_186, %c0_187, %c0_188] : memref<3x3x3x8x4xbf16, #tpu.memory_space<vmem>>, vector<1x1x1x8x4xbf16>
    %116 = vector.shape_cast %115 : vector<1x1x1x8x4xbf16> to vector<8x4xbf16>
    %cst_189 = arith.constant dense<0.000000e+00> : vector<8x128xf32>
    %117 = tpu.matmul %116, %114, %cst_189 {dimension_numbers = #tpu.dot_dimension_numbers<[1], [0], [0], [1], [0, 0, 1, 1], [], []>} : vector<8x4xbf16>, vector<4x128xbf16>, vector<8x128xf32> -> vector<8x128xf32>
    %118 = arith.addf %112, %117 : vector<8x128xf32>
    %c0_190 = arith.constant 0 : index
    %c0_191 = arith.constant 0 : index
    %c0_192 = arith.constant 0 : index
    %c2_193 = arith.constant 2 : index
    %119 = vector.load %arg4[%c0_190, %c0_191, %c0_192, %c2_193] : memref<1x1x4x256xbf16, #tpu.memory_space<vmem>>, vector<1x1x4x128xbf16>
    %120 = vector.shape_cast %119 : vector<1x1x4x128xbf16> to vector<4x128xbf16>
    %c2_194 = arith.constant 2 : index
    %c0_195 = arith.constant 0 : index
    %c2_196 = arith.constant 2 : index
    %c0_197 = arith.constant 0 : index
    %c0_198 = arith.constant 0 : index
    %121 = vector.load %arg5[%c2_194, %c0_195, %c2_196, %c0_197, %c0_198] : memref<3x3x3x8x4xbf16, #tpu.memory_space<vmem>>, vector<1x1x1x8x4xbf16>
    %122 = vector.shape_cast %121 : vector<1x1x1x8x4xbf16> to vector<8x4xbf16>
    %cst_199 = arith.constant dense<0.000000e+00> : vector<8x128xf32>
    %123 = tpu.matmul %122, %120, %cst_199 {dimension_numbers = #tpu.dot_dimension_numbers<[1], [0], [0], [1], [0, 0, 1, 1], [], []>} : vector<8x4xbf16>, vector<4x128xbf16>, vector<8x128xf32> -> vector<8x128xf32>
    %124 = arith.addf %118, %123 : vector<8x128xf32>
    %c0_200 = arith.constant 0 : index
    %c0_201 = arith.constant 0 : index
    %c0_202 = arith.constant 0 : index
    %c10_203 = arith.constant 10 : index
    %125 = vector.load %arg4[%c0_200, %c0_201, %c0_202, %c10_203] : memref<1x1x4x256xbf16, #tpu.memory_space<vmem>>, vector<1x1x4x128xbf16>
    %126 = vector.shape_cast %125 : vector<1x1x4x128xbf16> to vector<4x128xbf16>
    %c2_204 = arith.constant 2 : index
    %c1_205 = arith.constant 1 : index
    %c0_206 = arith.constant 0 : index
    %c0_207 = arith.constant 0 : index
    %c0_208 = arith.constant 0 : index
    %127 = vector.load %arg5[%c2_204, %c1_205, %c0_206, %c0_207, %c0_208] : memref<3x3x3x8x4xbf16, #tpu.memory_space<vmem>>, vector<1x1x1x8x4xbf16>
    %128 = vector.shape_cast %127 : vector<1x1x1x8x4xbf16> to vector<8x4xbf16>
    %cst_209 = arith.constant dense<0.000000e+00> : vector<8x128xf32>
    %129 = tpu.matmul %128, %126, %cst_209 {dimension_numbers = #tpu.dot_dimension_numbers<[1], [0], [0], [1], [0, 0, 1, 1], [], []>} : vector<8x4xbf16>, vector<4x128xbf16>, vector<8x128xf32> -> vector<8x128xf32>
    %130 = arith.addf %124, %129 : vector<8x128xf32>
    %c0_210 = arith.constant 0 : index
    %c0_211 = arith.constant 0 : index
    %c0_212 = arith.constant 0 : index
    %c11_213 = arith.constant 11 : index
    %131 = vector.load %arg4[%c0_210, %c0_211, %c0_212, %c11_213] : memref<1x1x4x256xbf16, #tpu.memory_space<vmem>>, vector<1x1x4x128xbf16>
    %132 = vector.shape_cast %131 : vector<1x1x4x128xbf16> to vector<4x128xbf16>
    %c2_214 = arith.constant 2 : index
    %c1_215 = arith.constant 1 : index
    %c1_216 = arith.constant 1 : index
    %c0_217 = arith.constant 0 : index
    %c0_218 = arith.constant 0 : index
    %133 = vector.load %arg5[%c2_214, %c1_215, %c1_216, %c0_217, %c0_218] : memref<3x3x3x8x4xbf16, #tpu.memory_space<vmem>>, vector<1x1x1x8x4xbf16>
    %134 = vector.shape_cast %133 : vector<1x1x1x8x4xbf16> to vector<8x4xbf16>
    %cst_219 = arith.constant dense<0.000000e+00> : vector<8x128xf32>
    %135 = tpu.matmul %134, %132, %cst_219 {dimension_numbers = #tpu.dot_dimension_numbers<[1], [0], [0], [1], [0, 0, 1, 1], [], []>} : vector<8x4xbf16>, vector<4x128xbf16>, vector<8x128xf32> -> vector<8x128xf32>
    %136 = arith.addf %130, %135 : vector<8x128xf32>
    %c0_220 = arith.constant 0 : index
    %c0_221 = arith.constant 0 : index
    %c0_222 = arith.constant 0 : index
    %c12_223 = arith.constant 12 : index
    %137 = vector.load %arg4[%c0_220, %c0_221, %c0_222, %c12_223] : memref<1x1x4x256xbf16, #tpu.memory_space<vmem>>, vector<1x1x4x128xbf16>
    %138 = vector.shape_cast %137 : vector<1x1x4x128xbf16> to vector<4x128xbf16>
    %c2_224 = arith.constant 2 : index
    %c1_225 = arith.constant 1 : index
    %c2_226 = arith.constant 2 : index
    %c0_227 = arith.constant 0 : index
    %c0_228 = arith.constant 0 : index
    %139 = vector.load %arg5[%c2_224, %c1_225, %c2_226, %c0_227, %c0_228] : memref<3x3x3x8x4xbf16, #tpu.memory_space<vmem>>, vector<1x1x1x8x4xbf16>
    %140 = vector.shape_cast %139 : vector<1x1x1x8x4xbf16> to vector<8x4xbf16>
    %cst_229 = arith.constant dense<0.000000e+00> : vector<8x128xf32>
    %141 = tpu.matmul %140, %138, %cst_229 {dimension_numbers = #tpu.dot_dimension_numbers<[1], [0], [0], [1], [0, 0, 1, 1], [], []>} : vector<8x4xbf16>, vector<4x128xbf16>, vector<8x128xf32> -> vector<8x128xf32>
    %142 = arith.addf %136, %141 : vector<8x128xf32>
    %c0_230 = arith.constant 0 : index
    %c0_231 = arith.constant 0 : index
    %c0_232 = arith.constant 0 : index
    %c20_233 = arith.constant 20 : index
    %143 = vector.load %arg4[%c0_230, %c0_231, %c0_232, %c20_233] : memref<1x1x4x256xbf16, #tpu.memory_space<vmem>>, vector<1x1x4x128xbf16>
    %144 = vector.shape_cast %143 : vector<1x1x4x128xbf16> to vector<4x128xbf16>
    %c2_234 = arith.constant 2 : index
    %c2_235 = arith.constant 2 : index
    %c0_236 = arith.constant 0 : index
    %c0_237 = arith.constant 0 : index
    %c0_238 = arith.constant 0 : index
    %145 = vector.load %arg5[%c2_234, %c2_235, %c0_236, %c0_237, %c0_238] : memref<3x3x3x8x4xbf16, #tpu.memory_space<vmem>>, vector<1x1x1x8x4xbf16>
    %146 = vector.shape_cast %145 : vector<1x1x1x8x4xbf16> to vector<8x4xbf16>
    %cst_239 = arith.constant dense<0.000000e+00> : vector<8x128xf32>
    %147 = tpu.matmul %146, %144, %cst_239 {dimension_numbers = #tpu.dot_dimension_numbers<[1], [0], [0], [1], [0, 0, 1, 1], [], []>} : vector<8x4xbf16>, vector<4x128xbf16>, vector<8x128xf32> -> vector<8x128xf32>
    %148 = arith.addf %142, %147 : vector<8x128xf32>
    %c0_240 = arith.constant 0 : index
    %c0_241 = arith.constant 0 : index
    %c0_242 = arith.constant 0 : index
    %c21_243 = arith.constant 21 : index
    %149 = vector.load %arg4[%c0_240, %c0_241, %c0_242, %c21_243] : memref<1x1x4x256xbf16, #tpu.memory_space<vmem>>, vector<1x1x4x128xbf16>
    %150 = vector.shape_cast %149 : vector<1x1x4x128xbf16> to vector<4x128xbf16>
    %c2_244 = arith.constant 2 : index
    %c2_245 = arith.constant 2 : index
    %c1_246 = arith.constant 1 : index
    %c0_247 = arith.constant 0 : index
    %c0_248 = arith.constant 0 : index
    %151 = vector.load %arg5[%c2_244, %c2_245, %c1_246, %c0_247, %c0_248] : memref<3x3x3x8x4xbf16, #tpu.memory_space<vmem>>, vector<1x1x1x8x4xbf16>
    %152 = vector.shape_cast %151 : vector<1x1x1x8x4xbf16> to vector<8x4xbf16>
    %cst_249 = arith.constant dense<0.000000e+00> : vector<8x128xf32>
    %153 = tpu.matmul %152, %150, %cst_249 {dimension_numbers = #tpu.dot_dimension_numbers<[1], [0], [0], [1], [0, 0, 1, 1], [], []>} : vector<8x4xbf16>, vector<4x128xbf16>, vector<8x128xf32> -> vector<8x128xf32>
    %154 = arith.addf %148, %153 : vector<8x128xf32>
    %c0_250 = arith.constant 0 : index
    %c0_251 = arith.constant 0 : index
    %c0_252 = arith.constant 0 : index
    %c22_253 = arith.constant 22 : index
    %155 = vector.load %arg4[%c0_250, %c0_251, %c0_252, %c22_253] : memref<1x1x4x256xbf16, #tpu.memory_space<vmem>>, vector<1x1x4x128xbf16>
    %156 = vector.shape_cast %155 : vector<1x1x4x128xbf16> to vector<4x128xbf16>
    %c2_254 = arith.constant 2 : index
    %c2_255 = arith.constant 2 : index
    %c2_256 = arith.constant 2 : index
    %c0_257 = arith.constant 0 : index
    %c0_258 = arith.constant 0 : index
    %157 = vector.load %arg5[%c2_254, %c2_255, %c2_256, %c0_257, %c0_258] : memref<3x3x3x8x4xbf16, #tpu.memory_space<vmem>>, vector<1x1x1x8x4xbf16>
    %158 = vector.shape_cast %157 : vector<1x1x1x8x4xbf16> to vector<8x4xbf16>
    %cst_259 = arith.constant dense<0.000000e+00> : vector<8x128xf32>
    %159 = tpu.matmul %158, %156, %cst_259 {dimension_numbers = #tpu.dot_dimension_numbers<[1], [0], [0], [1], [0, 0, 1, 1], [], []>} : vector<8x4xbf16>, vector<4x128xbf16>, vector<8x128xf32> -> vector<8x128xf32>
    %160 = arith.addf %154, %159 : vector<8x128xf32>
    %161 = arith.truncf %160 : vector<8x128xf32> to vector<8x128xbf16>
    %c0_260 = arith.constant 0 : index
    %c0_261 = arith.constant 0 : index
    %c0_262 = arith.constant 0 : index
    %162 = vector.load %arg7[%c0_260, %c0_261, %c0_262] : memref<1x8x128xbf16, #tpu.memory_space<vmem>>, vector<1x8x128xbf16>
    %163 = vector.shape_cast %162 : vector<1x8x128xbf16> to vector<8x128xbf16>
    %164 = vector.shape_cast %161 : vector<8x128xbf16> to vector<1x8x128xbf16>
    tpu.vector_store %arg7[%c0_260, %c0_261, %c0_262], %164 {strides = array<i32>} : memref<1x8x128xbf16, #tpu.memory_space<vmem>>, vector<1x8x128xbf16>,
    %c0_263 = arith.constant 0 : index
    %c0_264 = arith.constant 0 : index
    %165 = vector.load %arg6[%c0_263, %c0_264] : memref<1x128xf32, #tpu.memory_space<vmem>>, vector<1x128xf32>
    %166 = vector.broadcast %165 : vector<1x128xf32> to vector<8x128xf32>
    %167 = arith.mulf %160, %166 : vector<8x128xf32>
    %cst_265 = arith.constant dense<0.000000e+00> : vector<8xf32>
    %168 = vector.multi_reduction <add>, %167, %cst_265 [1] : vector<8x128xf32> to vector<8xf32>
    %169 = vector.shape_cast %168 : vector<8xf32> to vector<8x1xf32>
    %c0_266 = arith.constant 0 : index
    %c0_267 = arith.constant 0 : index
    %c0_268 = arith.constant 0 : index
    %c0_269 = arith.constant 0 : index
    %170 = vector.load %arg8[%c0_266, %c0_267, %c0_268, %c0_269] : memref<1x1x8x1xf32, #tpu.memory_space<vmem>>, vector<1x1x8x1xf32>
    %171 = vector.shape_cast %170 : vector<1x1x8x1xf32> to vector<8x1xf32>
    %172 = vector.shape_cast %169 : vector<8x1xf32> to vector<1x1x8x1xf32>
    tpu.vector_store %arg8[%c0_266, %c0_267, %c0_268, %c0_269], %172 {strides = array<i32>} : memref<1x1x8x1xf32, #tpu.memory_space<vmem>>, vector<1x1x8x1xf32>,
    %173 = arith.mulf %167, %160 : vector<8x128xf32>
    %cst_270 = arith.constant dense<0.000000e+00> : vector<8xf32>
    %174 = vector.multi_reduction <add>, %173, %cst_270 [1] : vector<8x128xf32> to vector<8xf32>
    %175 = vector.shape_cast %174 : vector<8xf32> to vector<8x1xf32>
    %c0_271 = arith.constant 0 : index
    %c0_272 = arith.constant 0 : index
    %c0_273 = arith.constant 0 : index
    %c0_274 = arith.constant 0 : index
    %176 = vector.load %arg9[%c0_271, %c0_272, %c0_273, %c0_274] : memref<1x1x8x1xf32, #tpu.memory_space<vmem>>, vector<1x1x8x1xf32>
    %177 = vector.shape_cast %176 : vector<1x1x8x1xf32> to vector<8x1xf32>
    %178 = vector.shape_cast %175 : vector<8x1xf32> to vector<1x1x8x1xf32>
    tpu.vector_store %arg9[%c0_271, %c0_272, %c0_273, %c0_274], %178 {strides = array<i32>} : memref<1x1x8x1xf32, #tpu.memory_space<vmem>>, vector<1x1x8x1xf32>,
    return
  }
  func.func @transform_0(%arg0: i32, %arg1: i32) -> (i32, i32, i32, i32) {
    %c1_i32 = arith.constant 1 : i32
    %0 = arith.muli %arg1, %c1_i32 : i32
    %c0_i32 = arith.constant 0 : i32
    %1 = arith.addi %0, %c0_i32 : i32
    %c0_i32_0 = arith.constant 0 : i32
    %c0_i32_1 = arith.constant 0 : i32
    %c0_i32_2 = arith.constant 0 : i32
    return %arg0, %1, %c0_i32_0, %c0_i32_1 : i32, i32, i32, i32
  }
  func.func @transform_1(%arg0: i32, %arg1: i32) -> (i32, i32, i32, i32) {
    %c1_i32 = arith.constant 1 : i32
    %0 = arith.muli %arg1, %c1_i32 : i32
    %c1_i32_0 = arith.constant 1 : i32
    %1 = arith.addi %0, %c1_i32_0 : i32
    %c0_i32 = arith.constant 0 : i32
    %c0_i32_1 = arith.constant 0 : i32
    %c0_i32_2 = arith.constant 0 : i32
    return %arg0, %1, %c0_i32, %c0_i32_1 : i32, i32, i32, i32
  }
  func.func @transform_2(%arg0: i32, %arg1: i32) -> (i32, i32, i32, i32) {
    %c1_i32 = arith.constant 1 : i32
    %0 = arith.muli %arg1, %c1_i32 : i32
    %c2_i32 = arith.constant 2 : i32
    %1 = arith.addi %0, %c2_i32 : i32
    %c0_i32 = arith.constant 0 : i32
    %c0_i32_0 = arith.constant 0 : i32
    %c0_i32_1 = arith.constant 0 : i32
    return %arg0, %1, %c0_i32, %c0_i32_0 : i32, i32, i32, i32
  }
  func.func @transform_3(%arg0: i32, %arg1: i32) -> (i32, i32, i32, i32, i32) {
    %c0_i32 = arith.constant 0 : i32
    %c0_i32_0 = arith.constant 0 : i32
    %c0_i32_1 = arith.constant 0 : i32
    %c0_i32_2 = arith.constant 0 : i32
    %c0_i32_3 = arith.constant 0 : i32
    %c0_i32_4 = arith.constant 0 : i32
    return %c0_i32, %c0_i32_0, %c0_i32_1, %c0_i32_2, %c0_i32_3 : i32, i32, i32, i32, i32
  }
  func.func @transform_4(%arg0: i32, %arg1: i32) -> (i32, i32) {
    %c0_i32 = arith.constant 0 : i32
    %c0_i32_0 = arith.constant 0 : i32
    %c0_i32_1 = arith.constant 0 : i32
    return %c0_i32, %c0_i32_0 : i32, i32
  }
  func.func @transform_5(%arg0: i32, %arg1: i32) -> (i32, i32, i32) {
    %c0_i32 = arith.constant 0 : i32
    %c0_i32_0 = arith.constant 0 : i32
    return %arg0, %c0_i32, %arg1 : i32, i32, i32
  }
  func.func @transform_6(%arg0: i32, %arg1: i32) -> (i32, i32, i32, i32) {
    %c0_i32 = arith.constant 0 : i32
    %c0_i32_0 = arith.constant 0 : i32
    %c0_i32_1 = arith.constant 0 : i32
    return %arg0, %arg1, %c0_i32, %c0_i32_0 : i32, i32, i32, i32
  }
  func.func @transform_7(%arg0: i32, %arg1: i32) -> (i32, i32, i32, i32) {
    %c0_i32 = arith.constant 0 : i32
    %c0_i32_0 = arith.constant 0 : i32
    %c0_i32_1 = arith.constant 0 : i32
    return %arg0, %arg1, %c0_i32, %c0_i32_0 : i32, i32, i32, i32
  }
}

module attributes {stable_mosaic.version = 11 : i64} {
  func.func @_bn_relu_kernel(%arg0: i32, %arg1: i32, %arg2: memref<1x8x1024xbf16, #tpu.memory_space<vmem>>, %arg3: memref<1x8x1xf32, #tpu.memory_space<vmem>>, %arg4: memref<1x8x1xf32, #tpu.memory_space<vmem>>, %arg5: memref<1x8x1024xf32, #tpu.memory_space<vmem>>) attributes {dimension_semantics = [#tpu.dimension_semantics<parallel>, #tpu.dimension_semantics<parallel>], iteration_bounds = array<i64: 2, 1>, scalar_prefetch = 0 : i64, scratch_operands = 0 : i64, tpu.core_type = #tpu.core_type<tc>, window_params = [{transform_indices = @transform_0, window_bounds = array<i64: 1, 8, 1024>}, {pipeline_mode = #tpu.pipeline_mode<synchronous>, transform_indices = @transform_1, window_bounds = array<i64: 1, 8, 1>}, {pipeline_mode = #tpu.pipeline_mode<synchronous>, transform_indices = @transform_2, window_bounds = array<i64: 1, 8, 1>}, {transform_indices = @transform_3, window_bounds = array<i64: 1, 8, 1024>}]} {
    %c0 = arith.constant 0 : index
    %c0_0 = arith.constant 0 : index
    %c0_1 = arith.constant 0 : index
    %0 = vector.load %arg2[%c0, %c0_0, %c0_1] : memref<1x8x1024xbf16, #tpu.memory_space<vmem>>, vector<1x8x1024xbf16>
    %1 = arith.extf %0 : vector<1x8x1024xbf16> to vector<1x8x1024xf32>
    %c0_2 = arith.constant 0 : index
    %c0_3 = arith.constant 0 : index
    %c0_4 = arith.constant 0 : index
    %2 = vector.load %arg3[%c0_2, %c0_3, %c0_4] : memref<1x8x1xf32, #tpu.memory_space<vmem>>, vector<1x8x1xf32>
    %3 = vector.broadcast %2 : vector<1x8x1xf32> to vector<1x8x1024xf32>
    %4 = arith.mulf %1, %3 : vector<1x8x1024xf32>
    %c0_5 = arith.constant 0 : index
    %c0_6 = arith.constant 0 : index
    %c0_7 = arith.constant 0 : index
    %5 = vector.load %arg4[%c0_5, %c0_6, %c0_7] : memref<1x8x1xf32, #tpu.memory_space<vmem>>, vector<1x8x1xf32>
    %6 = vector.broadcast %5 : vector<1x8x1xf32> to vector<1x8x1024xf32>
    %7 = arith.addf %4, %6 : vector<1x8x1024xf32>
    %cst = arith.constant 0.000000e+00 : f32
    %8 = vector.broadcast %cst : f32 to vector<1x8x1024xf32>
    %9 = arith.maximumf %7, %8 : vector<1x8x1024xf32>
    %c0_8 = arith.constant 0 : index
    %c0_9 = arith.constant 0 : index
    %c0_10 = arith.constant 0 : index
    %10 = vector.load %arg5[%c0_8, %c0_9, %c0_10] : memref<1x8x1024xf32, #tpu.memory_space<vmem>>, vector<1x8x1024xf32>
    tpu.vector_store %arg5[%c0_8, %c0_9, %c0_10], %9 {strides = array<i32>} : memref<1x8x1024xf32, #tpu.memory_space<vmem>>, vector<1x8x1024xf32>,
    return
  }
  func.func @transform_0(%arg0: i32, %arg1: i32) -> (i32, i32, i32) {
    %c0_i32 = arith.constant 0 : i32
    %c0_i32_0 = arith.constant 0 : i32
    return %arg0, %c0_i32, %arg1 : i32, i32, i32
  }
  func.func @transform_1(%arg0: i32, %arg1: i32) -> (i32, i32, i32) {
    %c0_i32 = arith.constant 0 : i32
    %c0_i32_0 = arith.constant 0 : i32
    %c0_i32_1 = arith.constant 0 : i32
    %c0_i32_2 = arith.constant 0 : i32
    return %c0_i32, %c0_i32_0, %c0_i32_1 : i32, i32, i32
  }
  func.func @transform_2(%arg0: i32, %arg1: i32) -> (i32, i32, i32) {
    %c0_i32 = arith.constant 0 : i32
    %c0_i32_0 = arith.constant 0 : i32
    %c0_i32_1 = arith.constant 0 : i32
    %c0_i32_2 = arith.constant 0 : i32
    return %c0_i32, %c0_i32_0, %c0_i32_1 : i32, i32, i32
  }
  func.func @transform_3(%arg0: i32, %arg1: i32) -> (i32, i32, i32) {
    %c0_i32 = arith.constant 0 : i32
    %c0_i32_0 = arith.constant 0 : i32
    return %arg0, %c0_i32, %arg1 : i32, i32, i32
  }
}

</mosaic_0001>

<llo_original>
// kernel: _conv3d_bn_relu_impl.3
$region0: #{_conv3d_bn_relu_impl.3}
  #allocation0 [shape = 'u32[]', space=smem, size = 0x4, offset = 0x4, fixed_abs, tag = 'smem constant byte address 0x4 - core index']
  #allocation1 [shape = 'u32[144,128]{1,0:T(1,128)}', space=vmem, size = 0x12000, scoped, tag = 'internal scratch']
  %s0 = inlined_call_operand.vmem [shape: bf16[2,8,1024], index: 0, kind: input, shape index: {}]
  %s1 = inlined_call_operand.vmem [shape: f32[1,8,1], index: 1, kind: input, shape index: {}]
  %s2 = inlined_call_operand.vmem [shape: f32[1,8,1], index: 2, kind: input, shape index: {}]
  %s3 = inlined_call_operand.vmem [shape: f32[2,8,1024], index: 3, kind: output, shape index: {}]
  %s4 = sld [smem:[#allocation0]]
  $region45: #{_conv3d_bn_relu_impl.3} parent=0
    _
  %s6 = ssub.s32 1, %s4
  %s7 = scalar_select 0, %s6, %s4
  loop: start=0, step=1, limit=4
  $region2: #{_conv3d_bn_relu_impl.3} parent=0 // loop_pre_header
    _
  $region3: #{_conv3d_bn_relu_impl.3} parent=0 // loop_header
    %s9 = sphi 0, %s13
    %p10 = scmp.ge.s32.totalorder %s9, 4
    %s16 = sphi 0, %s28
    %s17 = sphi 0, %s24
    %s18 = sphi 0, %s16
    %s19 = sphi 0, %s17
    %s20 = sphi 0, %s18
    %s21 = sphi 0, %s19
    %s33 = sphi 0, %s35
    %s36 = sphi 0, %s33
    %s37 = sphi 0, %s36
    %s53 = sphi 0, %s37
    %s57 = sphi 0, %s57
    %s59 = sphi 0, %s57
    %s60 = sphi 0, %s59
    %s74 = sphi 0, %s60
    %s78 = sphi 0, %s78
    %s80 = sphi 0, %s78
    %s81 = sphi 0, %s80
    %s95 = sphi 0, %s81
    %s103 = sphi 0, %s105
    %s106 = sphi 0, %s103
    %s107 = sphi 0, %s106
    %s123 = sphi 0, %s107
  $region4: #{_conv3d_bn_relu_impl.3} parent=0 // loop_header_branch
    %12 = sbr.rel (%p10) target = $region8
  $region5: #{_conv3d_bn_relu_impl.3} parent=0 // loop_body
    %s14 = ssub.s32 %s9, 1
    %s15 = ssub.s32 %s9, 2
    %s22 = sadd.s32 1, %s17
    %p23 = scmp.ge.s32.totalorder %s22, 1
    %s24 = scalar_select %p23, 0, %s22
    %s25 = sadd.s32 1, %s16
    %s26 = scalar_select %p23, %s25, %s16
    %p27 = scmp.ge.s32.totalorder %s26, 2
    %s28 = scalar_select %p27, 0, %s26
    %s29 = ssub.s32 %s16, %s28
    %s30 = ssub.s32 %s17, %s24
    %s31 = sor.u32 %s29, %s30
    %p32 = scmp.eq.s32.totalorder %s31, 0
    %s34 = sadd.s32 %s33, 1
    %s35 = scalar_select %p32, %s33, %s34
    %p38 = pneg %p32
    %p39 = scmp.eq.s32.totalorder %s9, 1
    %p40 = por %p38, %p39
    %p41 = scmp.ne.s32.totalorder %s33, %s36
    %p42 = scmp.eq.s32.totalorder %s9, 0
    %p43 = por %p41, %p42
    %p44 = scmp.ne.s32.totalorder %s33, %s36
    %p45 = scmp.eq.s32.totalorder %s14, 1
    %p46 = por %p44, %p45
    %p47 = scmp.ne.s32.totalorder %s36, %s37
    %p48 = scmp.eq.s32.totalorder %s14, 0
    %p49 = por %p47, %p48
    %p50 = scmp.ne.s32.totalorder %s36, %s37
    %p51 = scmp.eq.s32.totalorder %s15, 1
    %p52 = por %p50, %p51
    %p54 = scmp.ne.s32.totalorder %s37, %s53
    %p55 = scmp.eq.s32.totalorder %s15, 0
    %p56 = por %p54, %p55
    %s58 = sadd.s32 %s57, 1
    %p61 = scmp.eq.s32.totalorder %s9, 1
    %p62 = scmp.ne.s32.totalorder %s57, %s59
    %p63 = scmp.eq.s32.totalorder %s9, 0
    %p64 = por %p62, %p63
    %p65 = scmp.ne.s32.totalorder %s57, %s59
    %p66 = scmp.eq.s32.totalorder %s14, 1
    %p67 = por %p65, %p66
    %p68 = scmp.ne.s32.totalorder %s59, %s60
    %p69 = scmp.eq.s32.totalorder %s14, 0
    %p70 = por %p68, %p69
    %p71 = scmp.ne.s32.totalorder %s59, %s60
    %p72 = scmp.eq.s32.totalorder %s15, 1
    %p73 = por %p71, %p72
    %p75 = scmp.ne.s32.totalorder %s60, %s74
    %p76 = scmp.eq.s32.totalorder %s15, 0
    %p77 = por %p75, %p76
    %s79 = sadd.s32 %s78, 1
    %p82 = scmp.eq.s32.totalorder %s9, 1
    %p83 = scmp.ne.s32.totalorder %s78, %s80
    %p84 = scmp.eq.s32.totalorder %s9, 0
    %p85 = por %p83, %p84
    %p86 = scmp.ne.s32.totalorder %s78, %s80
    %p87 = scmp.eq.s32.totalorder %s14, 1
    %p88 = por %p86, %p87
    %p89 = scmp.ne.s32.totalorder %s80, %s81
    %p90 = scmp.eq.s32.totalorder %s14, 0
    %p91 = por %p89, %p90
    %p92 = scmp.ne.s32.totalorder %s80, %s81
    %p93 = scmp.eq.s32.totalorder %s15, 1
    %p94 = por %p92, %p93
    %p96 = scmp.ne.s32.totalorder %s81, %s95
    %p97 = scmp.eq.s32.totalorder %s15, 0
    %p98 = por %p96, %p97
    %s99 = ssub.s32 %s16, %s28
    %s100 = ssub.s32 %s17, %s24
    %s101 = sor.u32 %s99, %s100
    %p102 = scmp.eq.s32.totalorder %s101, 0
    %s104 = sadd.s32 %s103, 1
    %s105 = scalar_select %p102, %s103, %s104
    %p108 = pneg %p102
    %p109 = scmp.eq.s32.totalorder %s9, 1
    %p110 = por %p108, %p109
    %p111 = scmp.ne.s32.totalorder %s103, %s106
    %p112 = scmp.eq.s32.totalorder %s9, 0
    %p113 = por %p111, %p112
    %p114 = scmp.ne.s32.totalorder %s103, %s106
    %p115 = scmp.eq.s32.totalorder %s14, 1
    %p116 = por %p114, %p115
    %p117 = scmp.ne.s32.totalorder %s106, %s107
    %p118 = scmp.eq.s32.totalorder %s14, 0
    %p119 = por %p117, %p118
    %p120 = scmp.ne.s32.totalorder %s106, %s107
    %p121 = scmp.eq.s32.totalorder %s15, 1
    %p122 = por %p120, %p121
    %p124 = scmp.ne.s32.totalorder %s107, %s123
    %p125 = scmp.eq.s32.totalorder %s15, 0
    %p126 = por %p124, %p125
    %p127 = scmp.le.s32.totalorder 1, %s9
    %p128 = scmp.lt.s32.totalorder %s9, 3
    %p129 = pnand %p127, %p128
    %p130 = pneg %p129
    // Predicated region
    $region9: #{_conv3d_bn_relu_impl.3} parent=5 // pred_check
      _
    $region10: #{_conv3d_bn_relu_impl.3} parent=5 // pred_check_branch
      %132 = sbr.rel (%p129) target = $region12
    $region11: #{_conv3d_bn_relu_impl.3} parent=5 // pred_region
      %s133 = ssub.s32 %s9, 1
      // Predicated region
      $region13: #{_conv3d_bn_relu_impl.3} parent=11 // pred_check
        %p134 = pneg %p70
      $region14: #{_conv3d_bn_relu_impl.3} parent=11 // pred_check_branch
        %136 = sbr.rel (%p134) target = $region16
      $region15: #{_conv3d_bn_relu_impl.3} parent=11 // pred_region
        _
      $region16: #{_conv3d_bn_relu_impl.3} parent=11 // pred_fallthru
        _
      // Predicated region
      $region17: #{_conv3d_bn_relu_impl.3} parent=11 // pred_check
        %p137 = pneg %p91
      $region18: #{_conv3d_bn_relu_impl.3} parent=11 // pred_check_branch
        %139 = sbr.rel (%p137) target = $region20
      $region19: #{_conv3d_bn_relu_impl.3} parent=11 // pred_region
        _
      $region20: #{_conv3d_bn_relu_impl.3} parent=11 // pred_fallthru
        _
    $region12: #{_conv3d_bn_relu_impl.3} parent=5 // pred_fallthru
      _
    %p140 = scmp.lt.s32.totalorder %s9, 2
    // Predicated region
    $region21: #{_conv3d_bn_relu_impl.3} parent=5 // pred_check
      %p141 = pneg %p140
    $region22: #{_conv3d_bn_relu_impl.3} parent=5 // pred_check_branch
      %143 = sbr.rel (%p141) target = $region24
    $region23: #{_conv3d_bn_relu_impl.3} parent=5 // pred_region
      // Predicated region
      $region25: #{_conv3d_bn_relu_impl.3} parent=23 // pred_check
        %p144 = pneg %p43
      $region26: #{_conv3d_bn_relu_impl.3} parent=23 // pred_check_branch
        %146 = sbr.rel (%p144) target = $region28
      $region27: #{_conv3d_bn_relu_impl.3} parent=23 // pred_region
        %s147 = smul.u32 8, %s17
        %p148 = scmp.lt.s32.totalorder %s16, 1
        %s149 = scalar_select %p148, %s16, 1
        %p150 = scmp.lt.s32.totalorder %s147, 7
        %s151 = scalar_select %p150, %s147, 7
        %s152 = smul.addr %s149, 8
        %s153 = sadd.s32 %s151, %s152
        %s154 = smul.addr %s153, 4
        %s155 = scalar_lea.vmem %s0, %s154
        %s156 = smul.u32 8, %s17
      $region28: #{_conv3d_bn_relu_impl.3} parent=23 // pred_fallthru
        _
    $region24: #{_conv3d_bn_relu_impl.3} parent=5 // pred_fallthru
      _
    %p157 = scmp.le.s32.totalorder 1, %s9
    %p158 = scmp.lt.s32.totalorder %s9, 3
    %p159 = pnand %p157, %p158
    %p160 = pneg %p159
    // Predicated region
    $region29: #{_conv3d_bn_relu_impl.3} parent=5 // pred_check
      _
    $region30: #{_conv3d_bn_relu_impl.3} parent=5 // pred_check_branch
      %162 = sbr.rel (%p159) target = $region32
    $region31: #{_conv3d_bn_relu_impl.3} parent=5 // pred_region
      %s163 = ssub.s32 %s9, 1
      %s164 = smul.u32 8, %s19
      %p165 = scmp.lt.s32.totalorder %s18, 1
      %s166 = scalar_select %p165, %s18, 1
      %p167 = scmp.lt.s32.totalorder %s164, 7
      %s168 = scalar_select %p167, %s164, 7
      %s169 = smul.addr %s166, 8
      %s170 = sadd.s32 %s168, %s169
      %s171 = smul.addr %s170, 4
      %s172 = scalar_lea.vmem %s0, %s171
      %p173 = pneg %p49
      %p174 = pneg %p46
      %p175 = pneg %p70
      %p176 = pneg %p67
      %p177 = pneg %p91
      %p178 = pneg %p88
      %p179 = pneg %p119
      %p180 = pneg %p116
      %s181 = smul.u32 8, %s19
      %p182 = scmp.lt.s32.totalorder %s18, 1
      %s183 = scalar_select %p182, %s18, 1
      %p184 = scmp.lt.s32.totalorder %s181, 7
      %s185 = scalar_select %p184, %s181, 7
      %s186 = smul.addr %s183, 8
      %s187 = sadd.s32 %s185, %s186
      %s188 = smul.addr %s187, 8
      %s189 = scalar_lea.vmem %s3, %s188
      %s190 = smul.u32 8, %s19
      %p191 = scmp.lt.s32.totalorder %s18, 1
      %s192 = scalar_select %p191, %s18, 1
      %p193 = scmp.lt.s32.totalorder %s190, 7
      %s194 = scalar_select %p193, %s190, 7
      %s195 = smul.addr %s192, 8
      %s196 = sadd.s32 %s194, %s195
      %s197 = smul.addr %s196, 4
      %s198 = scalar_lea.vmem %s0, %s197
      %s199 = smul.u32 8, %s19
      %s200 = smul.u32 8, %s19
      %p201 = scmp.lt.s32.totalorder %s18, 1
      %s202 = scalar_select %p201, %s18, 1
      %p203 = scmp.lt.s32.totalorder %s200, 7
      %s204 = scalar_select %p203, %s200, 7
      %s205 = smul.addr %s202, 8
      %s206 = sadd.s32 %s204, %s205
      %s207 = smul.addr %s206, 8
      %s208 = scalar_lea.vmem %s3, %s207
      %s209 = smul.u32 8, %s19
      %v210 = vld [vmem:[%s198] sm:$0xff]
      %v211 = vld [vmem:[%s198 + $0x8] sm:$0xff]
      %v212 = vld [vmem:[%s198 + $0x10] sm:$0xff]
      %v213 = vld [vmem:[%s198 + $0x18] sm:$0xff]
      %v214 = vunpack.c.l.bf16 %v210
      %v215 = vunpack.c.h.bf16 %v210
      %v216 = vunpack.c.l.bf16 %v211
      %v217 = vunpack.c.h.bf16 %v211
      %v218 = vunpack.c.l.bf16 %v212
      %v219 = vunpack.c.h.bf16 %v212
      %v220 = vunpack.c.l.bf16 %v213
      %v221 = vunpack.c.h.bf16 %v213
      %v222 = vld [vmem:[%s1] sm:$0xff]
      %224 = vset.pattern.permute.xlu0 0
      %225 = vperm.xlu0 %224, %v222
      %v226 = vpop.permute.xlu0 %225
      %v228 = vmul.f32 %v214, %v226
      %v229 = vmul.f32 %v215, %v226
      %v230 = vmul.f32 %v216, %v226
      %v231 = vmul.f32 %v217, %v226
      %v232 = vmul.f32 %v218, %v226
      %v233 = vmul.f32 %v219, %v226
      %v234 = vmul.f32 %v220, %v226
      %v235 = vmul.f32 %v221, %v226
      %v236 = vld [vmem:[%s2] sm:$0xff]
      %238 = vset.pattern.permute.xlu0 0
      %239 = vperm.xlu0 %238, %v236
      %v240 = vpop.permute.xlu0 %239
      %v242 = vadd.f32 %v228, %v240
      %v243 = vadd.f32 %v229, %v240
      %v244 = vadd.f32 %v230, %v240
      %v245 = vadd.f32 %v231, %v240
      %v246 = vadd.f32 %v232, %v240
      %v247 = vadd.f32 %v233, %v240
      %v248 = vadd.f32 %v234, %v240
      %v249 = vadd.f32 %v235, %v240
      %v250 = vmax.f32 %v242, 0.0
      %v251 = vmax.f32 %v243, 0.0
      %v252 = vmax.f32 %v244, 0.0
      %v253 = vmax.f32 %v245, 0.0
      %v254 = vmax.f32 %v246, 0.0
      %v255 = vmax.f32 %v247, 0.0
      %v256 = vmax.f32 %v248, 0.0
      %v257 = vmax.f32 %v249, 0.0
      %258 = vst [vmem:[%s208] sm:$0xff] %v250
      %259 = vst [vmem:[%s208 + $0x8] sm:$0xff] %v251
      %260 = vst [vmem:[%s208 + $0x10] sm:$0xff] %v252
      %261 = vst [vmem:[%s208 + $0x18] sm:$0xff] %v253
      %262 = vst [vmem:[%s208 + $0x20] sm:$0xff] %v254
      %263 = vst [vmem:[%s208 + $0x28] sm:$0xff] %v255
      %264 = vst [vmem:[%s208 + $0x30] sm:$0xff] %v256
      %265 = vst [vmem:[%s208 + $0x38] sm:$0xff] %v257
      %s266 = smul.u32 8, %s19
      %p267 = scmp.lt.s32.totalorder %s18, 1
      %s268 = scalar_select %p267, %s18, 1
      %p269 = scmp.lt.s32.totalorder %s266, 7
      %s270 = scalar_select %p269, %s266, 7
      %s271 = smul.addr %s268, 8
      %s272 = sadd.s32 %s270, %s271
      %s273 = smul.addr %s272, 8
      %s274 = scalar_lea.vmem %s3, %s273
      // Predicated region
      $region33: #{_conv3d_bn_relu_impl.3} parent=31 // pred_check
        %p275 = pneg %p116
      $region34: #{_conv3d_bn_relu_impl.3} parent=31 // pred_check_branch
        %277 = sbr.rel (%p275) target = $region36
      $region35: #{_conv3d_bn_relu_impl.3} parent=31 // pred_region
        %s278 = smul.u32 8, %s19
      $region36: #{_conv3d_bn_relu_impl.3} parent=31 // pred_fallthru
        _
    $region32: #{_conv3d_bn_relu_impl.3} parent=5 // pred_fallthru
      _
    %p279 = scmp.le.s32.totalorder 2, %s9
    // Predicated region
    $region37: #{_conv3d_bn_relu_impl.3} parent=5 // pred_check
      %p280 = pneg %p279
    $region38: #{_conv3d_bn_relu_impl.3} parent=5 // pred_check_branch
      %282 = sbr.rel (%p280) target = $region40
    $region39: #{_conv3d_bn_relu_impl.3} parent=5 // pred_region
      %s283 = ssub.s32 %s9, 2
      // Predicated region
      $region41: #{_conv3d_bn_relu_impl.3} parent=39 // pred_check
        %p284 = pneg %p122
      $region42: #{_conv3d_bn_relu_impl.3} parent=39 // pred_check_branch
        %286 = sbr.rel (%p284) target = $region44
      $region43: #{_conv3d_bn_relu_impl.3} parent=39 // pred_region
        %s287 = smul.u32 8, %s21
        %p288 = scmp.lt.s32.totalorder %s20, 1
        %s289 = scalar_select %p288, %s20, 1
        %p290 = scmp.lt.s32.totalorder %s287, 7
        %s291 = scalar_select %p290, %s287, 7
        %s292 = smul.addr %s289, 8
        %s293 = sadd.s32 %s291, %s292
        %s294 = smul.addr %s293, 8
        %s295 = scalar_lea.vmem %s3, %s294
      $region44: #{_conv3d_bn_relu_impl.3} parent=39 // pred_fallthru
        _
    $region40: #{_conv3d_bn_relu_impl.3} parent=5 // pred_fallthru
      _
  $region6: #{_conv3d_bn_relu_impl.3} parent=0 // loop_footer
    %s13 = sadd.s32 1, %s9
  $region7: #{_conv3d_bn_relu_impl.3} parent=0 // loop_footer_branch
    %8 = sbr.rel target = $region3
  $region8: #{_conv3d_bn_relu_impl.3} parent=0 // loop_exit
    _

// kernel: _conv3d_bn_relu_impl.2
$region0: #{_conv3d_bn_relu_impl.2}
  #allocation0 [shape = 'u32[]', space=smem, size = 0x4, offset = 0x4, fixed_abs, tag = 'smem constant byte address 0x4 - core index']
  #allocation1 [shape = 'u32[144,128]{1,0:T(1,128)}', space=vmem, size = 0x12000, scoped, tag = 'internal scratch']
  %s0 = inlined_call_operand.vmem [shape: bf16[2,10,4,256], index: 0, kind: input, shape index: {}, may-alias: {0,1,2}]
  %s1 = inlined_call_operand.vmem [shape: bf16[2,10,4,256], index: 1, kind: input, shape index: {}, may-alias: {0,1,2}]
  %s2 = inlined_call_operand.vmem [shape: bf16[2,10,4,256], index: 2, kind: input, shape index: {}, may-alias: {0,1,2}]
  %s3 = inlined_call_operand.vmem [shape: bf16[3,3,3,8,4], index: 3, kind: input, shape index: {}]
  %s4 = inlined_call_operand.vmem [shape: f32[1,128], index: 4, kind: input, shape index: {}]
  %s5 = inlined_call_operand.vmem [shape: bf16[2,8,1024], index: 5, kind: output, shape index: {0}]
  %s6 = inlined_call_operand.vmem [shape: f32[2,8,8,1], index: 6, kind: output, shape index: {1}]
  %s7 = inlined_call_operand.vmem [shape: f32[2,8,8,1], index: 7, kind: output, shape index: {2}]
  %8 = xla_tuple %s5, %s6, %s7
  %s9 = sld [smem:[#allocation0]]
  $region69: #{_conv3d_bn_relu_impl.2} parent=0
    _
  %s11 = ssub.s32 1, %s9
  %s12 = scalar_select 0, %s11, %s9
  loop: start=0, step=1, limit=18
  $region2: #{_conv3d_bn_relu_impl.2} parent=0 // loop_pre_header
    _
  $region3: #{_conv3d_bn_relu_impl.2} parent=0 // loop_header
    %s14 = sphi 0, %s18
    %p15 = scmp.ge.s32.totalorder %s14, 18
    %s21 = sphi 0, %s33
    %s22 = sphi 0, %s29
    %s23 = sphi 0, %s21
    %s24 = sphi 0, %s22
    %s25 = sphi 0, %s23
    %s26 = sphi 0, %s24
    %s38 = sphi 0, %s40
    %s41 = sphi 0, %s38
    %s42 = sphi 0, %s41
    %s58 = sphi 0, %s42
    %s68 = sphi 0, %s70
    %s71 = sphi 0, %s68
    %s72 = sphi 0, %s71
    %s88 = sphi 0, %s72
    %s98 = sphi 0, %s100
    %s101 = sphi 0, %s98
    %s102 = sphi 0, %s101
    %s118 = sphi 0, %s102
    %s122 = sphi 0, %s122
    %s124 = sphi 0, %s122
    %s125 = sphi 0, %s124
    %s139 = sphi 0, %s125
    %s143 = sphi 0, %s143
    %s145 = sphi 0, %s143
    %s146 = sphi 0, %s145
    %s160 = sphi 0, %s146
    %s168 = sphi 0, %s170
    %s171 = sphi 0, %s168
    %s172 = sphi 0, %s171
    %s188 = sphi 0, %s172
    %s196 = sphi 0, %s198
    %s199 = sphi 0, %s196
    %s200 = sphi 0, %s199
    %s216 = sphi 0, %s200
    %s224 = sphi 0, %s226
    %s227 = sphi 0, %s224
    %s228 = sphi 0, %s227
    %s244 = sphi 0, %s228
  $region4: #{_conv3d_bn_relu_impl.2} parent=0 // loop_header_branch
    %17 = sbr.rel (%p15) target = $region8
  $region5: #{_conv3d_bn_relu_impl.2} parent=0 // loop_body
    %s19 = ssub.s32 %s14, 1
    %s20 = ssub.s32 %s14, 2
    %s27 = sadd.s32 1, %s22
    %p28 = scmp.ge.s32.totalorder %s27, 8
    %s29 = scalar_select %p28, 0, %s27
    %s30 = sadd.s32 1, %s21
    %s31 = scalar_select %p28, %s30, %s21
    %p32 = scmp.ge.s32.totalorder %s31, 2
    %s33 = scalar_select %p32, 0, %s31
    %s34 = ssub.s32 %s21, %s33
    %s35 = ssub.s32 %s22, %s29
    %s36 = sor.u32 %s34, %s35
    %p37 = scmp.eq.s32.totalorder %s36, 0
    %s39 = sadd.s32 %s38, 1
    %s40 = scalar_select %p37, %s38, %s39
    %p43 = pneg %p37
    %p44 = scmp.eq.s32.totalorder %s14, 15
    %p45 = por %p43, %p44
    %p46 = scmp.ne.s32.totalorder %s38, %s41
    %p47 = scmp.eq.s32.totalorder %s14, 0
    %p48 = por %p46, %p47
    %p49 = scmp.ne.s32.totalorder %s38, %s41
    %p50 = scmp.eq.s32.totalorder %s19, 15
    %p51 = por %p49, %p50
    %p52 = scmp.ne.s32.totalorder %s41, %s42
    %p53 = scmp.eq.s32.totalorder %s19, 0
    %p54 = por %p52, %p53
    %p55 = scmp.ne.s32.totalorder %s41, %s42
    %p56 = scmp.eq.s32.totalorder %s20, 15
    %p57 = por %p55, %p56
    %p59 = scmp.ne.s32.totalorder %s42, %s58
    %p60 = scmp.eq.s32.totalorder %s20, 0
    %p61 = por %p59, %p60
    %s62 = sadd.s32 %s22, 1
    %s63 = sadd.s32 %s29, 1
    %s64 = ssub.s32 %s21, %s33
    %s65 = ssub.s32 %s62, %s63
    %s66 = sor.u32 %s64, %s65
    %p67 = scmp.eq.s32.totalorder %s66, 0
    %s69 = sadd.s32 %s68, 1
    %s70 = scalar_select %p67, %s68, %s69
    %p73 = pneg %p67
    %p74 = scmp.eq.s32.totalorder %s14, 15
    %p75 = por %p73, %p74
    %p76 = scmp.ne.s32.totalorder %s68, %s71
    %p77 = scmp.eq.s32.totalorder %s14, 0
    %p78 = por %p76, %p77
    %p79 = scmp.ne.s32.totalorder %s68, %s71
    %p80 = scmp.eq.s32.totalorder %s19, 15
    %p81 = por %p79, %p80
    %p82 = scmp.ne.s32.totalorder %s71, %s72
    %p83 = scmp.eq.s32.totalorder %s19, 0
    %p84 = por %p82, %p83
    %p85 = scmp.ne.s32.totalorder %s71, %s72
    %p86 = scmp.eq.s32.totalorder %s20, 15
    %p87 = por %p85, %p86
    %p89 = scmp.ne.s32.totalorder %s72, %s88
    %p90 = scmp.eq.s32.totalorder %s20, 0
    %p91 = por %p89, %p90
    %s92 = sadd.s32 %s22, 2
    %s93 = sadd.s32 %s29, 2
    %s94 = ssub.s32 %s21, %s33
    %s95 = ssub.s32 %s92, %s93
    %s96 = sor.u32 %s94, %s95
    %p97 = scmp.eq.s32.totalorder %s96, 0
    %s99 = sadd.s32 %s98, 1
    %s100 = scalar_select %p97, %s98, %s99
    %p103 = pneg %p97
    %p104 = scmp.eq.s32.totalorder %s14, 15
    %p105 = por %p103, %p104
    %p106 = scmp.ne.s32.totalorder %s98, %s101
    %p107 = scmp.eq.s32.totalorder %s14, 0
    %p108 = por %p106, %p107
    %p109 = scmp.ne.s32.totalorder %s98, %s101
    %p110 = scmp.eq.s32.totalorder %s19, 15
    %p111 = por %p109, %p110
    %p112 = scmp.ne.s32.totalorder %s101, %s102
    %p113 = scmp.eq.s32.totalorder %s19, 0
    %p114 = por %p112, %p113
    %p115 = scmp.ne.s32.totalorder %s101, %s102
    %p116 = scmp.eq.s32.totalorder %s20, 15
    %p117 = por %p115, %p116
    %p119 = scmp.ne.s32.totalorder %s102, %s118
    %p120 = scmp.eq.s32.totalorder %s20, 0
    %p121 = por %p119, %p120
    %s123 = sadd.s32 %s122, 1
    %p126 = scmp.eq.s32.totalorder %s14, 15
    %p127 = scmp.ne.s32.totalorder %s122, %s124
    %p128 = scmp.eq.s32.totalorder %s14, 0
    %p129 = por %p127, %p128
    %p130 = scmp.ne.s32.totalorder %s122, %s124
    %p131 = scmp.eq.s32.totalorder %s19, 15
    %p132 = por %p130, %p131
    %p133 = scmp.ne.s32.totalorder %s124, %s125
    %p134 = scmp.eq.s32.totalorder %s19, 0
    %p135 = por %p133, %p134
    %p136 = scmp.ne.s32.totalorder %s124, %s125
    %p137 = scmp.eq.s32.totalorder %s20, 15
    %p138 = por %p136, %p137
    %p140 = scmp.ne.s32.totalorder %s125, %s139
    %p141 = scmp.eq.s32.totalorder %s20, 0
    %p142 = por %p140, %p141
    %s144 = sadd.s32 %s143, 1
    %p147 = scmp.eq.s32.totalorder %s14, 15
    %p148 = scmp.ne.s32.totalorder %s143, %s145
    %p149 = scmp.eq.s32.totalorder %s14, 0
    %p150 = por %p148, %p149
    %p151 = scmp.ne.s32.totalorder %s143, %s145
    %p152 = scmp.eq.s32.totalorder %s19, 15
    %p153 = por %p151, %p152
    %p154 = scmp.ne.s32.totalorder %s145, %s146
    %p155 = scmp.eq.s32.totalorder %s19, 0
    %p156 = por %p154, %p155
    %p157 = scmp.ne.s32.totalorder %s145, %s146
    %p158 = scmp.eq.s32.totalorder %s20, 15
    %p159 = por %p157, %p158
    %p161 = scmp.ne.s32.totalorder %s146, %s160
    %p162 = scmp.eq.s32.totalorder %s20, 0
    %p163 = por %p161, %p162
    %s164 = ssub.s32 %s21, %s33
    %s165 = ssub.s32 %s22, %s29
    %s166 = sor.u32 %s164, %s165
    %p167 = scmp.eq.s32.totalorder %s166, 0
    %s169 = sadd.s32 %s168, 1
    %s170 = scalar_select %p167, %s168, %s169
    %p173 = pneg %p167
    %p174 = scmp.eq.s32.totalorder %s14, 15
    %p175 = por %p173, %p174
    %p176 = scmp.ne.s32.totalorder %s168, %s171
    %p177 = scmp.eq.s32.totalorder %s14, 0
    %p178 = por %p176, %p177
    %p179 = scmp.ne.s32.totalorder %s168, %s171
    %p180 = scmp.eq.s32.totalorder %s19, 15
    %p181 = por %p179, %p180
    %p182 = scmp.ne.s32.totalorder %s171, %s172
    %p183 = scmp.eq.s32.totalorder %s19, 0
    %p184 = por %p182, %p183
    %p185 = scmp.ne.s32.totalorder %s171, %s172
    %p186 = scmp.eq.s32.totalorder %s20, 15
    %p187 = por %p185, %p186
    %p189 = scmp.ne.s32.totalorder %s172, %s188
    %p190 = scmp.eq.s32.totalorder %s20, 0
    %p191 = por %p189, %p190
    %s192 = ssub.s32 %s21, %s33
    %s193 = ssub.s32 %s22, %s29
    %s194 = sor.u32 %s192, %s193
    %p195 = scmp.eq.s32.totalorder %s194, 0
    %s197 = sadd.s32 %s196, 1
    %s198 = scalar_select %p195, %s196, %s197
    %p201 = pneg %p195
    %p202 = scmp.eq.s32.totalorder %s14, 15
    %p203 = por %p201, %p202
    %p204 = scmp.ne.s32.totalorder %s196, %s199
    %p205 = scmp.eq.s32.totalorder %s14, 0
    %p206 = por %p204, %p205
    %p207 = scmp.ne.s32.totalorder %s196, %s199
    %p208 = scmp.eq.s32.totalorder %s19, 15
    %p209 = por %p207, %p208
    %p210 = scmp.ne.s32.totalorder %s199, %s200
    %p211 = scmp.eq.s32.totalorder %s19, 0
    %p212 = por %p210, %p211
    %p213 = scmp.ne.s32.totalorder %s199, %s200
    %p214 = scmp.eq.s32.totalorder %s20, 15
    %p215 = por %p213, %p214
    %p217 = scmp.ne.s32.totalorder %s200, %s216
    %p218 = scmp.eq.s32.totalorder %s20, 0
    %p219 = por %p217, %p218
    %s220 = ssub.s32 %s21, %s33
    %s221 = ssub.s32 %s22, %s29
    %s222 = sor.u32 %s220, %s221
    %p223 = scmp.eq.s32.totalorder %s222, 0
    %s225 = sadd.s32 %s224, 1
    %s226 = scalar_select %p223, %s224, %s225
    %p229 = pneg %p223
    %p230 = scmp.eq.s32.totalorder %s14, 15
    %p231 = por %p229, %p230
    %p232 = scmp.ne.s32.totalorder %s224, %s227
    %p233 = scmp.eq.s32.totalorder %s14, 0
    %p234 = por %p232, %p233
    %p235 = scmp.ne.s32.totalorder %s224, %s227
    %p236 = scmp.eq.s32.totalorder %s19, 15
    %p237 = por %p235, %p236
    %p238 = scmp.ne.s32.totalorder %s227, %s228
    %p239 = scmp.eq.s32.totalorder %s19, 0
    %p240 = por %p238, %p239
    %p241 = scmp.ne.s32.totalorder %s227, %s228
    %p242 = scmp.eq.s32.totalorder %s20, 15
    %p243 = por %p241, %p242
    %p245 = scmp.ne.s32.totalorder %s228, %s244
    %p246 = scmp.eq.s32.totalorder %s20, 0
    %p247 = por %p245, %p246
    %p248 = scmp.le.s32.totalorder 1, %s14
    %p249 = scmp.lt.s32.totalorder %s14, 17
    %p250 = pnand %p248, %p249
    %p251 = pneg %p250
    // Predicated region
    $region9: #{_conv3d_bn_relu_impl.2} parent=5 // pred_check
      _
    $region10: #{_conv3d_bn_relu_impl.2} parent=5 // pred_check_branch
      %253 = sbr.rel (%p250) target = $region12
    $region11: #{_conv3d_bn_relu_impl.2} parent=5 // pred_region
      %s254 = ssub.s32 %s14, 1
      // Predicated region
      $region13: #{_conv3d_bn_relu_impl.2} parent=11 // pred_check
        %p255 = pneg %p135
      $region14: #{_conv3d_bn_relu_impl.2} parent=11 // pred_check_branch
        %257 = sbr.rel (%p255) target = $region16
      $region15: #{_conv3d_bn_relu_impl.2} parent=11 // pred_region
        _
      $region16: #{_conv3d_bn_relu_impl.2} parent=11 // pred_fallthru
        _
      // Predicated region
      $region17: #{_conv3d_bn_relu_impl.2} parent=11 // pred_check
        %p258 = pneg %p156
      $region18: #{_conv3d_bn_relu_impl.2} parent=11 // pred_check_branch
        %260 = sbr.rel (%p258) target = $region20
      $region19: #{_conv3d_bn_relu_impl.2} parent=11 // pred_region
        _
      $region20: #{_conv3d_bn_relu_impl.2} parent=11 // pred_fallthru
        _
    $region12: #{_conv3d_bn_relu_impl.2} parent=5 // pred_fallthru
      _
    %p261 = scmp.lt.s32.totalorder %s14, 16
    // Predicated region
    $region21: #{_conv3d_bn_relu_impl.2} parent=5 // pred_check
      %p262 = pneg %p261
    $region22: #{_conv3d_bn_relu_impl.2} parent=5 // pred_check_branch
      %264 = sbr.rel (%p262) target = $region24
    $region23: #{_conv3d_bn_relu_impl.2} parent=5 // pred_region
      // Predicated region
      $region25: #{_conv3d_bn_relu_impl.2} parent=23 // pred_check
        %p265 = pneg %p48
      $region26: #{_conv3d_bn_relu_impl.2} parent=23 // pred_check_branch
        %267 = sbr.rel (%p265) target = $region28
      $region27: #{_conv3d_bn_relu_impl.2} parent=23 // pred_region
        %p268 = scmp.lt.s32.totalorder %s21, 1
        %s269 = scalar_select %p268, %s21, 1
        %p270 = scmp.lt.s32.totalorder %s22, 9
        %s271 = scalar_select %p270, %s22, 9
        %s272 = smul.addr %s271, 2
        %s273 = smul.addr %s269, 20
        %s274 = sadd.s32 %s272, %s273
        %s275 = smul.addr %s274, 2
        %s276 = scalar_lea.vmem %s0, %s275
      $region28: #{_conv3d_bn_relu_impl.2} parent=23 // pred_fallthru
        _
      // Predicated region
      $region29: #{_conv3d_bn_relu_impl.2} parent=23 // pred_check
        %p277 = pneg %p78
      $region30: #{_conv3d_bn_relu_impl.2} parent=23 // pred_check_branch
        %279 = sbr.rel (%p277) target = $region32
      $region31: #{_conv3d_bn_relu_impl.2} parent=23 // pred_region
        %s280 = sadd.s32 %s22, 1
        %p281 = scmp.lt.s32.totalorder %s21, 1
        %s282 = scalar_select %p281, %s21, 1
        %p283 = scmp.lt.s32.totalorder %s280, 9
        %s284 = scalar_select %p283, %s280, 9
        %s285 = smul.addr %s284, 2
        %s286 = smul.addr %s282, 20
        %s287 = sadd.s32 %s285, %s286
        %s288 = smul.addr %s287, 2
        %s289 = scalar_lea.vmem %s1, %s288
        %s290 = sadd.s32 %s22, 1
      $region32: #{_conv3d_bn_relu_impl.2} parent=23 // pred_fallthru
        _
      // Predicated region
      $region33: #{_conv3d_bn_relu_impl.2} parent=23 // pred_check
        %p291 = pneg %p108
      $region34: #{_conv3d_bn_relu_impl.2} parent=23 // pred_check_branch
        %293 = sbr.rel (%p291) target = $region36
      $region35: #{_conv3d_bn_relu_impl.2} parent=23 // pred_region
        %s294 = sadd.s32 %s22, 2
        %p295 = scmp.lt.s32.totalorder %s21, 1
        %s296 = scalar_select %p295, %s21, 1
        %p297 = scmp.lt.s32.totalorder %s294, 9
        %s298 = scalar_select %p297, %s294, 9
        %s299 = smul.addr %s298, 2
        %s300 = smul.addr %s296, 20
        %s301 = sadd.s32 %s299, %s300
        %s302 = smul.addr %s301, 2
        %s303 = scalar_lea.vmem %s2, %s302
        %s304 = sadd.s32 %s22, 2
      $region36: #{_conv3d_bn_relu_impl.2} parent=23 // pred_fallthru
        _
    $region24: #{_conv3d_bn_relu_impl.2} parent=5 // pred_fallthru
      _
    %p305 = scmp.le.s32.totalorder 1, %s14
    %p306 = scmp.lt.s32.totalorder %s14, 17
    %p307 = pnand %p305, %p306
    %p308 = pneg %p307
    // Predicated region
    $region37: #{_conv3d_bn_relu_impl.2} parent=5 // pred_check
      _
    $region38: #{_conv3d_bn_relu_impl.2} parent=5 // pred_check_branch
      %310 = sbr.rel (%p307) target = $region40
    $region39: #{_conv3d_bn_relu_impl.2} parent=5 // pred_region
      %s311 = ssub.s32 %s14, 1
      %p312 = scmp.lt.s32.totalorder %s23, 1
      %s313 = scalar_select %p312, %s23, 1
      %p314 = scmp.lt.s32.totalorder %s24, 9
      %s315 = scalar_select %p314, %s24, 9
      %s316 = smul.addr %s315, 2
      %s317 = smul.addr %s313, 20
      %s318 = sadd.s32 %s316, %s317
      %s319 = smul.addr %s318, 2
      %s320 = scalar_lea.vmem %s0, %s319
      %p321 = pneg %p54
      %p322 = pneg %p51
      %s323 = sadd.s32 %s24, 1
      %p324 = scmp.lt.s32.totalorder %s23, 1
      %s325 = scalar_select %p324, %s23, 1
      %p326 = scmp.lt.s32.totalorder %s323, 9
      %s327 = scalar_select %p326, %s323, 9
      %s328 = smul.addr %s327, 2
      %s329 = smul.addr %s325, 20
      %s330 = sadd.s32 %s328, %s329
      %s331 = smul.addr %s330, 2
      %s332 = scalar_lea.vmem %s1, %s331
      %p333 = pneg %p84
      %p334 = pneg %p81
      %s335 = sadd.s32 %s24, 2
      %p336 = scmp.lt.s32.totalorder %s23, 1
      %s337 = scalar_select %p336, %s23, 1
      %p338 = scmp.lt.s32.totalorder %s335, 9
      %s339 = scalar_select %p338, %s335, 9
      %s340 = smul.addr %s339, 2
      %s341 = smul.addr %s337, 20
      %s342 = sadd.s32 %s340, %s341
      %s343 = smul.addr %s342, 2
      %s344 = scalar_lea.vmem %s2, %s343
      %p345 = pneg %p114
      %p346 = pneg %p111
      %p347 = pneg %p135
      %p348 = pneg %p132
      %p349 = pneg %p156
      %p350 = pneg %p153
      %p351 = pneg %p184
      %p352 = pneg %p181
      %p353 = scmp.lt.s32.totalorder %s23, 1
      %s354 = scalar_select %p353, %s23, 1
      %p355 = scmp.lt.s32.totalorder %s24, 7
      %s356 = scalar_select %p355, %s24, 7
      %s357 = smul.addr %s354, 8
      %s358 = sadd.s32 %s356, %s357
      %s359 = smul.addr %s358, 4
      %s360 = scalar_lea.vmem %s5, %s359
      %p361 = pneg %p212
      %p362 = pneg %p209
      %p363 = scmp.lt.s32.totalorder %s23, 1
      %s364 = scalar_select %p363, %s23, 1
      %p365 = scmp.lt.s32.totalorder %s24, 7
      %s366 = scalar_select %p365, %s24, 7
      %s367 = smul.addr %s364, 8
      %s368 = sadd.s32 %s366, %s367
      %s369 = smul.addr %s368, 8
      %s370 = scalar_lea.vmem %s6, %s369
      %p371 = pneg %p240
      %p372 = pneg %p237
      %p373 = scmp.lt.s32.totalorder %s23, 1
      %s374 = scalar_select %p373, %s23, 1
      %p375 = scmp.lt.s32.totalorder %s24, 7
      %s376 = scalar_select %p375, %s24, 7
      %s377 = smul.addr %s374, 8
      %s378 = sadd.s32 %s376, %s377
      %s379 = smul.addr %s378, 8
      %s380 = scalar_lea.vmem %s7, %s379
      %p381 = scmp.lt.s32.totalorder %s23, 1
      %s382 = scalar_select %p381, %s23, 1
      %p383 = scmp.lt.s32.totalorder %s24, 9
      %s384 = scalar_select %p383, %s24, 9
      %s385 = smul.addr %s384, 2
      %s386 = smul.addr %s382, 20
      %s387 = sadd.s32 %s385, %s386
      %s388 = smul.addr %s387, 2
      %s389 = scalar_lea.vmem %s0, %s388
      %s390 = sadd.s32 %s24, 1
      %p391 = scmp.lt.s32.totalorder %s23, 1
      %s392 = scalar_select %p391, %s23, 1
      %p393 = scmp.lt.s32.totalorder %s390, 9
      %s394 = scalar_select %p393, %s390, 9
      %s395 = smul.addr %s394, 2
      %s396 = smul.addr %s392, 20
      %s397 = sadd.s32 %s395, %s396
      %s398 = smul.addr %s397, 2
      %s399 = scalar_lea.vmem %s1, %s398
      %s400 = sadd.s32 %s24, 1
      %s401 = sadd.s32 %s24, 2
      %p402 = scmp.lt.s32.totalorder %s23, 1
      %s403 = scalar_select %p402, %s23, 1
      %p404 = scmp.lt.s32.totalorder %s401, 9
      %s405 = scalar_select %p404, %s401, 9
      %s406 = smul.addr %s405, 2
      %s407 = smul.addr %s403, 20
      %s408 = sadd.s32 %s406, %s407
      %s409 = smul.addr %s408, 2
      %s410 = scalar_lea.vmem %s2, %s409
      %s411 = sadd.s32 %s24, 2
      %p412 = scmp.lt.s32.totalorder %s23, 1
      %s413 = scalar_select %p412, %s23, 1
      %p414 = scmp.lt.s32.totalorder %s24, 7
      %s415 = scalar_select %p414, %s24, 7
      %s416 = smul.addr %s413, 8
      %s417 = sadd.s32 %s415, %s416
      %s418 = smul.addr %s417, 4
      %s419 = scalar_lea.vmem %s5, %s418
      %p420 = scmp.lt.s32.totalorder %s23, 1
      %s421 = scalar_select %p420, %s23, 1
      %p422 = scmp.lt.s32.totalorder %s24, 7
      %s423 = scalar_select %p422, %s24, 7
      %s424 = smul.addr %s421, 8
      %s425 = sadd.s32 %s423, %s424
      %s426 = smul.addr %s425, 8
      %s427 = scalar_lea.vmem %s6, %s426
      %p428 = scmp.lt.s32.totalorder %s23, 1
      %s429 = scalar_select %p428, %s23, 1
      %p430 = scmp.lt.s32.totalorder %s24, 7
      %s431 = scalar_select %p430, %s24, 7
      %s432 = smul.addr %s429, 8
      %s433 = sadd.s32 %s431, %s432
      %s434 = smul.addr %s433, 8
      %s435 = scalar_lea.vmem %s7, %s434
      %v437 = vld [vmem:[%s389] sm:$0x3]
      %v438 = vld [vmem:[%s3] sm:$0xf]
      %v439 = vld [vmem:[%s389] sm:$0xf]
      %s440 = scalar_lea.vmem %s3, 4
      %v441 = vld [vmem:[%s440] sm:$0xf]
      %v444 = vunpack.c.l.s4 1983009808
      %v445 = vunpack.c.0.s8 %v444
      %v446 = vlaneseq
      %v447 = vshrl.u32 %v446, 7
      %v448 = vsub.s32 %v445, %v447
      %v449 = vrot.slane %v439, %v448
      %v450 = vcombine.high %v449, %v449
      %451 = vrot.lane.b32.xlu0 %v449, 127
      %v452 = vpop.permute.xlu0 %451
      %453 = vrot.lane.b32.xlu0 %v450, 127
      %v454 = vpop.permute.xlu0 %453
      %vm455 = vcmask 1039360
      %v456 = vsel %vm455, %v452, %v454
      %vm457 = vcmask 31744
      %v459 = vsel %vm457, %v441, 0
      %vm461 = vcmask 1041408
      %v463 = vsel %vm461, %v456, 0
      %465 = vmatprep.subr.bf16.mxu0 0
      %466 = vmatpush1.bf16.msra.mxu0 %v463
      %467 = vmatprep.subr.bf16.mxu0 0
      %468 = vmatpush1.bf16.msra.mxu0 0
      %469 = vmatprep.subr.bf16.mxu0 0
      %470 = vmatpush1.bf16.msra.mxu0 0
      %471 = vmatprep.subr.bf16.mxu0 0
      %472 = vmatpush1.bf16.msra.mxu0 0
      %473 = vmatprep.subr.bf16.mxu0 0
      %474 = vmatpush1.bf16.msra.mxu0 0
      %475 = vmatprep.subr.bf16.mxu0 0
      %476 = vmatpush1.bf16.msra.mxu0 0
      %477 = vmatprep.subr.bf16.mxu0 0
      %478 = vmatpush1.bf16.msra.mxu0 0
      %479 = vmatprep.subr.bf16.mxu0 0
      %480 = vmatpush1.bf16.msra.mxu0 0
      %481 = vmatprep.subr.bf16.mxu0 0
      %482 = vmatpush1.bf16.msra.mxu0 0
      %483 = vmatprep.subr.bf16.mxu0 0
      %484 = vmatpush1.bf16.msra.mxu0 0
      %485 = vmatprep.subr.bf16.mxu0 0
      %486 = vmatpush1.bf16.msra.mxu0 0
      %487 = vmatprep.subr.bf16.mxu0 0
      %488 = vmatpush1.bf16.msra.mxu0 0
      %489 = vmatprep.subr.bf16.mxu0 0
      %490 = vmatpush1.bf16.msra.mxu0 0
      %491 = vmatprep.subr.bf16.mxu0 0
      %492 = vmatpush1.bf16.msra.mxu0 0
      %493 = vmatprep.subr.bf16.mxu0 0
      %494 = vmatpush1.bf16.msra.mxu0 0
      %495 = vmatprep.subr.bf16.mxu0 0
      %496 = vmatpush1.bf16.msra.mxu0 0
      %497 = vmatprep.mubr.bf16.mxu0 0
      %498 = vmatmul.mubr.bf16.gmra.mrb[0].mxu0 %v459
      %v499 = vpop.f32.mrb[0].mxu0
      %v500 = vadd.f32 0.0, %v499
      %v501 = vpop.f32.mrb[0].mxu0
      %v502 = vpop.f32.mrb[0].mxu0
      %v503 = vpop.f32.mrb[0].mxu0
      %504 = vdwg.mxu0
      %v506 = vsel %vm457, %v438, 0
      %v509 = vsel %vm461, %v437, 0
      %511 = vmatprep.subr.bf16.mxu0 0
      %512 = vmatpush1.bf16.msra.mxu0 %v509
      %513 = vmatprep.subr.bf16.mxu0 0
      %514 = vmatpush1.bf16.msra.mxu0 0
      %515 = vmatprep.subr.bf16.mxu0 0
      %516 = vmatpush1.bf16.msra.mxu0 0
      %517 = vmatprep.subr.bf16.mxu0 0
      %518 = vmatpush1.bf16.msra.mxu0 0
      %519 = vmatprep.subr.bf16.mxu0 0
      %520 = vmatpush1.bf16.msra.mxu0 0
      %521 = vmatprep.subr.bf16.mxu0 0
      %522 = vmatpush1.bf16.msra.mxu0 0
      %523 = vmatprep.subr.bf16.mxu0 0
      %524 = vmatpush1.bf16.msra.mxu0 0
      %525 = vmatprep.subr.bf16.mxu0 0
      %526 = vmatpush1.bf16.msra.mxu0 0
      %527 = vmatprep.subr.bf16.mxu0 0
      %528 = vmatpush1.bf16.msra.mxu0 0
      %529 = vmatprep.subr.bf16.mxu0 0
      %530 = vmatpush1.bf16.msra.mxu0 0
      %531 = vmatprep.subr.bf16.mxu0 0
      %532 = vmatpush1.bf16.msra.mxu0 0
      %533 = vmatprep.subr.bf16.mxu0 0
      %534 = vmatpush1.bf16.msra.mxu0 0
      %535 = vmatprep.subr.bf16.mxu0 0
      %536 = vmatpush1.bf16.msra.mxu0 0
      %537 = vmatprep.subr.bf16.mxu0 0
      %538 = vmatpush1.bf16.msra.mxu0 0
      %539 = vmatprep.subr.bf16.mxu0 0
      %540 = vmatpush1.bf16.msra.mxu0 0
      %541 = vmatprep.subr.bf16.mxu0 0
      %542 = vmatpush1.bf16.msra.mxu0 0
      %543 = vmatprep.mubr.bf16.mxu0 0
      %544 = vmatmul.mubr.bf16.gmra.mrb[0].mxu0 %v506
      %v545 = vpop.f32.mrb[0].mxu0
      %v546 = vadd.f32 %v500, %v545
      %v547 = vpop.f32.mrb[0].mxu0
      %v548 = vpop.f32.mrb[0].mxu0
      %v549 = vpop.f32.mrb[0].mxu0
      %550 = vdwg.mxu0
      %v551 = vld [vmem:[%s389] sm:$0xf]
      %s552 = scalar_lea.vmem %s3, 8
      %v553 = vld [vmem:[%s552] sm:$0xf]
      %v556 = vunpack.c.l.s4 1983009808
      %v557 = vunpack.c.0.s8 %v556
      %v558 = vlaneseq
      %v559 = vshrl.u32 %v558, 7
      %v560 = vsub.s32 %v557, %v559
      %v561 = vrot.slane %v551, %v560
      %v562 = vcombine.high %v561, %v561
      %563 = vrot.lane.b32.xlu0 %v561, 126
      %v564 = vpop.permute.xlu0 %563
      %565 = vrot.lane.b32.xlu0 %v562, 126
      %v566 = vpop.permute.xlu0 %565
      %vm567 = vcmask 1031168
      %v568 = vsel %vm567, %v564, %v566
      %v570 = vsel %vm457, %v553, 0
      %v573 = vsel %vm461, %v568, 0
      %575 = vmatprep.subr.bf16.mxu0 0
      %576 = vmatpush1.bf16.msra.mxu0 %v573
      %577 = vmatprep.subr.bf16.mxu0 0
      %578 = vmatpush1.bf16.msra.mxu0 0
      %579 = vmatprep.subr.bf16.mxu0 0
      %580 = vmatpush1.bf16.msra.mxu0 0
      %581 = vmatprep.subr.bf16.mxu0 0
      %582 = vmatpush1.bf16.msra.mxu0 0
      %583 = vmatprep.subr.bf16.mxu0 0
      %584 = vmatpush1.bf16.msra.mxu0 0
      %585 = vmatprep.subr.bf16.mxu0 0
      %586 = vmatpush1.bf16.msra.mxu0 0
      %587 = vmatprep.subr.bf16.mxu0 0
      %588 = vmatpush1.bf16.msra.mxu0 0
      %589 = vmatprep.subr.bf16.mxu0 0
      %590 = vmatpush1.bf16.msra.mxu0 0
      %591 = vmatprep.subr.bf16.mxu0 0
      %592 = vmatpush1.bf16.msra.mxu0 0
      %593 = vmatprep.subr.bf16.mxu0 0
      %594 = vmatpush1.bf16.msra.mxu0 0
      %595 = vmatprep.subr.bf16.mxu0 0
      %596 = vmatpush1.bf16.msra.mxu0 0
      %597 = vmatprep.subr.bf16.mxu0 0
      %598 = vmatpush1.bf16.msra.mxu0 0
      %599 = vmatprep.subr.bf16.mxu0 0
      %600 = vmatpush1.bf16.msra.mxu0 0
      %601 = vmatprep.subr.bf16.mxu0 0
      %602 = vmatpush1.bf16.msra.mxu0 0
      %603 = vmatprep.subr.bf16.mxu0 0
      %604 = vmatpush1.bf16.msra.mxu0 0
      %605 = vmatprep.subr.bf16.mxu0 0
      %606 = vmatpush1.bf16.msra.mxu0 0
      %607 = vmatprep.mubr.bf16.mxu0 0
      %608 = vmatmul.mubr.bf16.gmra.mrb[0].mxu0 %v570
      %v609 = vpop.f32.mrb[0].mxu0
      %v610 = vadd.f32 0.0, %v609
      %v611 = vpop.f32.mrb[0].mxu0
      %v612 = vpop.f32.mrb[0].mxu0
      %v613 = vpop.f32.mrb[0].mxu0
      %614 = vdwg.mxu0
      %v615 = vadd.f32 %v546, %v610
      %v616 = vld [vmem:[%s389] sm:$0xf]
      %s617 = scalar_lea.vmem %s3, 12
      %v618 = vld [vmem:[%s617] sm:$0xf]
      %v621 = vunpack.c.l.s4 1983009808
      %v622 = vunpack.c.0.s8 %v621
      %v623 = vlaneseq
      %v624 = vshrl.u32 %v623, 7
      %v625 = vsub.s32 %v622, %v624
      %v626 = vrot.slane %v616, %v625
      %v627 = vcombine.high %v626, %v626
      %628 = vrot.lane.b32.xlu0 %v626, 118
      %v629 = vpop.permute.xlu0 %628
      %630 = vrot.lane.b32.xlu0 %v627, 118
      %v631 = vpop.permute.xlu0 %630
      %vm632 = vcmask 965632
      %v633 = vsel %vm632, %v629, %v631
      %v635 = vsel %vm457, %v618, 0
      %v638 = vsel %vm461, %v633, 0
      %640 = vmatprep.subr.bf16.mxu0 0
      %641 = vmatpush1.bf16.msra.mxu0 %v638
      %642 = vmatprep.subr.bf16.mxu0 0
      %643 = vmatpush1.bf16.msra.mxu0 0
      %644 = vmatprep.subr.bf16.mxu0 0
      %645 = vmatpush1.bf16.msra.mxu0 0
      %646 = vmatprep.subr.bf16.mxu0 0
      %647 = vmatpush1.bf16.msra.mxu0 0
      %648 = vmatprep.subr.bf16.mxu0 0
      %649 = vmatpush1.bf16.msra.mxu0 0
      %650 = vmatprep.subr.bf16.mxu0 0
      %651 = vmatpush1.bf16.msra.mxu0 0
      %652 = vmatprep.subr.bf16.mxu0 0
      %653 = vmatpush1.bf16.msra.mxu0 0
      %654 = vmatprep.subr.bf16.mxu0 0
      %655 = vmatpush1.bf16.msra.mxu0 0
      %656 = vmatprep.subr.bf16.mxu0 0
      %657 = vmatpush1.bf16.msra.mxu0 0
      %658 = vmatprep.subr.bf16.mxu0 0
      %659 = vmatpush1.bf16.msra.mxu0 0
      %660 = vmatprep.subr.bf16.mxu0 0
      %661 = vmatpush1.bf16.msra.mxu0 0
      %662 = vmatprep.subr.bf16.mxu0 0
      %663 = vmatpush1.bf16.msra.mxu0 0
      %664 = vmatprep.subr.bf16.mxu0 0
      %665 = vmatpush1.bf16.msra.mxu0 0
      %666 = vmatprep.subr.bf16.mxu0 0
      %667 = vmatpush1.bf16.msra.mxu0 0
      %668 = vmatprep.subr.bf16.mxu0 0
      %669 = vmatpush1.bf16.msra.mxu0 0
      %670 = vmatprep.subr.bf16.mxu0 0
      %671 = vmatpush1.bf16.msra.mxu0 0
      %672 = vmatprep.mubr.bf16.mxu0 0
      %673 = vmatmul.mubr.bf16.gmra.mrb[0].mxu0 %v635
      %v674 = vpop.f32.mrb[0].mxu0
      %v675 = vadd.f32 0.0, %v674
      %v676 = vpop.f32.mrb[0].mxu0
      %v677 = vpop.f32.mrb[0].mxu0
      %v678 = vpop.f32.mrb[0].mxu0
      %679 = vdwg.mxu0
      %v680 = vadd.f32 %v615, %v675
      %v681 = vld [vmem:[%s389] sm:$0xf]
      %s682 = scalar_lea.vmem %s3, 16
      %v683 = vld [vmem:[%s682] sm:$0xf]
      %v686 = vunpack.c.l.s4 1983009808
      %v687 = vunpack.c.0.s8 %v686
      %v688 = vlaneseq
      %v689 = vshrl.u32 %v688, 7
      %v690 = vsub.s32 %v687, %v689
      %v691 = vrot.slane %v681, %v690
      %v692 = vcombine.high %v691, %v691
      %693 = vrot.lane.b32.xlu0 %v691, 117
      %v694 = vpop.permute.xlu0 %693
      %695 = vrot.lane.b32.xlu0 %v692, 117
      %v696 = vpop.permute.xlu0 %695
      %vm697 = vcmask 957440
      %v698 = vsel %vm697, %v694, %v696
      %v700 = vsel %vm457, %v683, 0
      %v703 = vsel %vm461, %v698, 0
      %705 = vmatprep.subr.bf16.mxu0 0
      %706 = vmatpush1.bf16.msra.mxu0 %v703
      %707 = vmatprep.subr.bf16.mxu0 0
      %708 = vmatpush1.bf16.msra.mxu0 0
      %709 = vmatprep.subr.bf16.mxu0 0
      %710 = vmatpush1.bf16.msra.mxu0 0
      %711 = vmatprep.subr.bf16.mxu0 0
      %712 = vmatpush1.bf16.msra.mxu0 0
      %713 = vmatprep.subr.bf16.mxu0 0
      %714 = vmatpush1.bf16.msra.mxu0 0
      %715 = vmatprep.subr.bf16.mxu0 0
      %716 = vmatpush1.bf16.msra.mxu0 0
      %717 = vmatprep.subr.bf16.mxu0 0
      %718 = vmatpush1.bf16.msra.mxu0 0
      %719 = vmatprep.subr.bf16.mxu0 0
      %720 = vmatpush1.bf16.msra.mxu0 0
      %721 = vmatprep.subr.bf16.mxu0 0
      %722 = vmatpush1.bf16.msra.mxu0 0
      %723 = vmatprep.subr.bf16.mxu0 0
      %724 = vmatpush1.bf16.msra.mxu0 0
      %725 = vmatprep.subr.bf16.mxu0 0
      %726 = vmatpush1.bf16.msra.mxu0 0
      %727 = vmatprep.subr.bf16.mxu0 0
      %728 = vmatpush1.bf16.msra.mxu0 0
      %729 = vmatprep.subr.bf16.mxu0 0
      %730 = vmatpush1.bf16.msra.mxu0 0
      %731 = vmatprep.subr.bf16.mxu0 0
      %732 = vmatpush1.bf16.msra.mxu0 0
      %733 = vmatprep.subr.bf16.mxu0 0
      %734 = vmatpush1.bf16.msra.mxu0 0
      %735 = vmatprep.subr.bf16.mxu0 0
      %736 = vmatpush1.bf16.msra.mxu0 0
      %737 = vmatprep.mubr.bf16.mxu0 0
      %738 = vmatmul.mubr.bf16.gmra.mrb[0].mxu0 %v700
      %v739 = vpop.f32.mrb[0].mxu0
      %v740 = vadd.f32 0.0, %v739
      %v741 = vpop.f32.mrb[0].mxu0
      %v742 = vpop.f32.mrb[0].mxu0
      %v743 = vpop.f32.mrb[0].mxu0
      %744 = vdwg.mxu0
      %v745 = vadd.f32 %v680, %v740
      %v746 = vld [vmem:[%s389] sm:$0xf]
      %s747 = scalar_lea.vmem %s3, 20
      %v748 = vld [vmem:[%s747] sm:$0xf]
      %v751 = vunpack.c.l.s4 1983009808
      %v752 = vunpack.c.0.s8 %v751
      %v753 = vlaneseq
      %v754 = vshrl.u32 %v753, 7
      %v755 = vsub.s32 %v752, %v754
      %v756 = vrot.slane %v746, %v755
      %v757 = vcombine.high %v756, %v756
      %758 = vrot.lane.b32.xlu0 %v756, 116
      %v759 = vpop.permute.xlu0 %758
      %760 = vrot.lane.b32.xlu0 %v757, 116
      %v761 = vpop.permute.xlu0 %760
      %vm762 = vcmask 949248
      %v763 = vsel %vm762, %v759, %v761
      %v765 = vsel %vm457, %v748, 0
      %v768 = vsel %vm461, %v763, 0
      %770 = vmatprep.subr.bf16.mxu0 0
      %771 = vmatpush1.bf16.msra.mxu0 %v768
      %772 = vmatprep.subr.bf16.mxu0 0
      %773 = vmatpush1.bf16.msra.mxu0 0
      %774 = vmatprep.subr.bf16.mxu0 0
      %775 = vmatpush1.bf16.msra.mxu0 0
      %776 = vmatprep.subr.bf16.mxu0 0
      %777 = vmatpush1.bf16.msra.mxu0 0
      %778 = vmatprep.subr.bf16.mxu0 0
      %779 = vmatpush1.bf16.msra.mxu0 0
      %780 = vmatprep.subr.bf16.mxu0 0
      %781 = vmatpush1.bf16.msra.mxu0 0
      %782 = vmatprep.subr.bf16.mxu0 0
      %783 = vmatpush1.bf16.msra.mxu0 0
      %784 = vmatprep.subr.bf16.mxu0 0
      %785 = vmatpush1.bf16.msra.mxu0 0
      %786 = vmatprep.subr.bf16.mxu0 0
      %787 = vmatpush1.bf16.msra.mxu0 0
      %788 = vmatprep.subr.bf16.mxu0 0
      %789 = vmatpush1.bf16.msra.mxu0 0
      %790 = vmatprep.subr.bf16.mxu0 0
      %791 = vmatpush1.bf16.msra.mxu0 0
      %792 = vmatprep.subr.bf16.mxu0 0
      %793 = vmatpush1.bf16.msra.mxu0 0
      %794 = vmatprep.subr.bf16.mxu0 0
      %795 = vmatpush1.bf16.msra.mxu0 0
      %796 = vmatprep.subr.bf16.mxu0 0
      %797 = vmatpush1.bf16.msra.mxu0 0
      %798 = vmatprep.subr.bf16.mxu0 0
      %799 = vmatpush1.bf16.msra.mxu0 0
      %800 = vmatprep.subr.bf16.mxu0 0
      %801 = vmatpush1.bf16.msra.mxu0 0
      %802 = vmatprep.mubr.bf16.mxu0 0
      %803 = vmatmul.mubr.bf16.gmra.mrb[0].mxu0 %v765
      %v804 = vpop.f32.mrb[0].mxu0
      %v805 = vadd.f32 0.0, %v804
      %v806 = vpop.f32.mrb[0].mxu0
      %v807 = vpop.f32.mrb[0].mxu0
      %v808 = vpop.f32.mrb[0].mxu0
      %809 = vdwg.mxu0
      %v810 = vadd.f32 %v745, %v805
      %v811 = vld [vmem:[%s389] sm:$0xf]
      %s812 = scalar_lea.vmem %s3, 24
      %v813 = vld [vmem:[%s812] sm:$0xf]
      %v816 = vunpack.c.l.s4 1983009808
      %v817 = vunpack.c.0.s8 %v816
      %v818 = vlaneseq
      %v819 = vshrl.u32 %v818, 7
      %v820 = vsub.s32 %v817, %v819
      %v821 = vrot.slane %v811, %v820
      %v822 = vcombine.high %v821, %v821
      %823 = vrot.lane.b32.xlu0 %v821, 108
      %v824 = vpop.permute.xlu0 %823
      %825 = vrot.lane.b32.xlu0 %v822, 108
      %v826 = vpop.permute.xlu0 %825
      %vm827 = vcmask 883712
      %v828 = vsel %vm827, %v824, %v826
      %v830 = vsel %vm457, %v813, 0
      %v833 = vsel %vm461, %v828, 0
      %835 = vmatprep.subr.bf16.mxu0 0
      %836 = vmatpush1.bf16.msra.mxu0 %v833
      %837 = vmatprep.subr.bf16.mxu0 0
      %838 = vmatpush1.bf16.msra.mxu0 0
      %839 = vmatprep.subr.bf16.mxu0 0
      %840 = vmatpush1.bf16.msra.mxu0 0
      %841 = vmatprep.subr.bf16.mxu0 0
      %842 = vmatpush1.bf16.msra.mxu0 0
      %843 = vmatprep.subr.bf16.mxu0 0
      %844 = vmatpush1.bf16.msra.mxu0 0
      %845 = vmatprep.subr.bf16.mxu0 0
      %846 = vmatpush1.bf16.msra.mxu0 0
      %847 = vmatprep.subr.bf16.mxu0 0
      %848 = vmatpush1.bf16.msra.mxu0 0
      %849 = vmatprep.subr.bf16.mxu0 0
      %850 = vmatpush1.bf16.msra.mxu0 0
      %851 = vmatprep.subr.bf16.mxu0 0
      %852 = vmatpush1.bf16.msra.mxu0 0
      %853 = vmatprep.subr.bf16.mxu0 0
      %854 = vmatpush1.bf16.msra.mxu0 0
      %855 = vmatprep.subr.bf16.mxu0 0
      %856 = vmatpush1.bf16.msra.mxu0 0
      %857 = vmatprep.subr.bf16.mxu0 0
      %858 = vmatpush1.bf16.msra.mxu0 0
      %859 = vmatprep.subr.bf16.mxu0 0
      %860 = vmatpush1.bf16.msra.mxu0 0
      %861 = vmatprep.subr.bf16.mxu0 0
      %862 = vmatpush1.bf16.msra.mxu0 0
      %863 = vmatprep.subr.bf16.mxu0 0
      %864 = vmatpush1.bf16.msra.mxu0 0
      %865 = vmatprep.subr.bf16.mxu0 0
      %866 = vmatpush1.bf16.msra.mxu0 0
      %867 = vmatprep.mubr.bf16.mxu0 0
      %868 = vmatmul.mubr.bf16.gmra.mrb[0].mxu0 %v830
      %v869 = vpop.f32.mrb[0].mxu0
      %v870 = vadd.f32 0.0, %v869
      %v871 = vpop.f32.mrb[0].mxu0
      %v872 = vpop.f32.mrb[0].mxu0
      %v873 = vpop.f32.mrb[0].mxu0
      %874 = vdwg.mxu0
      %v875 = vadd.f32 %v810, %v870
      %v876 = vld [vmem:[%s389] sm:$0xf]
      %s877 = scalar_lea.vmem %s3, 28
      %v878 = vld [vmem:[%s877] sm:$0xf]
      %v881 = vunpack.c.l.s4 1983009808
      %v882 = vunpack.c.0.s8 %v881
      %v883 = vlaneseq
      %v884 = vshrl.u32 %v883, 7
      %v885 = vsub.s32 %v882, %v884
      %v886 = vrot.slane %v876, %v885
      %v887 = vcombine.high %v886, %v886
      %888 = vrot.lane.b32.xlu0 %v886, 107
      %v889 = vpop.permute.xlu0 %888
      %890 = vrot.lane.b32.xlu0 %v887, 107
      %v891 = vpop.permute.xlu0 %890
      %vm892 = vcmask 875520
      %v893 = vsel %vm892, %v889, %v891
      %v895 = vsel %vm457, %v878, 0
      %v898 = vsel %vm461, %v893, 0
      %900 = vmatprep.subr.bf16.mxu0 0
      %901 = vmatpush1.bf16.msra.mxu0 %v898
      %902 = vmatprep.subr.bf16.mxu0 0
      %903 = vmatpush1.bf16.msra.mxu0 0
      %904 = vmatprep.subr.bf16.mxu0 0
      %905 = vmatpush1.bf16.msra.mxu0 0
      %906 = vmatprep.subr.bf16.mxu0 0
      %907 = vmatpush1.bf16.msra.mxu0 0
      %908 = vmatprep.subr.bf16.mxu0 0
      %909 = vmatpush1.bf16.msra.mxu0 0
      %910 = vmatprep.subr.bf16.mxu0 0
      %911 = vmatpush1.bf16.msra.mxu0 0
      %912 = vmatprep.subr.bf16.mxu0 0
      %913 = vmatpush1.bf16.msra.mxu0 0
      %914 = vmatprep.subr.bf16.mxu0 0
      %915 = vmatpush1.bf16.msra.mxu0 0
      %916 = vmatprep.subr.bf16.mxu0 0
      %917 = vmatpush1.bf16.msra.mxu0 0
      %918 = vmatprep.subr.bf16.mxu0 0
      %919 = vmatpush1.bf16.msra.mxu0 0
      %920 = vmatprep.subr.bf16.mxu0 0
      %921 = vmatpush1.bf16.msra.mxu0 0
      %922 = vmatprep.subr.bf16.mxu0 0
      %923 = vmatpush1.bf16.msra.mxu0 0
      %924 = vmatprep.subr.bf16.mxu0 0
      %925 = vmatpush1.bf16.msra.mxu0 0
      %926 = vmatprep.subr.bf16.mxu0 0
      %927 = vmatpush1.bf16.msra.mxu0 0
      %928 = vmatprep.subr.bf16.mxu0 0
      %929 = vmatpush1.bf16.msra.mxu0 0
      %930 = vmatprep.subr.bf16.mxu0 0
      %931 = vmatpush1.bf16.msra.mxu0 0
      %932 = vmatprep.mubr.bf16.mxu0 0
      %933 = vmatmul.mubr.bf16.gmra.mrb[0].mxu0 %v895
      %v934 = vpop.f32.mrb[0].mxu0
      %v935 = vadd.f32 0.0, %v934
      %v936 = vpop.f32.mrb[0].mxu0
      %v937 = vpop.f32.mrb[0].mxu0
      %v938 = vpop.f32.mrb[0].mxu0
      %939 = vdwg.mxu0
      %v940 = vadd.f32 %v875, %v935
      %v941 = vld [vmem:[%s389] sm:$0xf]
      %s942 = scalar_lea.vmem %s3, 32
      %v943 = vld [vmem:[%s942] sm:$0xf]
      %v946 = vunpack.c.l.s4 1983009808
      %v947 = vunpack.c.0.s8 %v946
      %v948 = vlaneseq
      %v949 = vshrl.u32 %v948, 7
      %v950 = vsub.s32 %v947, %v949
      %v951 = vrot.slane %v941, %v950
      %v952 = vcombine.high %v951, %v951
      %953 = vrot.lane.b32.xlu0 %v951, 106
      %v954 = vpop.permute.xlu0 %953
      %955 = vrot.lane.b32.xlu0 %v952, 106
      %v956 = vpop.permute.xlu0 %955
      %vm957 = vcmask 867328
      %v958 = vsel %vm957, %v954, %v956
      %v960 = vsel %vm457, %v943, 0
      %v963 = vsel %vm461, %v958, 0
      %965 = vmatprep.subr.bf16.mxu0 0
      %966 = vmatpush1.bf16.msra.mxu0 %v963
      %967 = vmatprep.subr.bf16.mxu0 0
      %968 = vmatpush1.bf16.msra.mxu0 0
      %969 = vmatprep.subr.bf16.mxu0 0
      %970 = vmatpush1.bf16.msra.mxu0 0
      %971 = vmatprep.subr.bf16.mxu0 0
      %972 = vmatpush1.bf16.msra.mxu0 0
      %973 = vmatprep.subr.bf16.mxu0 0
      %974 = vmatpush1.bf16.msra.mxu0 0
      %975 = vmatprep.subr.bf16.mxu0 0
      %976 = vmatpush1.bf16.msra.mxu0 0
      %977 = vmatprep.subr.bf16.mxu0 0
      %978 = vmatpush1.bf16.msra.mxu0 0
      %979 = vmatprep.subr.bf16.mxu0 0
      %980 = vmatpush1.bf16.msra.mxu0 0
      %981 = vmatprep.subr.bf16.mxu0 0
      %982 = vmatpush1.bf16.msra.mxu0 0
      %983 = vmatprep.subr.bf16.mxu0 0
      %984 = vmatpush1.bf16.msra.mxu0 0
      %985 = vmatprep.subr.bf16.mxu0 0
      %986 = vmatpush1.bf16.msra.mxu0 0
      %987 = vmatprep.subr.bf16.mxu0 0
      %988 = vmatpush1.bf16.msra.mxu0 0
      %989 = vmatprep.subr.bf16.mxu0 0
      %990 = vmatpush1.bf16.msra.mxu0 0
      %991 = vmatprep.subr.bf16.mxu0 0
      %992 = vmatpush1.bf16.msra.mxu0 0
      %993 = vmatprep.subr.bf16.mxu0 0
      %994 = vmatpush1.bf16.msra.mxu0 0
      %995 = vmatprep.subr.bf16.mxu0 0
      %996 = vmatpush1.bf16.msra.mxu0 0
      %997 = vmatprep.mubr.bf16.mxu0 0
      %998 = vmatmul.mubr.bf16.gmra.mrb[0].mxu0 %v960
      %v999 = vpop.f32.mrb[0].mxu0
      %v1000 = vadd.f32 0.0, %v999
      %v1001 = vpop.f32.mrb[0].mxu0
      %v1002 = vpop.f32.mrb[0].mxu0
      %v1003 = vpop.f32.mrb[0].mxu0
      %1004 = vdwg.mxu0
      %v1005 = vadd.f32 %v940, %v1000
      %v1006 = vld [vmem:[%s399] sm:$0x3]
      %s1007 = scalar_lea.vmem %s3, 36
      %v1008 = vld [vmem:[%s1007] sm:$0xf]
      %v1010 = vsel %vm457, %v1008, 0
      %v1013 = vsel %vm461, %v1006, 0
      %1015 = vmatprep.subr.bf16.mxu0 0
      %1016 = vmatpush1.bf16.msra.mxu0 %v1013
      %1017 = vmatprep.subr.bf16.mxu0 0
      %1018 = vmatpush1.bf16.msra.mxu0 0
      %1019 = vmatprep.subr.bf16.mxu0 0
      %1020 = vmatpush1.bf16.msra.mxu0 0
      %1021 = vmatprep.subr.bf16.mxu0 0
      %1022 = vmatpush1.bf16.msra.mxu0 0
      %1023 = vmatprep.subr.bf16.mxu0 0
      %1024 = vmatpush1.bf16.msra.mxu0 0
      %1025 = vmatprep.subr.bf16.mxu0 0
      %1026 = vmatpush1.bf16.msra.mxu0 0
      %1027 = vmatprep.subr.bf16.mxu0 0
      %1028 = vmatpush1.bf16.msra.mxu0 0
      %1029 = vmatprep.subr.bf16.mxu0 0
      %1030 = vmatpush1.bf16.msra.mxu0 0
      %1031 = vmatprep.subr.bf16.mxu0 0
      %1032 = vmatpush1.bf16.msra.mxu0 0
      %1033 = vmatprep.subr.bf16.mxu0 0
      %1034 = vmatpush1.bf16.msra.mxu0 0
      %1035 = vmatprep.subr.bf16.mxu0 0
      %1036 = vmatpush1.bf16.msra.mxu0 0
      %1037 = vmatprep.subr.bf16.mxu0 0
      %1038 = vmatpush1.bf16.msra.mxu0 0
      %1039 = vmatprep.subr.bf16.mxu0 0
      %1040 = vmatpush1.bf16.msra.mxu0 0
      %1041 = vmatprep.subr.bf16.mxu0 0
      %1042 = vmatpush1.bf16.msra.mxu0 0
      %1043 = vmatprep.subr.bf16.mxu0 0
      %1044 = vmatpush1.bf16.msra.mxu0 0
      %1045 = vmatprep.subr.bf16.mxu0 0
      %1046 = vmatpush1.bf16.msra.mxu0 0
      %1047 = vmatprep.mubr.bf16.mxu0 0
      %1048 = vmatmul.mubr.bf16.gmra.mrb[0].mxu0 %v1010
      %v1049 = vpop.f32.mrb[0].mxu0
      %v1050 = vadd.f32 0.0, %v1049
      %v1051 = vpop.f32.mrb[0].mxu0
      %v1052 = vpop.f32.mrb[0].mxu0
      %v1053 = vpop.f32.mrb[0].mxu0
      %1054 = vdwg.mxu0
      %v1055 = vadd.f32 %v1005, %v1050
      %v1056 = vld [vmem:[%s399] sm:$0xf]
      %s1057 = scalar_lea.vmem %s3, 40
      %v1058 = vld [vmem:[%s1057] sm:$0xf]
      %v1061 = vunpack.c.l.s4 1983009808
      %v1062 = vunpack.c.0.s8 %v1061
      %v1063 = vlaneseq
      %v1064 = vshrl.u32 %v1063, 7
      %v1065 = vsub.s32 %v1062, %v1064
      %v1066 = vrot.slane %v1056, %v1065
      %v1067 = vcombine.high %v1066, %v1066
      %1068 = vrot.lane.b32.xlu0 %v1066, 127
      %v1069 = vpop.permute.xlu0 %1068
      %1070 = vrot.lane.b32.xlu0 %v1067, 127
      %v1071 = vpop.permute.xlu0 %1070
      %v1072 = vsel %vm455, %v1069, %v1071
      %v1074 = vsel %vm457, %v1058, 0
      %v1077 = vsel %vm461, %v1072, 0
      %1079 = vmatprep.subr.bf16.mxu0 0
      %1080 = vmatpush1.bf16.msra.mxu0 %v1077
      %1081 = vmatprep.subr.bf16.mxu0 0
      %1082 = vmatpush1.bf16.msra.mxu0 0
      %1083 = vmatprep.subr.bf16.mxu0 0
      %1084 = vmatpush1.bf16.msra.mxu0 0
      %1085 = vmatprep.subr.bf16.mxu0 0
      %1086 = vmatpush1.bf16.msra.mxu0 0
      %1087 = vmatprep.subr.bf16.mxu0 0
      %1088 = vmatpush1.bf16.msra.mxu0 0
      %1089 = vmatprep.subr.bf16.mxu0 0
      %1090 = vmatpush1.bf16.msra.mxu0 0
      %1091 = vmatprep.subr.bf16.mxu0 0
      %1092 = vmatpush1.bf16.msra.mxu0 0
      %1093 = vmatprep.subr.bf16.mxu0 0
      %1094 = vmatpush1.bf16.msra.mxu0 0
      %1095 = vmatprep.subr.bf16.mxu0 0
      %1096 = vmatpush1.bf16.msra.mxu0 0
      %1097 = vmatprep.subr.bf16.mxu0 0
      %1098 = vmatpush1.bf16.msra.mxu0 0
      %1099 = vmatprep.subr.bf16.mxu0 0
      %1100 = vmatpush1.bf16.msra.mxu0 0
      %1101 = vmatprep.subr.bf16.mxu0 0
      %1102 = vmatpush1.bf16.msra.mxu0 0
      %1103 = vmatprep.subr.bf16.mxu0 0
      %1104 = vmatpush1.bf16.msra.mxu0 0
      %1105 = vmatprep.subr.bf16.mxu0 0
      %1106 = vmatpush1.bf16.msra.mxu0 0
      %1107 = vmatprep.subr.bf16.mxu0 0
      %1108 = vmatpush1.bf16.msra.mxu0 0
      %1109 = vmatprep.subr.bf16.mxu0 0
      %1110 = vmatpush1.bf16.msra.mxu0 0
      %1111 = vmatprep.mubr.bf16.mxu0 0
      %1112 = vmatmul.mubr.bf16.gmra.mrb[0].mxu0 %v1074
      %v1113 = vpop.f32.mrb[0].mxu0
      %v1114 = vadd.f32 0.0, %v1113
      %v1115 = vpop.f32.mrb[0].mxu0
      %v1116 = vpop.f32.mrb[0].mxu0
      %v1117 = vpop.f32.mrb[0].mxu0
      %1118 = vdwg.mxu0
      %v1119 = vadd.f32 %v1055, %v1114
      %v1120 = vld [vmem:[%s399] sm:$0xf]
      %s1121 = scalar_lea.vmem %s3, 44
      %v1122 = vld [vmem:[%s1121] sm:$0xf]
      %v1125 = vunpack.c.l.s4 1983009808
      %v1126 = vunpack.c.0.s8 %v1125
      %v1127 = vlaneseq
      %v1128 = vshrl.u32 %v1127, 7
      %v1129 = vsub.s32 %v1126, %v1128
      %v1130 = vrot.slane %v1120, %v1129
      %v1131 = vcombine.high %v1130, %v1130
      %1132 = vrot.lane.b32.xlu0 %v1130, 126
      %v1133 = vpop.permute.xlu0 %1132
      %1134 = vrot.lane.b32.xlu0 %v1131, 126
      %v1135 = vpop.permute.xlu0 %1134
      %v1136 = vsel %vm567, %v1133, %v1135
      %v1138 = vsel %vm457, %v1122, 0
      %v1141 = vsel %vm461, %v1136, 0
      %1143 = vmatprep.subr.bf16.mxu0 0
      %1144 = vmatpush1.bf16.msra.mxu0 %v1141
      %1145 = vmatprep.subr.bf16.mxu0 0
      %1146 = vmatpush1.bf16.msra.mxu0 0
      %1147 = vmatprep.subr.bf16.mxu0 0
      %1148 = vmatpush1.bf16.msra.mxu0 0
      %1149 = vmatprep.subr.bf16.mxu0 0
      %1150 = vmatpush1.bf16.msra.mxu0 0
      %1151 = vmatprep.subr.bf16.mxu0 0
      %1152 = vmatpush1.bf16.msra.mxu0 0
      %1153 = vmatprep.subr.bf16.mxu0 0
      %1154 = vmatpush1.bf16.msra.mxu0 0
      %1155 = vmatprep.subr.bf16.mxu0 0
      %1156 = vmatpush1.bf16.msra.mxu0 0
      %1157 = vmatprep.subr.bf16.mxu0 0
      %1158 = vmatpush1.bf16.msra.mxu0 0
      %1159 = vmatprep.subr.bf16.mxu0 0
      %1160 = vmatpush1.bf16.msra.mxu0 0
      %1161 = vmatprep.subr.bf16.mxu0 0
      %1162 = vmatpush1.bf16.msra.mxu0 0
      %1163 = vmatprep.subr.bf16.mxu0 0
      %1164 = vmatpush1.bf16.msra.mxu0 0
      %1165 = vmatprep.subr.bf16.mxu0 0
      %1166 = vmatpush1.bf16.msra.mxu0 0
      %1167 = vmatprep.subr.bf16.mxu0 0
      %1168 = vmatpush1.bf16.msra.mxu0 0
      %1169 = vmatprep.subr.bf16.mxu0 0
      %1170 = vmatpush1.bf16.msra.mxu0 0
      %1171 = vmatprep.subr.bf16.mxu0 0
      %1172 = vmatpush1.bf16.msra.mxu0 0
      %1173 = vmatprep.subr.bf16.mxu0 0
      %1174 = vmatpush1.bf16.msra.mxu0 0
      %1175 = vmatprep.mubr.bf16.mxu0 0
      %1176 = vmatmul.mubr.bf16.gmra.mrb[0].mxu0 %v1138
      %v1177 = vpop.f32.mrb[0].mxu0
      %v1178 = vadd.f32 0.0, %v1177
      %v1179 = vpop.f32.mrb[0].mxu0
      %v1180 = vpop.f32.mrb[0].mxu0
      %v1181 = vpop.f32.mrb[0].mxu0
      %1182 = vdwg.mxu0
      %v1183 = vadd.f32 %v1119, %v1178
      %v1184 = vld [vmem:[%s399] sm:$0xf]
      %s1185 = scalar_lea.vmem %s3, 48
      %v1186 = vld [vmem:[%s1185] sm:$0xf]
      %v1189 = vunpack.c.l.s4 1983009808
      %v1190 = vunpack.c.0.s8 %v1189
      %v1191 = vlaneseq
      %v1192 = vshrl.u32 %v1191, 7
      %v1193 = vsub.s32 %v1190, %v1192
      %v1194 = vrot.slane %v1184, %v1193
      %v1195 = vcombine.high %v1194, %v1194
      %1196 = vrot.lane.b32.xlu0 %v1194, 118
      %v1197 = vpop.permute.xlu0 %1196
      %1198 = vrot.lane.b32.xlu0 %v1195, 118
      %v1199 = vpop.permute.xlu0 %1198
      %v1200 = vsel %vm632, %v1197, %v1199
      %v1202 = vsel %vm457, %v1186, 0
      %v1205 = vsel %vm461, %v1200, 0
      %1207 = vmatprep.subr.bf16.mxu0 0
      %1208 = vmatpush1.bf16.msra.mxu0 %v1205
      %1209 = vmatprep.subr.bf16.mxu0 0
      %1210 = vmatpush1.bf16.msra.mxu0 0
      %1211 = vmatprep.subr.bf16.mxu0 0
      %1212 = vmatpush1.bf16.msra.mxu0 0
      %1213 = vmatprep.subr.bf16.mxu0 0
      %1214 = vmatpush1.bf16.msra.mxu0 0
      %1215 = vmatprep.subr.bf16.mxu0 0
      %1216 = vmatpush1.bf16.msra.mxu0 0
      %1217 = vmatprep.subr.bf16.mxu0 0
      %1218 = vmatpush1.bf16.msra.mxu0 0
      %1219 = vmatprep.subr.bf16.mxu0 0
      %1220 = vmatpush1.bf16.msra.mxu0 0
      %1221 = vmatprep.subr.bf16.mxu0 0
      %1222 = vmatpush1.bf16.msra.mxu0 0
      %1223 = vmatprep.subr.bf16.mxu0 0
      %1224 = vmatpush1.bf16.msra.mxu0 0
      %1225 = vmatprep.subr.bf16.mxu0 0
      %1226 = vmatpush1.bf16.msra.mxu0 0
      %1227 = vmatprep.subr.bf16.mxu0 0
      %1228 = vmatpush1.bf16.msra.mxu0 0
      %1229 = vmatprep.subr.bf16.mxu0 0
      %1230 = vmatpush1.bf16.msra.mxu0 0
      %1231 = vmatprep.subr.bf16.mxu0 0
      %1232 = vmatpush1.bf16.msra.mxu0 0
      %1233 = vmatprep.subr.bf16.mxu0 0
      %1234 = vmatpush1.bf16.msra.mxu0 0
      %1235 = vmatprep.subr.bf16.mxu0 0
      %1236 = vmatpush1.bf16.msra.mxu0 0
      %1237 = vmatprep.subr.bf16.mxu0 0
      %1238 = vmatpush1.bf16.msra.mxu0 0
      %1239 = vmatprep.mubr.bf16.mxu0 0
      %1240 = vmatmul.mubr.bf16.gmra.mrb[0].mxu0 %v1202
      %v1241 = vpop.f32.mrb[0].mxu0
      %v1242 = vadd.f32 0.0, %v1241
      %v1243 = vpop.f32.mrb[0].mxu0
      %v1244 = vpop.f32.mrb[0].mxu0
      %v1245 = vpop.f32.mrb[0].mxu0
      %1246 = vdwg.mxu0
      %v1247 = vadd.f32 %v1183, %v1242
      %v1248 = vld [vmem:[%s399] sm:$0xf]
      %s1249 = scalar_lea.vmem %s3, 52
      %v1250 = vld [vmem:[%s1249] sm:$0xf]
      %v1253 = vunpack.c.l.s4 1983009808
      %v1254 = vunpack.c.0.s8 %v1253
      %v1255 = vlaneseq
      %v1256 = vshrl.u32 %v1255, 7
      %v1257 = vsub.s32 %v1254, %v1256
      %v1258 = vrot.slane %v1248, %v1257
      %v1259 = vcombine.high %v1258, %v1258
      %1260 = vrot.lane.b32.xlu0 %v1258, 117
      %v1261 = vpop.permute.xlu0 %1260
      %1262 = vrot.lane.b32.xlu0 %v1259, 117
      %v1263 = vpop.permute.xlu0 %1262
      %v1264 = vsel %vm697, %v1261, %v1263
      %v1266 = vsel %vm457, %v1250, 0
      %v1269 = vsel %vm461, %v1264, 0
      %1271 = vmatprep.subr.bf16.mxu0 0
      %1272 = vmatpush1.bf16.msra.mxu0 %v1269
      %1273 = vmatprep.subr.bf16.mxu0 0
      %1274 = vmatpush1.bf16.msra.mxu0 0
      %1275 = vmatprep.subr.bf16.mxu0 0
      %1276 = vmatpush1.bf16.msra.mxu0 0
      %1277 = vmatprep.subr.bf16.mxu0 0
      %1278 = vmatpush1.bf16.msra.mxu0 0
      %1279 = vmatprep.subr.bf16.mxu0 0
      %1280 = vmatpush1.bf16.msra.mxu0 0
      %1281 = vmatprep.subr.bf16.mxu0 0
      %1282 = vmatpush1.bf16.msra.mxu0 0
      %1283 = vmatprep.subr.bf16.mxu0 0
      %1284 = vmatpush1.bf16.msra.mxu0 0
      %1285 = vmatprep.subr.bf16.mxu0 0
      %1286 = vmatpush1.bf16.msra.mxu0 0
      %1287 = vmatprep.subr.bf16.mxu0 0
      %1288 = vmatpush1.bf16.msra.mxu0 0
      %1289 = vmatprep.subr.bf16.mxu0 0
      %1290 = vmatpush1.bf16.msra.mxu0 0
      %1291 = vmatprep.subr.bf16.mxu0 0
      %1292 = vmatpush1.bf16.msra.mxu0 0
      %1293 = vmatprep.subr.bf16.mxu0 0
      %1294 = vmatpush1.bf16.msra.mxu0 0
      %1295 = vmatprep.subr.bf16.mxu0 0
      %1296 = vmatpush1.bf16.msra.mxu0 0
      %1297 = vmatprep.subr.bf16.mxu0 0
      %1298 = vmatpush1.bf16.msra.mxu0 0
      %1299 = vmatprep.subr.bf16.mxu0 0
      %1300 = vmatpush1.bf16.msra.mxu0 0
      %1301 = vmatprep.subr.bf16.mxu0 0
      %1302 = vmatpush1.bf16.msra.mxu0 0
      %1303 = vmatprep.mubr.bf16.mxu0 0
      %1304 = vmatmul.mubr.bf16.gmra.mrb[0].mxu0 %v1266
      %v1305 = vpop.f32.mrb[0].mxu0
      %v1306 = vadd.f32 0.0, %v1305
      %v1307 = vpop.f32.mrb[0].mxu0
      %v1308 = vpop.f32.mrb[0].mxu0
      %v1309 = vpop.f32.mrb[0].mxu0
      %1310 = vdwg.mxu0
      %v1311 = vadd.f32 %v1247, %v1306
      %v1312 = vld [vmem:[%s399] sm:$0xf]
      %s1313 = scalar_lea.vmem %s3, 56
      %v1314 = vld [vmem:[%s1313] sm:$0xf]
      %v1317 = vunpack.c.l.s4 1983009808
      %v1318 = vunpack.c.0.s8 %v1317
      %v1319 = vlaneseq
      %v1320 = vshrl.u32 %v1319, 7
      %v1321 = vsub.s32 %v1318, %v1320
      %v1322 = vrot.slane %v1312, %v1321
      %v1323 = vcombine.high %v1322, %v1322
      %1324 = vrot.lane.b32.xlu0 %v1322, 116
      %v1325 = vpop.permute.xlu0 %1324
      %1326 = vrot.lane.b32.xlu0 %v1323, 116
      %v1327 = vpop.permute.xlu0 %1326
      %v1328 = vsel %vm762, %v1325, %v1327
      %v1330 = vsel %vm457, %v1314, 0
      %v1333 = vsel %vm461, %v1328, 0
      %1335 = vmatprep.subr.bf16.mxu0 0
      %1336 = vmatpush1.bf16.msra.mxu0 %v1333
      %1337 = vmatprep.subr.bf16.mxu0 0
      %1338 = vmatpush1.bf16.msra.mxu0 0
      %1339 = vmatprep.subr.bf16.mxu0 0
      %1340 = vmatpush1.bf16.msra.mxu0 0
      %1341 = vmatprep.subr.bf16.mxu0 0
      %1342 = vmatpush1.bf16.msra.mxu0 0
      %1343 = vmatprep.subr.bf16.mxu0 0
      %1344 = vmatpush1.bf16.msra.mxu0 0
      %1345 = vmatprep.subr.bf16.mxu0 0
      %1346 = vmatpush1.bf16.msra.mxu0 0
      %1347 = vmatprep.subr.bf16.mxu0 0
      %1348 = vmatpush1.bf16.msra.mxu0 0
      %1349 = vmatprep.subr.bf16.mxu0 0
      %1350 = vmatpush1.bf16.msra.mxu0 0
      %1351 = vmatprep.subr.bf16.mxu0 0
      %1352 = vmatpush1.bf16.msra.mxu0 0
      %1353 = vmatprep.subr.bf16.mxu0 0
      %1354 = vmatpush1.bf16.msra.mxu0 0
      %1355 = vmatprep.subr.bf16.mxu0 0
      %1356 = vmatpush1.bf16.msra.mxu0 0
      %1357 = vmatprep.subr.bf16.mxu0 0
      %1358 = vmatpush1.bf16.msra.mxu0 0
      %1359 = vmatprep.subr.bf16.mxu0 0
      %1360 = vmatpush1.bf16.msra.mxu0 0
      %1361 = vmatprep.subr.bf16.mxu0 0
      %1362 = vmatpush1.bf16.msra.mxu0 0
      %1363 = vmatprep.subr.bf16.mxu0 0
      %1364 = vmatpush1.bf16.msra.mxu0 0
      %1365 = vmatprep.subr.bf16.mxu0 0
      %1366 = vmatpush1.bf16.msra.mxu0 0
      %1367 = vmatprep.mubr.bf16.mxu0 0
      %1368 = vmatmul.mubr.bf16.gmra.mrb[0].mxu0 %v1330
      %v1369 = vpop.f32.mrb[0].mxu0
      %v1370 = vadd.f32 0.0, %v1369
      %v1371 = vpop.f32.mrb[0].mxu0
      %v1372 = vpop.f32.mrb[0].mxu0
      %v1373 = vpop.f32.mrb[0].mxu0
      %1374 = vdwg.mxu0
      %v1375 = vadd.f32 %v1311, %v1370
      %v1376 = vld [vmem:[%s399] sm:$0xf]
      %s1377 = scalar_lea.vmem %s3, 60
      %v1378 = vld [vmem:[%s1377] sm:$0xf]
      %v1381 = vunpack.c.l.s4 1983009808
      %v1382 = vunpack.c.0.s8 %v1381
      %v1383 = vlaneseq
      %v1384 = vshrl.u32 %v1383, 7
      %v1385 = vsub.s32 %v1382, %v1384
      %v1386 = vrot.slane %v1376, %v1385
      %v1387 = vcombine.high %v1386, %v1386
      %1388 = vrot.lane.b32.xlu0 %v1386, 108
      %v1389 = vpop.permute.xlu0 %1388
      %1390 = vrot.lane.b32.xlu0 %v1387, 108
      %v1391 = vpop.permute.xlu0 %1390
      %v1392 = vsel %vm827, %v1389, %v1391
      %v1394 = vsel %vm457, %v1378, 0
      %v1397 = vsel %vm461, %v1392, 0
      %1399 = vmatprep.subr.bf16.mxu0 0
      %1400 = vmatpush1.bf16.msra.mxu0 %v1397
      %1401 = vmatprep.subr.bf16.mxu0 0
      %1402 = vmatpush1.bf16.msra.mxu0 0
      %1403 = vmatprep.subr.bf16.mxu0 0
      %1404 = vmatpush1.bf16.msra.mxu0 0
      %1405 = vmatprep.subr.bf16.mxu0 0
      %1406 = vmatpush1.bf16.msra.mxu0 0
      %1407 = vmatprep.subr.bf16.mxu0 0
      %1408 = vmatpush1.bf16.msra.mxu0 0
      %1409 = vmatprep.subr.bf16.mxu0 0
      %1410 = vmatpush1.bf16.msra.mxu0 0
      %1411 = vmatprep.subr.bf16.mxu0 0
      %1412 = vmatpush1.bf16.msra.mxu0 0
      %1413 = vmatprep.subr.bf16.mxu0 0
      %1414 = vmatpush1.bf16.msra.mxu0 0
      %1415 = vmatprep.subr.bf16.mxu0 0
      %1416 = vmatpush1.bf16.msra.mxu0 0
      %1417 = vmatprep.subr.bf16.mxu0 0
      %1418 = vmatpush1.bf16.msra.mxu0 0
      %1419 = vmatprep.subr.bf16.mxu0 0
      %1420 = vmatpush1.bf16.msra.mxu0 0
      %1421 = vmatprep.subr.bf16.mxu0 0
      %1422 = vmatpush1.bf16.msra.mxu0 0
      %1423 = vmatprep.subr.bf16.mxu0 0
      %1424 = vmatpush1.bf16.msra.mxu0 0
      %1425 = vmatprep.subr.bf16.mxu0 0
      %1426 = vmatpush1.bf16.msra.mxu0 0
      %1427 = vmatprep.subr.bf16.mxu0 0
      %1428 = vmatpush1.bf16.msra.mxu0 0
      %1429 = vmatprep.subr.bf16.mxu0 0
      %1430 = vmatpush1.bf16.msra.mxu0 0
      %1431 = vmatprep.mubr.bf16.mxu0 0
      %1432 = vmatmul.mubr.bf16.gmra.mrb[0].mxu0 %v1394
      %v1433 = vpop.f32.mrb[0].mxu0
      %v1434 = vadd.f32 0.0, %v1433
      %v1435 = vpop.f32.mrb[0].mxu0
      %v1436 = vpop.f32.mrb[0].mxu0
      %v1437 = vpop.f32.mrb[0].mxu0
      %1438 = vdwg.mxu0
      %v1439 = vadd.f32 %v1375, %v1434
      %v1440 = vld [vmem:[%s399] sm:$0xf]
      %s1441 = scalar_lea.vmem %s3, 64
      %v1442 = vld [vmem:[%s1441] sm:$0xf]
      %v1445 = vunpack.c.l.s4 1983009808
      %v1446 = vunpack.c.0.s8 %v1445
      %v1447 = vlaneseq
      %v1448 = vshrl.u32 %v1447, 7
      %v1449 = vsub.s32 %v1446, %v1448
      %v1450 = vrot.slane %v1440, %v1449
      %v1451 = vcombine.high %v1450, %v1450
      %1452 = vrot.lane.b32.xlu0 %v1450, 107
      %v1453 = vpop.permute.xlu0 %1452
      %1454 = vrot.lane.b32.xlu0 %v1451, 107
      %v1455 = vpop.permute.xlu0 %1454
      %v1456 = vsel %vm892, %v1453, %v1455
      %v1458 = vsel %vm457, %v1442, 0
      %v1461 = vsel %vm461, %v1456, 0
      %1463 = vmatprep.subr.bf16.mxu0 0
      %1464 = vmatpush1.bf16.msra.mxu0 %v1461
      %1465 = vmatprep.subr.bf16.mxu0 0
      %1466 = vmatpush1.bf16.msra.mxu0 0
      %1467 = vmatprep.subr.bf16.mxu0 0
      %1468 = vmatpush1.bf16.msra.mxu0 0
      %1469 = vmatprep.subr.bf16.mxu0 0
      %1470 = vmatpush1.bf16.msra.mxu0 0
      %1471 = vmatprep.subr.bf16.mxu0 0
      %1472 = vmatpush1.bf16.msra.mxu0 0
      %1473 = vmatprep.subr.bf16.mxu0 0
      %1474 = vmatpush1.bf16.msra.mxu0 0
      %1475 = vmatprep.subr.bf16.mxu0 0
      %1476 = vmatpush1.bf16.msra.mxu0 0
      %1477 = vmatprep.subr.bf16.mxu0 0
      %1478 = vmatpush1.bf16.msra.mxu0 0
      %1479 = vmatprep.subr.bf16.mxu0 0
      %1480 = vmatpush1.bf16.msra.mxu0 0
      %1481 = vmatprep.subr.bf16.mxu0 0
      %1482 = vmatpush1.bf16.msra.mxu0 0
      %1483 = vmatprep.subr.bf16.mxu0 0
      %1484 = vmatpush1.bf16.msra.mxu0 0
      %1485 = vmatprep.subr.bf16.mxu0 0
      %1486 = vmatpush1.bf16.msra.mxu0 0
      %1487 = vmatprep.subr.bf16.mxu0 0
      %1488 = vmatpush1.bf16.msra.mxu0 0
      %1489 = vmatprep.subr.bf16.mxu0 0
      %1490 = vmatpush1.bf16.msra.mxu0 0
      %1491 = vmatprep.subr.bf16.mxu0 0
      %1492 = vmatpush1.bf16.msra.mxu0 0
      %1493 = vmatprep.subr.bf16.mxu0 0
      %1494 = vmatpush1.bf16.msra.mxu0 0
      %1495 = vmatprep.mubr.bf16.mxu0 0
      %1496 = vmatmul.mubr.bf16.gmra.mrb[0].mxu0 %v1458
      %v1497 = vpop.f32.mrb[0].mxu0
      %v1498 = vadd.f32 0.0, %v1497
      %v1499 = vpop.f32.mrb[0].mxu0
      %v1500 = vpop.f32.mrb[0].mxu0
      %v1501 = vpop.f32.mrb[0].mxu0
      %1502 = vdwg.mxu0
      %v1503 = vadd.f32 %v1439, %v1498
      %v1504 = vld [vmem:[%s399] sm:$0xf]
      %s1505 = scalar_lea.vmem %s3, 68
      %v1506 = vld [vmem:[%s1505] sm:$0xf]
      %v1509 = vunpack.c.l.s4 1983009808
      %v1510 = vunpack.c.0.s8 %v1509
      %v1511 = vlaneseq
      %v1512 = vshrl.u32 %v1511, 7
      %v1513 = vsub.s32 %v1510, %v1512
      %v1514 = vrot.slane %v1504, %v1513
      %v1515 = vcombine.high %v1514, %v1514
      %1516 = vrot.lane.b32.xlu0 %v1514, 106
      %v1517 = vpop.permute.xlu0 %1516
      %1518 = vrot.lane.b32.xlu0 %v1515, 106
      %v1519 = vpop.permute.xlu0 %1518
      %v1520 = vsel %vm957, %v1517, %v1519
      %v1522 = vsel %vm457, %v1506, 0
      %v1525 = vsel %vm461, %v1520, 0
      %1527 = vmatprep.subr.bf16.mxu0 0
      %1528 = vmatpush1.bf16.msra.mxu0 %v1525
      %1529 = vmatprep.subr.bf16.mxu0 0
      %1530 = vmatpush1.bf16.msra.mxu0 0
      %1531 = vmatprep.subr.bf16.mxu0 0
      %1532 = vmatpush1.bf16.msra.mxu0 0
      %1533 = vmatprep.subr.bf16.mxu0 0
      %1534 = vmatpush1.bf16.msra.mxu0 0
      %1535 = vmatprep.subr.bf16.mxu0 0
      %1536 = vmatpush1.bf16.msra.mxu0 0
      %1537 = vmatprep.subr.bf16.mxu0 0
      %1538 = vmatpush1.bf16.msra.mxu0 0
      %1539 = vmatprep.subr.bf16.mxu0 0
      %1540 = vmatpush1.bf16.msra.mxu0 0
      %1541 = vmatprep.subr.bf16.mxu0 0
      %1542 = vmatpush1.bf16.msra.mxu0 0
      %1543 = vmatprep.subr.bf16.mxu0 0
      %1544 = vmatpush1.bf16.msra.mxu0 0
      %1545 = vmatprep.subr.bf16.mxu0 0
      %1546 = vmatpush1.bf16.msra.mxu0 0
      %1547 = vmatprep.subr.bf16.mxu0 0
      %1548 = vmatpush1.bf16.msra.mxu0 0
      %1549 = vmatprep.subr.bf16.mxu0 0
      %1550 = vmatpush1.bf16.msra.mxu0 0
      %1551 = vmatprep.subr.bf16.mxu0 0
      %1552 = vmatpush1.bf16.msra.mxu0 0
      %1553 = vmatprep.subr.bf16.mxu0 0
      %1554 = vmatpush1.bf16.msra.mxu0 0
      %1555 = vmatprep.subr.bf16.mxu0 0
      %1556 = vmatpush1.bf16.msra.mxu0 0
      %1557 = vmatprep.subr.bf16.mxu0 0
      %1558 = vmatpush1.bf16.msra.mxu0 0
      %1559 = vmatprep.mubr.bf16.mxu0 0
      %1560 = vmatmul.mubr.bf16.gmra.mrb[0].mxu0 %v1522
      %v1561 = vpop.f32.mrb[0].mxu0
      %v1562 = vadd.f32 0.0, %v1561
      %v1563 = vpop.f32.mrb[0].mxu0
      %v1564 = vpop.f32.mrb[0].mxu0
      %v1565 = vpop.f32.mrb[0].mxu0
      %1566 = vdwg.mxu0
      %v1567 = vadd.f32 %v1503, %v1562
      %v1568 = vld [vmem:[%s410] sm:$0x3]
      %s1569 = scalar_lea.vmem %s3, 72
      %v1570 = vld [vmem:[%s1569] sm:$0xf]
      %v1572 = vsel %vm457, %v1570, 0
      %v1575 = vsel %vm461, %v1568, 0
      %1577 = vmatprep.subr.bf16.mxu0 0
      %1578 = vmatpush1.bf16.msra.mxu0 %v1575
      %1579 = vmatprep.subr.bf16.mxu0 0
      %1580 = vmatpush1.bf16.msra.mxu0 0
      %1581 = vmatprep.subr.bf16.mxu0 0
      %1582 = vmatpush1.bf16.msra.mxu0 0
      %1583 = vmatprep.subr.bf16.mxu0 0
      %1584 = vmatpush1.bf16.msra.mxu0 0
      %1585 = vmatprep.subr.bf16.mxu0 0
      %1586 = vmatpush1.bf16.msra.mxu0 0
      %1587 = vmatprep.subr.bf16.mxu0 0
      %1588 = vmatpush1.bf16.msra.mxu0 0
      %1589 = vmatprep.subr.bf16.mxu0 0
      %1590 = vmatpush1.bf16.msra.mxu0 0
      %1591 = vmatprep.subr.bf16.mxu0 0
      %1592 = vmatpush1.bf16.msra.mxu0 0
      %1593 = vmatprep.subr.bf16.mxu0 0
      %1594 = vmatpush1.bf16.msra.mxu0 0
      %1595 = vmatprep.subr.bf16.mxu0 0
      %1596 = vmatpush1.bf16.msra.mxu0 0
      %1597 = vmatprep.subr.bf16.mxu0 0
      %1598 = vmatpush1.bf16.msra.mxu0 0
      %1599 = vmatprep.subr.bf16.mxu0 0
      %1600 = vmatpush1.bf16.msra.mxu0 0
      %1601 = vmatprep.subr.bf16.mxu0 0
      %1602 = vmatpush1.bf16.msra.mxu0 0
      %1603 = vmatprep.subr.bf16.mxu0 0
      %1604 = vmatpush1.bf16.msra.mxu0 0
      %1605 = vmatprep.subr.bf16.mxu0 0
      %1606 = vmatpush1.bf16.msra.mxu0 0
      %1607 = vmatprep.subr.bf16.mxu0 0
      %1608 = vmatpush1.bf16.msra.mxu0 0
      %1609 = vmatprep.mubr.bf16.mxu0 0
      %1610 = vmatmul.mubr.bf16.gmra.mrb[0].mxu0 %v1572
      %v1611 = vpop.f32.mrb[0].mxu0
      %v1612 = vadd.f32 0.0, %v1611
      %v1613 = vpop.f32.mrb[0].mxu0
      %v1614 = vpop.f32.mrb[0].mxu0
      %v1615 = vpop.f32.mrb[0].mxu0
      %1616 = vdwg.mxu0
      %v1617 = vadd.f32 %v1567, %v1612
      %v1618 = vld [vmem:[%s410] sm:$0xf]
      %s1619 = scalar_lea.vmem %s3, 76
      %v1620 = vld [vmem:[%s1619] sm:$0xf]
      %v1623 = vunpack.c.l.s4 1983009808
      %v1624 = vunpack.c.0.s8 %v1623
      %v1625 = vlaneseq
      %v1626 = vshrl.u32 %v1625, 7
      %v1627 = vsub.s32 %v1624, %v1626
      %v1628 = vrot.slane %v1618, %v1627
      %v1629 = vcombine.high %v1628, %v1628
      %1630 = vrot.lane.b32.xlu0 %v1628, 127
      %v1631 = vpop.permute.xlu0 %1630
      %1632 = vrot.lane.b32.xlu0 %v1629, 127
      %v1633 = vpop.permute.xlu0 %1632
      %v1634 = vsel %vm455, %v1631, %v1633
      %v1636 = vsel %vm457, %v1620, 0
      %v1639 = vsel %vm461, %v1634, 0
      %1641 = vmatprep.subr.bf16.mxu0 0
      %1642 = vmatpush1.bf16.msra.mxu0 %v1639
      %1643 = vmatprep.subr.bf16.mxu0 0
      %1644 = vmatpush1.bf16.msra.mxu0 0
      %1645 = vmatprep.subr.bf16.mxu0 0
      %1646 = vmatpush1.bf16.msra.mxu0 0
      %1647 = vmatprep.subr.bf16.mxu0 0
      %1648 = vmatpush1.bf16.msra.mxu0 0
      %1649 = vmatprep.subr.bf16.mxu0 0
      %1650 = vmatpush1.bf16.msra.mxu0 0
      %1651 = vmatprep.subr.bf16.mxu0 0
      %1652 = vmatpush1.bf16.msra.mxu0 0
      %1653 = vmatprep.subr.bf16.mxu0 0
      %1654 = vmatpush1.bf16.msra.mxu0 0
      %1655 = vmatprep.subr.bf16.mxu0 0
      %1656 = vmatpush1.bf16.msra.mxu0 0
      %1657 = vmatprep.subr.bf16.mxu0 0
      %1658 = vmatpush1.bf16.msra.mxu0 0
      %1659 = vmatprep.subr.bf16.mxu0 0
      %1660 = vmatpush1.bf16.msra.mxu0 0
      %1661 = vmatprep.subr.bf16.mxu0 0
      %1662 = vmatpush1.bf16.msra.mxu0 0
      %1663 = vmatprep.subr.bf16.mxu0 0
      %1664 = vmatpush1.bf16.msra.mxu0 0
      %1665 = vmatprep.subr.bf16.mxu0 0
      %1666 = vmatpush1.bf16.msra.mxu0 0
      %1667 = vmatprep.subr.bf16.mxu0 0
      %1668 = vmatpush1.bf16.msra.mxu0 0
      %1669 = vmatprep.subr.bf16.mxu0 0
      %1670 = vmatpush1.bf16.msra.mxu0 0
      %1671 = vmatprep.subr.bf16.mxu0 0
      %1672 = vmatpush1.bf16.msra.mxu0 0
      %1673 = vmatprep.mubr.bf16.mxu0 0
      %1674 = vmatmul.mubr.bf16.gmra.mrb[0].mxu0 %v1636
      %v1675 = vpop.f32.mrb[0].mxu0
      %v1676 = vadd.f32 0.0, %v1675
      %v1677 = vpop.f32.mrb[0].mxu0
      %v1678 = vpop.f32.mrb[0].mxu0
      %v1679 = vpop.f32.mrb[0].mxu0
      %1680 = vdwg.mxu0
      %v1681 = vadd.f32 %v1617, %v1676
      %v1682 = vld [vmem:[%s410] sm:$0xf]
      %s1683 = scalar_lea.vmem %s3, 80
      %v1684 = vld [vmem:[%s1683] sm:$0xf]
      %v1687 = vunpack.c.l.s4 1983009808
      %v1688 = vunpack.c.0.s8 %v1687
      %v1689 = vlaneseq
      %v1690 = vshrl.u32 %v1689, 7
      %v1691 = vsub.s32 %v1688, %v1690
      %v1692 = vrot.slane %v1682, %v1691
      %v1693 = vcombine.high %v1692, %v1692
      %1694 = vrot.lane.b32.xlu0 %v1692, 126
      %v1695 = vpop.permute.xlu0 %1694
      %1696 = vrot.lane.b32.xlu0 %v1693, 126
      %v1697 = vpop.permute.xlu0 %1696
      %v1698 = vsel %vm567, %v1695, %v1697
      %v1700 = vsel %vm457, %v1684, 0
      %v1703 = vsel %vm461, %v1698, 0
      %1705 = vmatprep.subr.bf16.mxu0 0
      %1706 = vmatpush1.bf16.msra.mxu0 %v1703
      %1707 = vmatprep.subr.bf16.mxu0 0
      %1708 = vmatpush1.bf16.msra.mxu0 0
      %1709 = vmatprep.subr.bf16.mxu0 0
      %1710 = vmatpush1.bf16.msra.mxu0 0
      %1711 = vmatprep.subr.bf16.mxu0 0
      %1712 = vmatpush1.bf16.msra.mxu0 0
      %1713 = vmatprep.subr.bf16.mxu0 0
      %1714 = vmatpush1.bf16.msra.mxu0 0
      %1715 = vmatprep.subr.bf16.mxu0 0
      %1716 = vmatpush1.bf16.msra.mxu0 0
      %1717 = vmatprep.subr.bf16.mxu0 0
      %1718 = vmatpush1.bf16.msra.mxu0 0
      %1719 = vmatprep.subr.bf16.mxu0 0
      %1720 = vmatpush1.bf16.msra.mxu0 0
      %1721 = vmatprep.subr.bf16.mxu0 0
      %1722 = vmatpush1.bf16.msra.mxu0 0
      %1723 = vmatprep.subr.bf16.mxu0 0
      %1724 = vmatpush1.bf16.msra.mxu0 0
      %1725 = vmatprep.subr.bf16.mxu0 0
      %1726 = vmatpush1.bf16.msra.mxu0 0
      %1727 = vmatprep.subr.bf16.mxu0 0
      %1728 = vmatpush1.bf16.msra.mxu0 0
      %1729 = vmatprep.subr.bf16.mxu0 0
      %1730 = vmatpush1.bf16.msra.mxu0 0
      %1731 = vmatprep.subr.bf16.mxu0 0
      %1732 = vmatpush1.bf16.msra.mxu0 0
      %1733 = vmatprep.subr.bf16.mxu0 0
      %1734 = vmatpush1.bf16.msra.mxu0 0
      %1735 = vmatprep.subr.bf16.mxu0 0
      %1736 = vmatpush1.bf16.msra.mxu0 0
      %1737 = vmatprep.mubr.bf16.mxu0 0
      %1738 = vmatmul.mubr.bf16.gmra.mrb[0].mxu0 %v1700
      %v1739 = vpop.f32.mrb[0].mxu0
      %v1740 = vadd.f32 0.0, %v1739
      %v1741 = vpop.f32.mrb[0].mxu0
      %v1742 = vpop.f32.mrb[0].mxu0
      %v1743 = vpop.f32.mrb[0].mxu0
      %1744 = vdwg.mxu0
      %v1745 = vadd.f32 %v1681, %v1740
      %v1746 = vld [vmem:[%s410] sm:$0xf]
      %s1747 = scalar_lea.vmem %s3, 84
      %v1748 = vld [vmem:[%s1747] sm:$0xf]
      %v1751 = vunpack.c.l.s4 1983009808
      %v1752 = vunpack.c.0.s8 %v1751
      %v1753 = vlaneseq
      %v1754 = vshrl.u32 %v1753, 7
      %v1755 = vsub.s32 %v1752, %v1754
      %v1756 = vrot.slane %v1746, %v1755
      %v1757 = vcombine.high %v1756, %v1756
      %1758 = vrot.lane.b32.xlu0 %v1756, 118
      %v1759 = vpop.permute.xlu0 %1758
      %1760 = vrot.lane.b32.xlu0 %v1757, 118
      %v1761 = vpop.permute.xlu0 %1760
      %v1762 = vsel %vm632, %v1759, %v1761
      %v1764 = vsel %vm457, %v1748, 0
      %v1767 = vsel %vm461, %v1762, 0
      %1769 = vmatprep.subr.bf16.mxu0 0
      %1770 = vmatpush1.bf16.msra.mxu0 %v1767
      %1771 = vmatprep.subr.bf16.mxu0 0
      %1772 = vmatpush1.bf16.msra.mxu0 0
      %1773 = vmatprep.subr.bf16.mxu0 0
      %1774 = vmatpush1.bf16.msra.mxu0 0
      %1775 = vmatprep.subr.bf16.mxu0 0
      %1776 = vmatpush1.bf16.msra.mxu0 0
      %1777 = vmatprep.subr.bf16.mxu0 0
      %1778 = vmatpush1.bf16.msra.mxu0 0
      %1779 = vmatprep.subr.bf16.mxu0 0
      %1780 = vmatpush1.bf16.msra.mxu0 0
      %1781 = vmatprep.subr.bf16.mxu0 0
      %1782 = vmatpush1.bf16.msra.mxu0 0
      %1783 = vmatprep.subr.bf16.mxu0 0
      %1784 = vmatpush1.bf16.msra.mxu0 0
      %1785 = vmatprep.subr.bf16.mxu0 0
      %1786 = vmatpush1.bf16.msra.mxu0 0
      %1787 = vmatprep.subr.bf16.mxu0 0
      %1788 = vmatpush1.bf16.msra.mxu0 0
      %1789 = vmatprep.subr.bf16.mxu0 0
      %1790 = vmatpush1.bf16.msra.mxu0 0
      %1791 = vmatprep.subr.bf16.mxu0 0
      %1792 = vmatpush1.bf16.msra.mxu0 0
      %1793 = vmatprep.subr.bf16.mxu0 0
      %1794 = vmatpush1.bf16.msra.mxu0 0
      %1795 = vmatprep.subr.bf16.mxu0 0
      %1796 = vmatpush1.bf16.msra.mxu0 0
      %1797 = vmatprep.subr.bf16.mxu0 0
      %1798 = vmatpush1.bf16.msra.mxu0 0
      %1799 = vmatprep.subr.bf16.mxu0 0
      %1800 = vmatpush1.bf16.msra.mxu0 0
      %1801 = vmatprep.mubr.bf16.mxu0 0
      %1802 = vmatmul.mubr.bf16.gmra.mrb[0].mxu0 %v1764
      %v1803 = vpop.f32.mrb[0].mxu0
      %v1804 = vadd.f32 0.0, %v1803
      %v1805 = vpop.f32.mrb[0].mxu0
      %v1806 = vpop.f32.mrb[0].mxu0
      %v1807 = vpop.f32.mrb[0].mxu0
      %1808 = vdwg.mxu0
      %v1809 = vadd.f32 %v1745, %v1804
      %v1810 = vld [vmem:[%s410] sm:$0xf]
      %s1811 = scalar_lea.vmem %s3, 88
      %v1812 = vld [vmem:[%s1811] sm:$0xf]
      %v1815 = vunpack.c.l.s4 1983009808
      %v1816 = vunpack.c.0.s8 %v1815
      %v1817 = vlaneseq
      %v1818 = vshrl.u32 %v1817, 7
      %v1819 = vsub.s32 %v1816, %v1818
      %v1820 = vrot.slane %v1810, %v1819
      %v1821 = vcombine.high %v1820, %v1820
      %1822 = vrot.lane.b32.xlu0 %v1820, 117
      %v1823 = vpop.permute.xlu0 %1822
      %1824 = vrot.lane.b32.xlu0 %v1821, 117
      %v1825 = vpop.permute.xlu0 %1824
      %v1826 = vsel %vm697, %v1823, %v1825
      %v1828 = vsel %vm457, %v1812, 0
      %v1831 = vsel %vm461, %v1826, 0
      %1833 = vmatprep.subr.bf16.mxu0 0
      %1834 = vmatpush1.bf16.msra.mxu0 %v1831
      %1835 = vmatprep.subr.bf16.mxu0 0
      %1836 = vmatpush1.bf16.msra.mxu0 0
      %1837 = vmatprep.subr.bf16.mxu0 0
      %1838 = vmatpush1.bf16.msra.mxu0 0
      %1839 = vmatprep.subr.bf16.mxu0 0
      %1840 = vmatpush1.bf16.msra.mxu0 0
      %1841 = vmatprep.subr.bf16.mxu0 0
      %1842 = vmatpush1.bf16.msra.mxu0 0
      %1843 = vmatprep.subr.bf16.mxu0 0
      %1844 = vmatpush1.bf16.msra.mxu0 0
      %1845 = vmatprep.subr.bf16.mxu0 0
      %1846 = vmatpush1.bf16.msra.mxu0 0
      %1847 = vmatprep.subr.bf16.mxu0 0
      %1848 = vmatpush1.bf16.msra.mxu0 0
      %1849 = vmatprep.subr.bf16.mxu0 0
      %1850 = vmatpush1.bf16.msra.mxu0 0
      %1851 = vmatprep.subr.bf16.mxu0 0
      %1852 = vmatpush1.bf16.msra.mxu0 0
      %1853 = vmatprep.subr.bf16.mxu0 0
      %1854 = vmatpush1.bf16.msra.mxu0 0
      %1855 = vmatprep.subr.bf16.mxu0 0
      %1856 = vmatpush1.bf16.msra.mxu0 0
      %1857 = vmatprep.subr.bf16.mxu0 0
      %1858 = vmatpush1.bf16.msra.mxu0 0
      %1859 = vmatprep.subr.bf16.mxu0 0
      %1860 = vmatpush1.bf16.msra.mxu0 0
      %1861 = vmatprep.subr.bf16.mxu0 0
      %1862 = vmatpush1.bf16.msra.mxu0 0
      %1863 = vmatprep.subr.bf16.mxu0 0
      %1864 = vmatpush1.bf16.msra.mxu0 0
      %1865 = vmatprep.mubr.bf16.mxu0 0
      %1866 = vmatmul.mubr.bf16.gmra.mrb[0].mxu0 %v1828
      %v1867 = vpop.f32.mrb[0].mxu0
      %v1868 = vadd.f32 0.0, %v1867
      %v1869 = vpop.f32.mrb[0].mxu0
      %v1870 = vpop.f32.mrb[0].mxu0
      %v1871 = vpop.f32.mrb[0].mxu0
      %1872 = vdwg.mxu0
      %v1873 = vadd.f32 %v1809, %v1868
      %v1874 = vld [vmem:[%s410] sm:$0xf]
      %s1875 = scalar_lea.vmem %s3, 92
      %v1876 = vld [vmem:[%s1875] sm:$0xf]
      %v1879 = vunpack.c.l.s4 1983009808
      %v1880 = vunpack.c.0.s8 %v1879
      %v1881 = vlaneseq
      %v1882 = vshrl.u32 %v1881, 7
      %v1883 = vsub.s32 %v1880, %v1882
      %v1884 = vrot.slane %v1874, %v1883
      %v1885 = vcombine.high %v1884, %v1884
      %1886 = vrot.lane.b32.xlu0 %v1884, 116
      %v1887 = vpop.permute.xlu0 %1886
      %1888 = vrot.lane.b32.xlu0 %v1885, 116
      %v1889 = vpop.permute.xlu0 %1888
      %v1890 = vsel %vm762, %v1887, %v1889
      %v1892 = vsel %vm457, %v1876, 0
      %v1895 = vsel %vm461, %v1890, 0
      %1897 = vmatprep.subr.bf16.mxu0 0
      %1898 = vmatpush1.bf16.msra.mxu0 %v1895
      %1899 = vmatprep.subr.bf16.mxu0 0
      %1900 = vmatpush1.bf16.msra.mxu0 0
      %1901 = vmatprep.subr.bf16.mxu0 0
      %1902 = vmatpush1.bf16.msra.mxu0 0
      %1903 = vmatprep.subr.bf16.mxu0 0
      %1904 = vmatpush1.bf16.msra.mxu0 0
      %1905 = vmatprep.subr.bf16.mxu0 0
      %1906 = vmatpush1.bf16.msra.mxu0 0
      %1907 = vmatprep.subr.bf16.mxu0 0
      %1908 = vmatpush1.bf16.msra.mxu0 0
      %1909 = vmatprep.subr.bf16.mxu0 0
      %1910 = vmatpush1.bf16.msra.mxu0 0
      %1911 = vmatprep.subr.bf16.mxu0 0
      %1912 = vmatpush1.bf16.msra.mxu0 0
      %1913 = vmatprep.subr.bf16.mxu0 0
      %1914 = vmatpush1.bf16.msra.mxu0 0
      %1915 = vmatprep.subr.bf16.mxu0 0
      %1916 = vmatpush1.bf16.msra.mxu0 0
      %1917 = vmatprep.subr.bf16.mxu0 0
      %1918 = vmatpush1.bf16.msra.mxu0 0
      %1919 = vmatprep.subr.bf16.mxu0 0
      %1920 = vmatpush1.bf16.msra.mxu0 0
      %1921 = vmatprep.subr.bf16.mxu0 0
      %1922 = vmatpush1.bf16.msra.mxu0 0
      %1923 = vmatprep.subr.bf16.mxu0 0
      %1924 = vmatpush1.bf16.msra.mxu0 0
      %1925 = vmatprep.subr.bf16.mxu0 0
      %1926 = vmatpush1.bf16.msra.mxu0 0
      %1927 = vmatprep.subr.bf16.mxu0 0
      %1928 = vmatpush1.bf16.msra.mxu0 0
      %1929 = vmatprep.mubr.bf16.mxu0 0
      %1930 = vmatmul.mubr.bf16.gmra.mrb[0].mxu0 %v1892
      %v1931 = vpop.f32.mrb[0].mxu0
      %v1932 = vadd.f32 0.0, %v1931
      %v1933 = vpop.f32.mrb[0].mxu0
      %v1934 = vpop.f32.mrb[0].mxu0
      %v1935 = vpop.f32.mrb[0].mxu0
      %1936 = vdwg.mxu0
      %v1937 = vadd.f32 %v1873, %v1932
      %v1938 = vld [vmem:[%s410] sm:$0xf]
      %s1939 = scalar_lea.vmem %s3, 96
      %v1940 = vld [vmem:[%s1939] sm:$0xf]
      %v1943 = vunpack.c.l.s4 1983009808
      %v1944 = vunpack.c.0.s8 %v1943
      %v1945 = vlaneseq
      %v1946 = vshrl.u32 %v1945, 7
      %v1947 = vsub.s32 %v1944, %v1946
      %v1948 = vrot.slane %v1938, %v1947
      %v1949 = vcombine.high %v1948, %v1948
      %1950 = vrot.lane.b32.xlu0 %v1948, 108
      %v1951 = vpop.permute.xlu0 %1950
      %1952 = vrot.lane.b32.xlu0 %v1949, 108
      %v1953 = vpop.permute.xlu0 %1952
      %v1954 = vsel %vm827, %v1951, %v1953
      %v1956 = vsel %vm457, %v1940, 0
      %v1959 = vsel %vm461, %v1954, 0
      %1961 = vmatprep.subr.bf16.mxu0 0
      %1962 = vmatpush1.bf16.msra.mxu0 %v1959
      %1963 = vmatprep.subr.bf16.mxu0 0
      %1964 = vmatpush1.bf16.msra.mxu0 0
      %1965 = vmatprep.subr.bf16.mxu0 0
      %1966 = vmatpush1.bf16.msra.mxu0 0
      %1967 = vmatprep.subr.bf16.mxu0 0
      %1968 = vmatpush1.bf16.msra.mxu0 0
      %1969 = vmatprep.subr.bf16.mxu0 0
      %1970 = vmatpush1.bf16.msra.mxu0 0
      %1971 = vmatprep.subr.bf16.mxu0 0
      %1972 = vmatpush1.bf16.msra.mxu0 0
      %1973 = vmatprep.subr.bf16.mxu0 0
      %1974 = vmatpush1.bf16.msra.mxu0 0
      %1975 = vmatprep.subr.bf16.mxu0 0
      %1976 = vmatpush1.bf16.msra.mxu0 0
      %1977 = vmatprep.subr.bf16.mxu0 0
      %1978 = vmatpush1.bf16.msra.mxu0 0
      %1979 = vmatprep.subr.bf16.mxu0 0
      %1980 = vmatpush1.bf16.msra.mxu0 0
      %1981 = vmatprep.subr.bf16.mxu0 0
      %1982 = vmatpush1.bf16.msra.mxu0 0
      %1983 = vmatprep.subr.bf16.mxu0 0
      %1984 = vmatpush1.bf16.msra.mxu0 0
      %1985 = vmatprep.subr.bf16.mxu0 0
      %1986 = vmatpush1.bf16.msra.mxu0 0
      %1987 = vmatprep.subr.bf16.mxu0 0
      %1988 = vmatpush1.bf16.msra.mxu0 0
      %1989 = vmatprep.subr.bf16.mxu0 0
      %1990 = vmatpush1.bf16.msra.mxu0 0
      %1991 = vmatprep.subr.bf16.mxu0 0
      %1992 = vmatpush1.bf16.msra.mxu0 0
      %1993 = vmatprep.mubr.bf16.mxu0 0
      %1994 = vmatmul.mubr.bf16.gmra.mrb[0].mxu0 %v1956
      %v1995 = vpop.f32.mrb[0].mxu0
      %v1996 = vadd.f32 0.0, %v1995
      %v1997 = vpop.f32.mrb[0].mxu0
      %v1998 = vpop.f32.mrb[0].mxu0
      %v1999 = vpop.f32.mrb[0].mxu0
      %2000 = vdwg.mxu0
      %v2001 = vadd.f32 %v1937, %v1996
      %v2002 = vld [vmem:[%s410] sm:$0xf]
      %s2003 = scalar_lea.vmem %s3, 100
      %v2004 = vld [vmem:[%s2003] sm:$0xf]
      %v2007 = vunpack.c.l.s4 1983009808
      %v2008 = vunpack.c.0.s8 %v2007
      %v2009 = vlaneseq
      %v2010 = vshrl.u32 %v2009, 7
      %v2011 = vsub.s32 %v2008, %v2010
      %v2012 = vrot.slane %v2002, %v2011
      %v2013 = vcombine.high %v2012, %v2012
      %2014 = vrot.lane.b32.xlu0 %v2012, 107
      %v2015 = vpop.permute.xlu0 %2014
      %2016 = vrot.lane.b32.xlu0 %v2013, 107
      %v2017 = vpop.permute.xlu0 %2016
      %v2018 = vsel %vm892, %v2015, %v2017
      %v2020 = vsel %vm457, %v2004, 0
      %v2023 = vsel %vm461, %v2018, 0
      %2025 = vmatprep.subr.bf16.mxu0 0
      %2026 = vmatpush1.bf16.msra.mxu0 %v2023
      %2027 = vmatprep.subr.bf16.mxu0 0
      %2028 = vmatpush1.bf16.msra.mxu0 0
      %2029 = vmatprep.subr.bf16.mxu0 0
      %2030 = vmatpush1.bf16.msra.mxu0 0
      %2031 = vmatprep.subr.bf16.mxu0 0
      %2032 = vmatpush1.bf16.msra.mxu0 0
      %2033 = vmatprep.subr.bf16.mxu0 0
      %2034 = vmatpush1.bf16.msra.mxu0 0
      %2035 = vmatprep.subr.bf16.mxu0 0
      %2036 = vmatpush1.bf16.msra.mxu0 0
      %2037 = vmatprep.subr.bf16.mxu0 0
      %2038 = vmatpush1.bf16.msra.mxu0 0
      %2039 = vmatprep.subr.bf16.mxu0 0
      %2040 = vmatpush1.bf16.msra.mxu0 0
      %2041 = vmatprep.subr.bf16.mxu0 0
      %2042 = vmatpush1.bf16.msra.mxu0 0
      %2043 = vmatprep.subr.bf16.mxu0 0
      %2044 = vmatpush1.bf16.msra.mxu0 0
      %2045 = vmatprep.subr.bf16.mxu0 0
      %2046 = vmatpush1.bf16.msra.mxu0 0
      %2047 = vmatprep.subr.bf16.mxu0 0
      %2048 = vmatpush1.bf16.msra.mxu0 0
      %2049 = vmatprep.subr.bf16.mxu0 0
      %2050 = vmatpush1.bf16.msra.mxu0 0
      %2051 = vmatprep.subr.bf16.mxu0 0
      %2052 = vmatpush1.bf16.msra.mxu0 0
      %2053 = vmatprep.subr.bf16.mxu0 0
      %2054 = vmatpush1.bf16.msra.mxu0 0
      %2055 = vmatprep.subr.bf16.mxu0 0
      %2056 = vmatpush1.bf16.msra.mxu0 0
      %2057 = vmatprep.mubr.bf16.mxu0 0
      %2058 = vmatmul.mubr.bf16.gmra.mrb[0].mxu0 %v2020
      %v2059 = vpop.f32.mrb[0].mxu0
      %v2060 = vadd.f32 0.0, %v2059
      %v2061 = vpop.f32.mrb[0].mxu0
      %v2062 = vpop.f32.mrb[0].mxu0
      %v2063 = vpop.f32.mrb[0].mxu0
      %2064 = vdwg.mxu0
      %v2065 = vadd.f32 %v2001, %v2060
      %v2066 = vld [vmem:[%s410] sm:$0xf]
      %s2067 = scalar_lea.vmem %s3, 104
      %v2068 = vld [vmem:[%s2067] sm:$0xf]
      %v2071 = vunpack.c.l.s4 1983009808
      %v2072 = vunpack.c.0.s8 %v2071
      %v2073 = vlaneseq
      %v2074 = vshrl.u32 %v2073, 7
      %v2075 = vsub.s32 %v2072, %v2074
      %v2076 = vrot.slane %v2066, %v2075
      %v2077 = vcombine.high %v2076, %v2076
      %2078 = vrot.lane.b32.xlu0 %v2076, 106
      %v2079 = vpop.permute.xlu0 %2078
      %2080 = vrot.lane.b32.xlu0 %v2077, 106
      %v2081 = vpop.permute.xlu0 %2080
      %v2082 = vsel %vm957, %v2079, %v2081
      %v2084 = vsel %vm457, %v2068, 0
      %v2087 = vsel %vm461, %v2082, 0
      %2089 = vmatprep.subr.bf16.mxu0 0
      %2090 = vmatpush1.bf16.msra.mxu0 %v2087
      %2091 = vmatprep.subr.bf16.mxu0 0
      %2092 = vmatpush1.bf16.msra.mxu0 0
      %2093 = vmatprep.subr.bf16.mxu0 0
      %2094 = vmatpush1.bf16.msra.mxu0 0
      %2095 = vmatprep.subr.bf16.mxu0 0
      %2096 = vmatpush1.bf16.msra.mxu0 0
      %2097 = vmatprep.subr.bf16.mxu0 0
      %2098 = vmatpush1.bf16.msra.mxu0 0
      %2099 = vmatprep.subr.bf16.mxu0 0
      %2100 = vmatpush1.bf16.msra.mxu0 0
      %2101 = vmatprep.subr.bf16.mxu0 0
      %2102 = vmatpush1.bf16.msra.mxu0 0
      %2103 = vmatprep.subr.bf16.mxu0 0
      %2104 = vmatpush1.bf16.msra.mxu0 0
      %2105 = vmatprep.subr.bf16.mxu0 0
      %2106 = vmatpush1.bf16.msra.mxu0 0
      %2107 = vmatprep.subr.bf16.mxu0 0
      %2108 = vmatpush1.bf16.msra.mxu0 0
      %2109 = vmatprep.subr.bf16.mxu0 0
      %2110 = vmatpush1.bf16.msra.mxu0 0
      %2111 = vmatprep.subr.bf16.mxu0 0
      %2112 = vmatpush1.bf16.msra.mxu0 0
      %2113 = vmatprep.subr.bf16.mxu0 0
      %2114 = vmatpush1.bf16.msra.mxu0 0
      %2115 = vmatprep.subr.bf16.mxu0 0
      %2116 = vmatpush1.bf16.msra.mxu0 0
      %2117 = vmatprep.subr.bf16.mxu0 0
      %2118 = vmatpush1.bf16.msra.mxu0 0
      %2119 = vmatprep.subr.bf16.mxu0 0
      %2120 = vmatpush1.bf16.msra.mxu0 0
      %2121 = vmatprep.mubr.bf16.mxu0 0
      %2122 = vmatmul.mubr.bf16.gmra.mrb[0].mxu0 %v2084
      %v2123 = vpop.f32.mrb[0].mxu0
      %v2124 = vadd.f32 0.0, %v2123
      %v2125 = vpop.f32.mrb[0].mxu0
      %v2126 = vpop.f32.mrb[0].mxu0
      %v2127 = vpop.f32.mrb[0].mxu0
      %2128 = vdwg.mxu0
      %v2129 = vadd.f32 %v2065, %v2124
      %v2130 = vpack.c.bf16 %v2129, %v2129
      %2131 = vst [vmem:[%s419] sm:$0xf] %v2130
      %v2132 = vld [vmem:[%s4] sm:$0x1]
      %v2134 = vlaneseq
      %v2135 = vshrl.u32 %v2134, 7
      %v2136 = vsub.s32 0, %v2135
      %v2137 = vrot.slane %v2132, %v2136
      %v2139 = vmul.f32 %v2129, %v2137
      %2140 = vadd.xlane.f32.xlu0 %v2139
      %v2141 = vpop.xlane.xlu0 %2140
      %vm2142 = vcmask 7168
      %2143 = vst.msk [vmem:[%s427] sm:$0xff] %vm2142, %v2141
      %v2144 = vmul.f32 %v2139, %v2129
      %2145 = vadd.xlane.f32.xlu0 %v2144
      %v2146 = vpop.xlane.xlu0 %2145
      %2147 = vst.msk [vmem:[%s435] sm:$0xff] %vm2142, %v2146
      %p2148 = scmp.lt.s32.totalorder %s23, 1
      %s2149 = scalar_select %p2148, %s23, 1
      %p2150 = scmp.lt.s32.totalorder %s24, 7
      %s2151 = scalar_select %p2150, %s24, 7
      %s2152 = smul.addr %s2149, 8
      %s2153 = sadd.s32 %s2151, %s2152
      %s2154 = smul.addr %s2153, 4
      %s2155 = scalar_lea.vmem %s5, %s2154
      %p2156 = scmp.lt.s32.totalorder %s23, 1
      %s2157 = scalar_select %p2156, %s23, 1
      %p2158 = scmp.lt.s32.totalorder %s24, 7
      %s2159 = scalar_select %p2158, %s24, 7
      %s2160 = smul.addr %s2157, 8
      %s2161 = sadd.s32 %s2159, %s2160
      %s2162 = smul.addr %s2161, 8
      %s2163 = scalar_lea.vmem %s6, %s2162
      %p2164 = scmp.lt.s32.totalorder %s23, 1
      %s2165 = scalar_select %p2164, %s23, 1
      %p2166 = scmp.lt.s32.totalorder %s24, 7
      %s2167 = scalar_select %p2166, %s24, 7
      %s2168 = smul.addr %s2165, 8
      %s2169 = sadd.s32 %s2167, %s2168
      %s2170 = smul.addr %s2169, 8
      %s2171 = scalar_lea.vmem %s7, %s2170
      // Predicated region
      $region41: #{_conv3d_bn_relu_impl.2} parent=39 // pred_check
        %p2172 = pneg %p181
      $region42: #{_conv3d_bn_relu_impl.2} parent=39 // pred_check_branch
        %2174 = sbr.rel (%p2172) target = $region44
      $region43: #{_conv3d_bn_relu_impl.2} parent=39 // pred_region
        _
      $region44: #{_conv3d_bn_relu_impl.2} parent=39 // pred_fallthru
        _
      // Predicated region
      $region45: #{_conv3d_bn_relu_impl.2} parent=39 // pred_check
        %p2175 = pneg %p209
      $region46: #{_conv3d_bn_relu_impl.2} parent=39 // pred_check_branch
        %2177 = sbr.rel (%p2175) target = $region48
      $region47: #{_conv3d_bn_relu_impl.2} parent=39 // pred_region
        _
      $region48: #{_conv3d_bn_relu_impl.2} parent=39 // pred_fallthru
        _
      // Predicated region
      $region49: #{_conv3d_bn_relu_impl.2} parent=39 // pred_check
        %p2178 = pneg %p237
      $region50: #{_conv3d_bn_relu_impl.2} parent=39 // pred_check_branch
        %2180 = sbr.rel (%p2178) target = $region52
      $region51: #{_conv3d_bn_relu_impl.2} parent=39 // pred_region
        _
      $region52: #{_conv3d_bn_relu_impl.2} parent=39 // pred_fallthru
        _
    $region40: #{_conv3d_bn_relu_impl.2} parent=5 // pred_fallthru
      _
    %p2181 = scmp.le.s32.totalorder 2, %s14
    // Predicated region
    $region53: #{_conv3d_bn_relu_impl.2} parent=5 // pred_check
      %p2182 = pneg %p2181
    $region54: #{_conv3d_bn_relu_impl.2} parent=5 // pred_check_branch
      %2184 = sbr.rel (%p2182) target = $region56
    $region55: #{_conv3d_bn_relu_impl.2} parent=5 // pred_region
      %s2185 = ssub.s32 %s14, 2
      // Predicated region
      $region57: #{_conv3d_bn_relu_impl.2} parent=55 // pred_check
        %p2186 = pneg %p187
      $region58: #{_conv3d_bn_relu_impl.2} parent=55 // pred_check_branch
        %2188 = sbr.rel (%p2186) target = $region60
      $region59: #{_conv3d_bn_relu_impl.2} parent=55 // pred_region
        %p2189 = scmp.lt.s32.totalorder %s25, 1
        %s2190 = scalar_select %p2189, %s25, 1
        %p2191 = scmp.lt.s32.totalorder %s26, 7
        %s2192 = scalar_select %p2191, %s26, 7
        %s2193 = smul.addr %s2190, 8
        %s2194 = sadd.s32 %s2192, %s2193
        %s2195 = smul.addr %s2194, 4
        %s2196 = scalar_lea.vmem %s5, %s2195
      $region60: #{_conv3d_bn_relu_impl.2} parent=55 // pred_fallthru
        _
      // Predicated region
      $region61: #{_conv3d_bn_relu_impl.2} parent=55 // pred_check
        %p2197 = pneg %p215
      $region62: #{_conv3d_bn_relu_impl.2} parent=55 // pred_check_branch
        %2199 = sbr.rel (%p2197) target = $region64
      $region63: #{_conv3d_bn_relu_impl.2} parent=55 // pred_region
        %p2200 = scmp.lt.s32.totalorder %s25, 1
        %s2201 = scalar_select %p2200, %s25, 1
        %p2202 = scmp.lt.s32.totalorder %s26, 7
        %s2203 = scalar_select %p2202, %s26, 7
        %s2204 = smul.addr %s2201, 8
        %s2205 = sadd.s32 %s2203, %s2204
        %s2206 = smul.addr %s2205, 8
        %s2207 = scalar_lea.vmem %s6, %s2206
      $region64: #{_conv3d_bn_relu_impl.2} parent=55 // pred_fallthru
        _
      // Predicated region
      $region65: #{_conv3d_bn_relu_impl.2} parent=55 // pred_check
        %p2208 = pneg %p243
      $region66: #{_conv3d_bn_relu_impl.2} parent=55 // pred_check_branch
        %2210 = sbr.rel (%p2208) target = $region68
      $region67: #{_conv3d_bn_relu_impl.2} parent=55 // pred_region
        %p2211 = scmp.lt.s32.totalorder %s25, 1
        %s2212 = scalar_select %p2211, %s25, 1
        %p2213 = scmp.lt.s32.totalorder %s26, 7
        %s2214 = scalar_select %p2213, %s26, 7
        %s2215 = smul.addr %s2212, 8
        %s2216 = sadd.s32 %s2214, %s2215
        %s2217 = smul.addr %s2216, 8
        %s2218 = scalar_lea.vmem %s7, %s2217
      $region68: #{_conv3d_bn_relu_impl.2} parent=55 // pred_fallthru
        _
    $region56: #{_conv3d_bn_relu_impl.2} parent=5 // pred_fallthru
      _
  $region6: #{_conv3d_bn_relu_impl.2} parent=0 // loop_footer
    %s18 = sadd.s32 1, %s14
  $region7: #{_conv3d_bn_relu_impl.2} parent=0 // loop_footer_branch
    %13 = sbr.rel target = $region3
  $region8: #{_conv3d_bn_relu_impl.2} parent=0 // loop_exit
    _

</llo_original>
